<compile_context>
chip_gen: v6e
topology: v6e:2x2x1
jax: 0.10.0
libtpu: 0.0.40
codegen_flags: <defaults>
</compile_context>

<pallas_src>
import math

import jax
import jax.numpy as jnp
from jax.experimental import pallas as pl
from jax.experimental.pallas import tpu as pltpu

# ----------------------------------------------------------------------------
# Small synthetic config consistent with MaskGit.__init__ / forward()
# ----------------------------------------------------------------------------
BATCH = 2
IN_CH = 4
IMG = 16
PATCH = 4                                   # stride-4 4x4 "conv" == patchify matmul
HW_TOKENS = IMG // PATCH                    # 4
NUM_IMAGE_TOKENS = HW_TOKENS * HW_TOKENS    # 16
PATCH_FEATS = PATCH * PATCH * IN_CH         # 64
NUM_CODEBOOK = 64                           # num_codebook_vectors
MASK_TOKEN_ID = NUM_CODEBOOK                # mask token id
LATENT_DIM = 16                             # VQ codebook embedding dim
HIDDEN = 32
HEADS = 4
HEAD_DIM = HIDDEN // HEADS
MLP_DIM = 128
LAYERS = 2
VOCAB = NUM_CODEBOOK + 1                    # logits over codebook + mask token
LANE = 128                                  # lane-dense padding target
VOCAB_PAD = LANE                            # padded vocab (tok_emb rows / head cols)
EPS = 1e-5
GAMMA_TYPE = "cosine"
T = NUM_IMAGE_TOKENS


# ----------------------------------------------------------------------------
# Kernel 1: synthetic VQGAN encode  (patchify matmul + VQ nearest-codeword)
# ----------------------------------------------------------------------------
def _encode_vq_kernel(x_ref, w_ref, b_ref, cbt_ref, cbsq_ref, idx_ref):
    # patchify "conv" as a matmul; kept f32 so the discrete argmin is exact.
    z = jnp.dot(x_ref[...], w_ref[...], preferred_element_type=jnp.float32)
    z = z + b_ref[...]                                            # (T, D)
    # ||z - e||^2 = ||z||^2 - 2 z.e + ||e||^2 ; codebook pre-transposed (D, K),
    # ||e||^2 precomputed on host -> no in-kernel transpose / extra reduction.
    cross = jnp.dot(z, cbt_ref[...], preferred_element_type=jnp.float32)  # (T, K)
    dist = jnp.sum(z * z, axis=-1, keepdims=True) - 2.0 * cross + cbsq_ref[...]
    min_d = jnp.min(dist, axis=-1, keepdims=True)
    col = jax.lax.broadcasted_iota(jnp.int32, dist.shape, 1)
    big = jnp.iinfo(jnp.int32).max
    # first index achieving the minimum (torch argmin semantics)
    idx = jnp.min(jnp.where(dist <= min_d, col, big), axis=-1, keepdims=True)
    # lane-dense int32 store (broadcast across 128 lanes); consumer takes col 0.
    idx_ref[...] = jnp.broadcast_to(idx, idx_ref.shape)


def encode_to_z(params, x_nchw):
    """Synthetic VQGAN encode: patchify conv (as matmul) + VQ argmin -> indices."""
    B = x_nchw.shape[0]
    # NCHW -> NHWC -> 4x4 patches -> (B*T, patch_feats)   (pure layout glue)
    x = jnp.transpose(x_nchw, (0, 2, 3, 1))
    x = x.reshape(B, HW_TOKENS, PATCH, HW_TOKENS, PATCH, IN_CH)
    x = jnp.transpose(x, (0, 1, 3, 2, 4, 5)).reshape(B * T, PATCH_FEATS)

    idx_full = pl.pallas_call(
        _encode_vq_kernel,
        out_shape=jax.ShapeDtypeStruct((B * T, LANE), jnp.int32),
        grid=(B,),
        in_specs=[
            pl.BlockSpec((T, PATCH_FEATS), lambda b: (b, 0)),
            pl.BlockSpec((PATCH_FEATS, LATENT_DIM), lambda b: (0, 0)),
            pl.BlockSpec((1, LATENT_DIM), lambda b: (0, 0)),
            pl.BlockSpec((LATENT_DIM, NUM_CODEBOOK), lambda b: (0, 0)),
            pl.BlockSpec((1, NUM_CODEBOOK), lambda b: (0, 0)),
        ],
        out_specs=pl.BlockSpec((T, LANE), lambda b: (b, 0)),
        compiler_params=pltpu.CompilerParams(dimension_semantics=("parallel",)),
    )(x, params["enc_w"], params["enc_b"], params["codebook_t"], params["codebook_sq"])
    return idx_full[:, 0].reshape(B, T)                           # z_indices (B, T)


# ----------------------------------------------------------------------------
# Kernel 2: whole bidirectional transformer, fused into one kernel body
# ----------------------------------------------------------------------------
def _transformer_kernel(idx_ref, tok_emb_ref, pos_emb_ref,
                        ln1_g_ref, ln1_b_ref, qkv_w_ref, qkv_b_ref,
                        proj_w_ref, proj_b_ref, ln2_g_ref, ln2_b_ref,
                        fc1_w_ref, fc1_b_ref, fc2_w_ref, fc2_b_ref,
                        lnf_g_ref, lnf_b_ref, head_w_ref, head_b_ref,
                        logits_ref):
    scale = 1.0 / math.sqrt(HEAD_DIM)

    def layer_norm(v, g, b):                                       # f32 VPU math
        mu = jnp.mean(v, axis=-1, keepdims=True)
        var = jnp.mean((v - mu) ** 2, axis=-1, keepdims=True)
        return (v - mu) * jax.lax.rsqrt(var + EPS) * g + b

    # token-embedding gather as a lane-dense one-hot matmul on the MXU
    idx = idx_ref[...]                                             # (T, 1) int32
    iota = jax.lax.broadcasted_iota(jnp.int32, (T, VOCAB_PAD), 1)
    onehot = jnp.where(iota == idx, 1.0, 0.0).astype(jnp.bfloat16)  # (T, 128)
    x = jnp.dot(onehot, tok_emb_ref[...], preferred_element_type=jnp.float32)
    x = x + pos_emb_ref[...]                                       # (T, HIDDEN) f32

    for l in range(LAYERS):                                        # static unroll
        # --- attention block ---
        h = layer_norm(x, ln1_g_ref[l], ln1_b_ref[l])
        qkv = jnp.dot(h.astype(jnp.bfloat16), qkv_w_ref[l],
                      preferred_element_type=jnp.float32) + qkv_b_ref[l]   # (T, 3H)
        q = qkv[:, 0:HIDDEN]
        k = qkv[:, HIDDEN:2 * HIDDEN]
        v = qkv[:, 2 * HIDDEN:3 * HIDDEN]
        head_outs = []
        for hh in range(HEADS):                                    # static unroll
            lo, hi = hh * HEAD_DIM, (hh + 1) * HEAD_DIM
            qh = q[:, lo:hi].astype(jnp.bfloat16)
            kh = k[:, lo:hi].astype(jnp.bfloat16)
            vh = v[:, lo:hi].astype(jnp.bfloat16)
            # q @ k^T without an explicit transpose (contract on feature dim)
            s = jax.lax.dot_general(qh, kh, (((1,), (1,)), ((), ())),
                                    preferred_element_type=jnp.float32) * scale
            s = s - jnp.max(s, axis=-1, keepdims=True)             # f32 softmax
            p = jnp.exp(s)
            p = p * pl.reciprocal(jnp.sum(p, axis=-1, keepdims=True), approx=True)
            head_outs.append(jnp.dot(p.astype(jnp.bfloat16), vh,
                                     preferred_element_type=jnp.float32))
        attn = jnp.concatenate(head_outs, axis=-1)                 # (T, HIDDEN)
        x = x + jnp.dot(attn.astype(jnp.bfloat16), proj_w_ref[l],
                        preferred_element_type=jnp.float32) + proj_b_ref[l]
        # --- MLP block ---
        h = layer_norm(x, ln2_g_ref[l], ln2_b_ref[l])
        h = jnp.dot(h.astype(jnp.bfloat16), fc1_w_ref[l],
                    preferred_element_type=jnp.float32) + fc1_b_ref[l]      # (T, 128)
        h = jax.nn.gelu(h)
        x = x + jnp.dot(h.astype(jnp.bfloat16), fc2_w_ref[l],
                        preferred_element_type=jnp.float32) + fc2_b_ref[l]

    # final layernorm + padded lane-dense (128-wide) logits head
    x = layer_norm(x, lnf_g_ref[...], lnf_b_ref[...])
    logits = jnp.dot(x.astype(jnp.bfloat16), head_w_ref[...],
                     preferred_element_type=jnp.float32) + head_b_ref[...]
    logits_ref[...] = logits.astype(logits_ref.dtype)              # (T, 128) unmasked store


def transformer_logits(params, z_indices):
    """Fused bidirectional transformer over token ids -> logits (B, T, VOCAB)."""
    B, Tn = z_indices.shape
    idx = z_indices.reshape(B * Tn, 1).astype(jnp.int32)

    def full(shape):
        return pl.BlockSpec(tuple(shape), lambda b, _n=len(shape): (0,) * _n)

    args = [
        idx,
        params["tok_emb"], params["pos_emb"],
        params["ln1_g"], params["ln1_b"], params["qkv_w"], params["qkv_b"],
        params["proj_w"], params["proj_b"], params["ln2_g"], params["ln2_b"],
        params["fc1_w"], params["fc1_b"], params["fc2_w"], params["fc2_b"],
        params["ln_f_g"], params["ln_f_b"], params["head_w"], params["head_b"],
    ]
    in_specs = ([pl.BlockSpec((Tn, 1), lambda b: (b, 0))]
                + [full(a.shape) for a in args[1:]])

    logits_full = pl.pallas_call(
        _transformer_kernel,
        out_shape=jax.ShapeDtypeStruct((B * Tn, VOCAB_PAD), jnp.float32),
        grid=(B,),                                                  # batch-parallel (v7x 2 TCs)
        in_specs=in_specs,
        out_specs=pl.BlockSpec((Tn, VOCAB_PAD), lambda b: (b, 0)),
        compiler_params=pltpu.CompilerParams(dimension_semantics=("parallel",)),
    )(*args)
    return logits_full[:, :VOCAB].reshape(B, Tn, VOCAB)


# ----------------------------------------------------------------------------
# Deterministic parameter initialization (shapes implied by the module)
# ----------------------------------------------------------------------------
def init_params(seed=0):
    key = jax.random.PRNGKey(seed)
    keys = jax.random.split(key, 16)
    ki = iter(keys)
    s = 0.02

    def nrm(shape, dtype=jnp.float32):
        return (s * jax.random.normal(next(ki), shape)).astype(dtype)

    # synthetic VQGAN encoder (f32: discrete VQ argmin must stay exact)
    enc_w = nrm((PATCH_FEATS, LATENT_DIM))
    codebook = nrm((NUM_CODEBOOK, LATENT_DIM))

    # token embedding / head padded to 128 (lane-dense); pad region is zero
    tok_emb = nrm((VOCAB, HIDDEN))
    tok_emb = jnp.zeros((VOCAB_PAD, HIDDEN), jnp.float32).at[:VOCAB].set(tok_emb)
    head_w = nrm((HIDDEN, VOCAB))
    head_w = jnp.zeros((HIDDEN, VOCAB_PAD), jnp.float32).at[:, :VOCAB].set(head_w)

    params = {
        "enc_w": enc_w,
        "enc_b": jnp.zeros((1, LATENT_DIM), jnp.float32),
        "codebook_t": codebook.T,                                  # (D, K) pre-transposed
        "codebook_sq": jnp.sum(codebook * codebook, axis=-1).reshape(1, NUM_CODEBOOK),
        "tok_emb": tok_emb.astype(jnp.bfloat16),                   # (128, H)
        "pos_emb": nrm((NUM_IMAGE_TOKENS, HIDDEN)),                # f32
        "head_w": head_w.astype(jnp.bfloat16),                     # (H, 128)
        "head_b": jnp.zeros((1, VOCAB_PAD), jnp.float32),
        "ln_f_g": jnp.ones((1, HIDDEN), jnp.float32),
        "ln_f_b": jnp.zeros((1, HIDDEN), jnp.float32),
        # per-layer params stacked on a leading LAYERS axis (indexed statically)
        "ln1_g": jnp.ones((LAYERS, 1, HIDDEN), jnp.float32),
        "ln1_b": jnp.zeros((LAYERS, 1, HIDDEN), jnp.float32),
        "qkv_w": nrm((LAYERS, HIDDEN, 3 * HIDDEN), jnp.bfloat16),
        "qkv_b": jnp.zeros((LAYERS, 1, 3 * HIDDEN), jnp.float32),
        "proj_w": nrm((LAYERS, HIDDEN, HIDDEN), jnp.bfloat16),
        "proj_b": jnp.zeros((LAYERS, 1, HIDDEN), jnp.float32),
        "ln2_g": jnp.ones((LAYERS, 1, HIDDEN), jnp.float32),
        "ln2_b": jnp.zeros((LAYERS, 1, HIDDEN), jnp.float32),
        "fc1_w": nrm((LAYERS, HIDDEN, MLP_DIM), jnp.bfloat16),
        "fc1_b": jnp.zeros((LAYERS, 1, MLP_DIM), jnp.float32),
        "fc2_w": nrm((LAYERS, MLP_DIM, HIDDEN), jnp.bfloat16),
        "fc2_b": jnp.zeros((LAYERS, 1, HIDDEN), jnp.float32),
    }
    return params


# ----------------------------------------------------------------------------
# MaskGit forward (glue around the two Pallas kernels)
# ----------------------------------------------------------------------------
def gamma_func(ratio, mode=GAMMA_TYPE):
    if mode == "linear":
        return 1.0 - ratio
    elif mode == "cosine":
        return (jnp.cos(jnp.pi * ratio) + 1.0) / 2.0
    elif mode == "square":
        return 1.0 - ratio ** 2
    else:
        raise NotImplementedError


def maskgit_forward(params, x_nchw, rng):
    """Mirrors MaskGit.forward(x): encode -> random mask -> transformer."""
    z_indices = encode_to_z(params, x_nchw)                         # (B, T) int32
    # already 2-D and already num_image_tokens long; keep the clamp for fidelity
    z_indices = jnp.clip(z_indices, 0, MASK_TOKEN_ID - 1).astype(jnp.int32)

    # TODO(synk): torch RNG (torch.rand / rand_like) has no Pallas equivalent;
    #             masking schedule stays in JAX glue with jax.random.
    k_ratio, k_mask = jax.random.split(rng)
    B, Tn = z_indices.shape
    ratio = jax.random.uniform(k_ratio, (B,))                       # torch.rand(B)
    mask_ratios = gamma_func(ratio)[:, None]                        # (B, 1) -> (B, T)
    mask = jax.random.uniform(k_mask, (B, Tn)) < mask_ratios        # rand_like < ratio
    z_masked = jnp.where(mask, MASK_TOKEN_ID, z_indices).astype(jnp.int32)

    logits = transformer_logits(params, z_masked)                   # (B, T, VOCAB)
    # PyTorch mutates z_indices in place -> return the masked version.
    # (dtype is int32 here; torch uses int64.)
    return logits, z_masked


# ----------------------------------------------------------------------------
if __name__ == "__main__":
    params = init_params(seed=0)

    key = jax.random.PRNGKey(0)
    k_x, k_fwd = jax.random.split(key)
    x = jax.random.normal(k_x, (BATCH, IN_CH, IMG, IMG), dtype=jnp.float32)  # NCHW

    fwd = jax.jit(lambda p, xx, kk: maskgit_forward(p, xx, kk))
    logits, z_indices = fwd(params, x, k_fwd)
    jax.block_until_ready((logits, z_indices))

    assert logits.shape == (BATCH, NUM_IMAGE_TOKENS, VOCAB)
    assert z_indices.shape == (BATCH, NUM_IMAGE_TOKENS)
    assert z_indices.dtype == jnp.int32
    assert bool(jnp.all(z_indices >= 0)) and bool(jnp.all(z_indices <= MASK_TOKEN_ID))
    assert bool(jnp.all(jnp.isfinite(logits)))

    print("KERNEL_OK")
</pallas_src>

<mosaic_0001>
module attributes {stable_mosaic.version = 11 : i64} {
  func.func @_encode_vq_kernel(%arg0: i32, %arg1: memref<16x64xf32, #tpu.memory_space<vmem>>, %arg2: memref<64x16xf32, #tpu.memory_space<vmem>>, %arg3: memref<1x16xf32, #tpu.memory_space<vmem>>, %arg4: memref<16x64xf32, #tpu.memory_space<vmem>>, %arg5: memref<1x64xf32, #tpu.memory_space<vmem>>, %arg6: memref<16x128xi32, #tpu.memory_space<vmem>>) attributes {dimension_semantics = [#tpu.dimension_semantics<parallel>], iteration_bounds = array<i64: 2>, scalar_prefetch = 0 : i64, scratch_operands = 0 : i64, tpu.core_type = #tpu.core_type<tc>, window_params = [{transform_indices = @transform_0, window_bounds = array<i64: 16, 64>}, {pipeline_mode = #tpu.pipeline_mode<synchronous>, transform_indices = @transform_1, window_bounds = array<i64: 64, 16>}, {pipeline_mode = #tpu.pipeline_mode<synchronous>, transform_indices = @transform_2, window_bounds = array<i64: 1, 16>}, {pipeline_mode = #tpu.pipeline_mode<synchronous>, transform_indices = @transform_3, window_bounds = array<i64: 16, 64>}, {pipeline_mode = #tpu.pipeline_mode<synchronous>, transform_indices = @transform_4, window_bounds = array<i64: 1, 64>}, {transform_indices = @transform_5, window_bounds = array<i64: 16, 128>}]} {
    %c0 = arith.constant 0 : index
    %c0_0 = arith.constant 0 : index
    %0 = vector.load %arg1[%c0, %c0_0] : memref<16x64xf32, #tpu.memory_space<vmem>>, vector<16x64xf32>
    %c0_1 = arith.constant 0 : index
    %c0_2 = arith.constant 0 : index
    %1 = vector.load %arg2[%c0_1, %c0_2] : memref<64x16xf32, #tpu.memory_space<vmem>>, vector<64x16xf32>
    %cst = arith.constant dense<0.000000e+00> : vector<16x16xf32>
    %2 = tpu.matmul %0, %1, %cst {dimension_numbers = #tpu.dot_dimension_numbers<[1], [0], [0], [1], [0, 0, 1, 1], [], []>} : vector<16x64xf32>, vector<64x16xf32>, vector<16x16xf32> -> vector<16x16xf32>
    %c0_3 = arith.constant 0 : index
    %c0_4 = arith.constant 0 : index
    %3 = vector.load %arg3[%c0_3, %c0_4] : memref<1x16xf32, #tpu.memory_space<vmem>>, vector<1x16xf32>
    %4 = vector.broadcast %3 : vector<1x16xf32> to vector<16x16xf32>
    %5 = arith.addf %2, %4 : vector<16x16xf32>
    %c0_5 = arith.constant 0 : index
    %c0_6 = arith.constant 0 : index
    %6 = vector.load %arg4[%c0_5, %c0_6] : memref<16x64xf32, #tpu.memory_space<vmem>>, vector<16x64xf32>
    %cst_7 = arith.constant dense<0.000000e+00> : vector<16x64xf32>
    %7 = tpu.matmul %5, %6, %cst_7 {dimension_numbers = #tpu.dot_dimension_numbers<[1], [0], [0], [1], [0, 0, 1, 1], [], []>} : vector<16x16xf32>, vector<16x64xf32>, vector<16x64xf32> -> vector<16x64xf32>
    %8 = arith.mulf %5, %5 : vector<16x16xf32>
    %cst_8 = arith.constant dense<0.000000e+00> : vector<16xf32>
    %9 = vector.multi_reduction <add>, %8, %cst_8 [1] : vector<16x16xf32> to vector<16xf32>
    %10 = vector.shape_cast %9 : vector<16xf32> to vector<16x1xf32>
    %cst_9 = arith.constant 2.000000e+00 : f32
    %11 = vector.broadcast %cst_9 : f32 to vector<16x64xf32>
    %12 = arith.mulf %11, %7 : vector<16x64xf32>
    %13 = vector.broadcast %10 : vector<16x1xf32> to vector<16x64xf32>
    %14 = arith.subf %13, %12 : vector<16x64xf32>
    %c0_10 = arith.constant 0 : index
    %c0_11 = arith.constant 0 : index
    %15 = vector.load %arg5[%c0_10, %c0_11] : memref<1x64xf32, #tpu.memory_space<vmem>>, vector<1x64xf32>
    %16 = vector.broadcast %15 : vector<1x64xf32> to vector<16x64xf32>
    %17 = arith.addf %14, %16 : vector<16x64xf32>
    %cst_12 = arith.constant dense<0x7F800000> : vector<16xf32>
    %18 = vector.multi_reduction <minimumf>, %17, %cst_12 [1] : vector<16x64xf32> to vector<16xf32>
    %19 = vector.shape_cast %18 : vector<16xf32> to vector<16x1xf32>
    %20 = tpu.iota {dimensions = array<i32: 1>} : vector<16x64xi32>
    %21 = vector.broadcast %19 : vector<16x1xf32> to vector<16x64xf32>
    %22 = arith.cmpf ole, %17, %21 : vector<16x64xf32>
    %c2147483647_i32 = arith.constant 2147483647 : i32
    %23 = vector.broadcast %c2147483647_i32 : i32 to vector<16x64xi32>
    %24 = arith.select %22, %20, %23 : vector<16x64xi1>, vector<16x64xi32>
    %cst_13 = arith.constant dense<2147483647> : vector<16xi32>
    %25 = vector.multi_reduction <minsi>, %24, %cst_13 [1] : vector<16x64xi32> to vector<16xi32>
    %26 = vector.shape_cast %25 : vector<16xi32> to vector<16x1xi32>
    %27 = vector.shape_cast %26 : vector<16x1xi32> to vector<16x1xi32>
    %28 = vector.broadcast %27 : vector<16x1xi32> to vector<16x128xi32>
    %c0_14 = arith.constant 0 : index
    %c0_15 = arith.constant 0 : index
    %29 = vector.load %arg6[%c0_14, %c0_15] : memref<16x128xi32, #tpu.memory_space<vmem>>, vector<16x128xi32>
    tpu.vector_store %arg6[%c0_14, %c0_15], %28 {strides = array<i32>} : memref<16x128xi32, #tpu.memory_space<vmem>>, vector<16x128xi32>,
    return
  }
  func.func @transform_0(%arg0: i32) -> (i32, i32) {
    %c0_i32 = arith.constant 0 : i32
    %c0_i32_0 = arith.constant 0 : i32
    return %arg0, %c0_i32 : i32, i32
  }
  func.func @transform_1(%arg0: i32) -> (i32, i32) {
    %c0_i32 = arith.constant 0 : i32
    %c0_i32_0 = arith.constant 0 : i32
    %c0_i32_1 = arith.constant 0 : i32
    return %c0_i32, %c0_i32_0 : i32, i32
  }
  func.func @transform_2(%arg0: i32) -> (i32, i32) {
    %c0_i32 = arith.constant 0 : i32
    %c0_i32_0 = arith.constant 0 : i32
    %c0_i32_1 = arith.constant 0 : i32
    return %c0_i32, %c0_i32_0 : i32, i32
  }
  func.func @transform_3(%arg0: i32) -> (i32, i32) {
    %c0_i32 = arith.constant 0 : i32
    %c0_i32_0 = arith.constant 0 : i32
    %c0_i32_1 = arith.constant 0 : i32
    return %c0_i32, %c0_i32_0 : i32, i32
  }
  func.func @transform_4(%arg0: i32) -> (i32, i32) {
    %c0_i32 = arith.constant 0 : i32
    %c0_i32_0 = arith.constant 0 : i32
    %c0_i32_1 = arith.constant 0 : i32
    return %c0_i32, %c0_i32_0 : i32, i32
  }
  func.func @transform_5(%arg0: i32) -> (i32, i32) {
    %c0_i32 = arith.constant 0 : i32
    %c0_i32_0 = arith.constant 0 : i32
    return %arg0, %c0_i32 : i32, i32
  }
}

module attributes {stable_mosaic.version = 11 : i64} {
  func.func @_transformer_kernel(%arg0: i32, %arg1: memref<16x1xi32, #tpu.memory_space<vmem>>, %arg2: memref<128x32xbf16, #tpu.memory_space<vmem>>, %arg3: memref<16x32xf32, #tpu.memory_space<vmem>>, %arg4: memref<2x1x32xf32, #tpu.memory_space<vmem>>, %arg5: memref<2x1x32xf32, #tpu.memory_space<vmem>>, %arg6: memref<2x32x96xbf16, #tpu.memory_space<vmem>>, %arg7: memref<2x1x96xf32, #tpu.memory_space<vmem>>, %arg8: memref<2x32x32xbf16, #tpu.memory_space<vmem>>, %arg9: memref<2x1x32xf32, #tpu.memory_space<vmem>>, %arg10: memref<2x1x32xf32, #tpu.memory_space<vmem>>, %arg11: memref<2x1x32xf32, #tpu.memory_space<vmem>>, %arg12: memref<2x32x128xbf16, #tpu.memory_space<vmem>>, %arg13: memref<2x1x128xf32, #tpu.memory_space<vmem>>, %arg14: memref<2x128x32xbf16, #tpu.memory_space<vmem>>, %arg15: memref<2x1x32xf32, #tpu.memory_space<vmem>>, %arg16: memref<1x32xf32, #tpu.memory_space<vmem>>, %arg17: memref<1x32xf32, #tpu.memory_space<vmem>>, %arg18: memref<32x128xbf16, #tpu.memory_space<vmem>>, %arg19: memref<1x128xf32, #tpu.memory_space<vmem>>, %arg20: memref<16x128xf32, #tpu.memory_space<vmem>>) attributes {dimension_semantics = [#tpu.dimension_semantics<parallel>], iteration_bounds = array<i64: 2>, scalar_prefetch = 0 : i64, scratch_operands = 0 : i64, tpu.core_type = #tpu.core_type<tc>, window_params = [{transform_indices = @transform_0, window_bounds = array<i64: 16, 1>}, {pipeline_mode = #tpu.pipeline_mode<synchronous>, transform_indices = @transform_1, window_bounds = array<i64: 128, 32>}, {pipeline_mode = #tpu.pipeline_mode<synchronous>, transform_indices = @transform_2, window_bounds = array<i64: 16, 32>}, {pipeline_mode = #tpu.pipeline_mode<synchronous>, transform_indices = @transform_3, window_bounds = array<i64: 2, 1, 32>}, {pipeline_mode = #tpu.pipeline_mode<synchronous>, transform_indices = @transform_4, window_bounds = array<i64: 2, 1, 32>}, {pipeline_mode = #tpu.pipeline_mode<synchronous>, transform_indices = @transform_5, window_bounds = array<i64: 2, 32, 96>}, {pipeline_mode = #tpu.pipeline_mode<synchronous>, transform_indices = @transform_6, window_bounds = array<i64: 2, 1, 96>}, {pipeline_mode = #tpu.pipeline_mode<synchronous>, transform_indices = @transform_7, window_bounds = array<i64: 2, 32, 32>}, {pipeline_mode = #tpu.pipeline_mode<synchronous>, transform_indices = @transform_8, window_bounds = array<i64: 2, 1, 32>}, {pipeline_mode = #tpu.pipeline_mode<synchronous>, transform_indices = @transform_9, window_bounds = array<i64: 2, 1, 32>}, {pipeline_mode = #tpu.pipeline_mode<synchronous>, transform_indices = @transform_10, window_bounds = array<i64: 2, 1, 32>}, {pipeline_mode = #tpu.pipeline_mode<synchronous>, transform_indices = @transform_11, window_bounds = array<i64: 2, 32, 128>}, {pipeline_mode = #tpu.pipeline_mode<synchronous>, transform_indices = @transform_12, window_bounds = array<i64: 2, 1, 128>}, {pipeline_mode = #tpu.pipeline_mode<synchronous>, transform_indices = @transform_13, window_bounds = array<i64: 2, 128, 32>}, {pipeline_mode = #tpu.pipeline_mode<synchronous>, transform_indices = @transform_14, window_bounds = array<i64: 2, 1, 32>}, {pipeline_mode = #tpu.pipeline_mode<synchronous>, transform_indices = @transform_15, window_bounds = array<i64: 1, 32>}, {pipeline_mode = #tpu.pipeline_mode<synchronous>, transform_indices = @transform_16, window_bounds = array<i64: 1, 32>}, {pipeline_mode = #tpu.pipeline_mode<synchronous>, transform_indices = @transform_17, window_bounds = array<i64: 32, 128>}, {pipeline_mode = #tpu.pipeline_mode<synchronous>, transform_indices = @transform_18, window_bounds = array<i64: 1, 128>}, {transform_indices = @transform_19, window_bounds = array<i64: 16, 128>}]} {
    %c0 = arith.constant 0 : index
    %c0_0 = arith.constant 0 : index
    %0 = vector.load %arg1[%c0, %c0_0] : memref<16x1xi32, #tpu.memory_space<vmem>>, vector<16x1xi32>
    %1 = tpu.iota {dimensions = array<i32: 1>} : vector<16x128xi32>
    %2 = vector.broadcast %0 : vector<16x1xi32> to vector<16x128xi32>
    %3 = arith.cmpi eq, %1, %2 : vector<16x128xi32>
    %cst = arith.constant 1.000000e+00 : f32
    %cst_1 = arith.constant 0.000000e+00 : f32
    %4 = vector.broadcast %cst : f32 to vector<16x128xf32>
    %5 = vector.broadcast %cst_1 : f32 to vector<16x128xf32>
    %6 = arith.select %3, %4, %5 : vector<16x128xi1>, vector<16x128xf32>
    %7 = arith.truncf %6 : vector<16x128xf32> to vector<16x128xbf16>
    %c0_2 = arith.constant 0 : index
    %c0_3 = arith.constant 0 : index
    %8 = vector.load %arg2[%c0_2, %c0_3] : memref<128x32xbf16, #tpu.memory_space<vmem>>, vector<128x32xbf16>
    %cst_4 = arith.constant dense<0.000000e+00> : vector<16x32xf32>
    %9 = tpu.matmul %7, %8, %cst_4 {dimension_numbers = #tpu.dot_dimension_numbers<[1], [0], [0], [1], [0, 0, 1, 1], [], []>} : vector<16x128xbf16>, vector<128x32xbf16>, vector<16x32xf32> -> vector<16x32xf32>
    %c0_5 = arith.constant 0 : index
    %c0_6 = arith.constant 0 : index
    %10 = vector.load %arg3[%c0_5, %c0_6] : memref<16x32xf32, #tpu.memory_space<vmem>>, vector<16x32xf32>
    %11 = arith.addf %9, %10 : vector<16x32xf32>
    %c0_7 = arith.constant 0 : index
    %c0_8 = arith.constant 0 : index
    %c0_9 = arith.constant 0 : index
    %12 = vector.load %arg4[%c0_7, %c0_8, %c0_9] : memref<2x1x32xf32, #tpu.memory_space<vmem>>, vector<1x1x32xf32>
    %13 = vector.shape_cast %12 : vector<1x1x32xf32> to vector<1x32xf32>
    %c0_10 = arith.constant 0 : index
    %c0_11 = arith.constant 0 : index
    %c0_12 = arith.constant 0 : index
    %14 = vector.load %arg5[%c0_10, %c0_11, %c0_12] : memref<2x1x32xf32, #tpu.memory_space<vmem>>, vector<1x1x32xf32>
    %15 = vector.shape_cast %14 : vector<1x1x32xf32> to vector<1x32xf32>
    %cst_13 = arith.constant dense<0.000000e+00> : vector<16xf32>
    %16 = vector.multi_reduction <add>, %11, %cst_13 [1] : vector<16x32xf32> to vector<16xf32>
    %17 = vector.shape_cast %16 : vector<16xf32> to vector<16x1xf32>
    %cst_14 = arith.constant 3.200000e+01 : f32
    %18 = vector.broadcast %cst_14 : f32 to vector<16x1xf32>
    %19 = arith.divf %17, %18 : vector<16x1xf32>
    %20 = vector.broadcast %19 : vector<16x1xf32> to vector<16x32xf32>
    %21 = arith.subf %11, %20 : vector<16x32xf32>
    %22 = arith.mulf %21, %21 : vector<16x32xf32>
    %cst_15 = arith.constant dense<0.000000e+00> : vector<16xf32>
    %23 = vector.multi_reduction <add>, %22, %cst_15 [1] : vector<16x32xf32> to vector<16xf32>
    %24 = vector.shape_cast %23 : vector<16xf32> to vector<16x1xf32>
    %cst_16 = arith.constant 3.200000e+01 : f32
    %25 = vector.broadcast %cst_16 : f32 to vector<16x1xf32>
    %26 = arith.divf %24, %25 : vector<16x1xf32>
    %27 = vector.broadcast %19 : vector<16x1xf32> to vector<16x32xf32>
    %28 = arith.subf %11, %27 : vector<16x32xf32>
    %cst_17 = arith.constant 9.99999974E-6 : f32
    %29 = vector.broadcast %cst_17 : f32 to vector<16x1xf32>
    %30 = arith.addf %26, %29 : vector<16x1xf32>
    %31 = math.rsqrt %30 : vector<16x1xf32>
    %32 = vector.broadcast %31 : vector<16x1xf32> to vector<16x32xf32>
    %33 = arith.mulf %28, %32 : vector<16x32xf32>
    %34 = vector.broadcast %13 : vector<1x32xf32> to vector<16x32xf32>
    %35 = arith.mulf %33, %34 : vector<16x32xf32>
    %36 = vector.broadcast %15 : vector<1x32xf32> to vector<16x32xf32>
    %37 = arith.addf %35, %36 : vector<16x32xf32>
    %38 = arith.truncf %37 : vector<16x32xf32> to vector<16x32xbf16>
    %c0_18 = arith.constant 0 : index
    %c0_19 = arith.constant 0 : index
    %c0_20 = arith.constant 0 : index
    %39 = vector.load %arg6[%c0_18, %c0_19, %c0_20] : memref<2x32x96xbf16, #tpu.memory_space<vmem>>, vector<1x32x96xbf16>
    %40 = vector.shape_cast %39 : vector<1x32x96xbf16> to vector<32x96xbf16>
    %cst_21 = arith.constant dense<0.000000e+00> : vector<16x96xf32>
    %41 = tpu.matmul %38, %40, %cst_21 {dimension_numbers = #tpu.dot_dimension_numbers<[1], [0], [0], [1], [0, 0, 1, 1], [], []>} : vector<16x32xbf16>, vector<32x96xbf16>, vector<16x96xf32> -> vector<16x96xf32>
    %c0_22 = arith.constant 0 : index
    %c0_23 = arith.constant 0 : index
    %c0_24 = arith.constant 0 : index
    %42 = vector.load %arg7[%c0_22, %c0_23, %c0_24] : memref<2x1x96xf32, #tpu.memory_space<vmem>>, vector<1x1x96xf32>
    %43 = vector.shape_cast %42 : vector<1x1x96xf32> to vector<1x96xf32>
    %44 = vector.broadcast %43 : vector<1x96xf32> to vector<16x96xf32>
    %45 = arith.addf %41, %44 : vector<16x96xf32>
    %46 = vector.extract_strided_slice %45 {offsets = [0, 0], sizes = [16, 32], strides = [1, 1]} : vector<16x96xf32> to vector<16x32xf32>
    %47 = vector.extract_strided_slice %45 {offsets = [0, 32], sizes = [16, 32], strides = [1, 1]} : vector<16x96xf32> to vector<16x32xf32>
    %48 = vector.extract_strided_slice %45 {offsets = [0, 64], sizes = [16, 32], strides = [1, 1]} : vector<16x96xf32> to vector<16x32xf32>
    %49 = vector.extract_strided_slice %46 {offsets = [0, 0], sizes = [16, 8], strides = [1, 1]} : vector<16x32xf32> to vector<16x8xf32>
    %50 = arith.truncf %49 : vector<16x8xf32> to vector<16x8xbf16>
    %51 = vector.extract_strided_slice %47 {offsets = [0, 0], sizes = [16, 8], strides = [1, 1]} : vector<16x32xf32> to vector<16x8xf32>
    %52 = arith.truncf %51 : vector<16x8xf32> to vector<16x8xbf16>
    %53 = vector.extract_strided_slice %48 {offsets = [0, 0], sizes = [16, 8], strides = [1, 1]} : vector<16x32xf32> to vector<16x8xf32>
    %54 = arith.truncf %53 : vector<16x8xf32> to vector<16x8xbf16>
    %cst_25 = arith.constant dense<0.000000e+00> : vector<16x16xf32>
    %55 = tpu.matmul %50, %52, %cst_25 {dimension_numbers = #tpu.dot_dimension_numbers<[1], [1], [0], [0], [0, 0, 1, 0], [], []>} : vector<16x8xbf16>, vector<16x8xbf16>, vector<16x16xf32> -> vector<16x16xf32>
    %cst_26 = arith.constant 0.353553385 : f32
    %56 = vector.broadcast %cst_26 : f32 to vector<16x16xf32>
    %57 = arith.mulf %55, %56 : vector<16x16xf32>
    %cst_27 = arith.constant dense<0xFF800000> : vector<16xf32>
    %58 = vector.multi_reduction <maximumf>, %57, %cst_27 [1] : vector<16x16xf32> to vector<16xf32>
    %59 = vector.shape_cast %58 : vector<16xf32> to vector<16x1xf32>
    %60 = vector.broadcast %59 : vector<16x1xf32> to vector<16x16xf32>
    %61 = arith.subf %57, %60 : vector<16x16xf32>
    %62 = math.exp %61 : vector<16x16xf32>
    %cst_28 = arith.constant dense<0.000000e+00> : vector<16xf32>
    %63 = vector.multi_reduction <add>, %62, %cst_28 [1] : vector<16x16xf32> to vector<16xf32>
    %64 = vector.shape_cast %63 : vector<16xf32> to vector<16x1xf32>
    %65 = tpu.reciprocal %64 {approx = true} : vector<16x1xf32> -> vector<16x1xf32>
    %66 = vector.broadcast %65 : vector<16x1xf32> to vector<16x16xf32>
    %67 = arith.mulf %62, %66 : vector<16x16xf32>
    %68 = arith.truncf %67 : vector<16x16xf32> to vector<16x16xbf16>
    %cst_29 = arith.constant dense<0.000000e+00> : vector<16x8xf32>
    %69 = tpu.matmul %68, %54, %cst_29 {dimension_numbers = #tpu.dot_dimension_numbers<[1], [0], [0], [1], [0, 0, 1, 1], [], []>} : vector<16x16xbf16>, vector<16x8xbf16>, vector<16x8xf32> -> vector<16x8xf32>
    %70 = vector.extract_strided_slice %46 {offsets = [0, 8], sizes = [16, 8], strides = [1, 1]} : vector<16x32xf32> to vector<16x8xf32>
    %71 = arith.truncf %70 : vector<16x8xf32> to vector<16x8xbf16>
    %72 = vector.extract_strided_slice %47 {offsets = [0, 8], sizes = [16, 8], strides = [1, 1]} : vector<16x32xf32> to vector<16x8xf32>
    %73 = arith.truncf %72 : vector<16x8xf32> to vector<16x8xbf16>
    %74 = vector.extract_strided_slice %48 {offsets = [0, 8], sizes = [16, 8], strides = [1, 1]} : vector<16x32xf32> to vector<16x8xf32>
    %75 = arith.truncf %74 : vector<16x8xf32> to vector<16x8xbf16>
    %cst_30 = arith.constant dense<0.000000e+00> : vector<16x16xf32>
    %76 = tpu.matmul %71, %73, %cst_30 {dimension_numbers = #tpu.dot_dimension_numbers<[1], [1], [0], [0], [0, 0, 1, 0], [], []>} : vector<16x8xbf16>, vector<16x8xbf16>, vector<16x16xf32> -> vector<16x16xf32>
    %cst_31 = arith.constant 0.353553385 : f32
    %77 = vector.broadcast %cst_31 : f32 to vector<16x16xf32>
    %78 = arith.mulf %76, %77 : vector<16x16xf32>
    %cst_32 = arith.constant dense<0xFF800000> : vector<16xf32>
    %79 = vector.multi_reduction <maximumf>, %78, %cst_32 [1] : vector<16x16xf32> to vector<16xf32>
    %80 = vector.shape_cast %79 : vector<16xf32> to vector<16x1xf32>
    %81 = vector.broadcast %80 : vector<16x1xf32> to vector<16x16xf32>
    %82 = arith.subf %78, %81 : vector<16x16xf32>
    %83 = math.exp %82 : vector<16x16xf32>
    %cst_33 = arith.constant dense<0.000000e+00> : vector<16xf32>
    %84 = vector.multi_reduction <add>, %83, %cst_33 [1] : vector<16x16xf32> to vector<16xf32>
    %85 = vector.shape_cast %84 : vector<16xf32> to vector<16x1xf32>
    %86 = tpu.reciprocal %85 {approx = true} : vector<16x1xf32> -> vector<16x1xf32>
    %87 = vector.broadcast %86 : vector<16x1xf32> to vector<16x16xf32>
    %88 = arith.mulf %83, %87 : vector<16x16xf32>
    %89 = arith.truncf %88 : vector<16x16xf32> to vector<16x16xbf16>
    %cst_34 = arith.constant dense<0.000000e+00> : vector<16x8xf32>
    %90 = tpu.matmul %89, %75, %cst_34 {dimension_numbers = #tpu.dot_dimension_numbers<[1], [0], [0], [1], [0, 0, 1, 1], [], []>} : vector<16x16xbf16>, vector<16x8xbf16>, vector<16x8xf32> -> vector<16x8xf32>
    %91 = vector.extract_strided_slice %46 {offsets = [0, 16], sizes = [16, 8], strides = [1, 1]} : vector<16x32xf32> to vector<16x8xf32>
    %92 = arith.truncf %91 : vector<16x8xf32> to vector<16x8xbf16>
    %93 = vector.extract_strided_slice %47 {offsets = [0, 16], sizes = [16, 8], strides = [1, 1]} : vector<16x32xf32> to vector<16x8xf32>
    %94 = arith.truncf %93 : vector<16x8xf32> to vector<16x8xbf16>
    %95 = vector.extract_strided_slice %48 {offsets = [0, 16], sizes = [16, 8], strides = [1, 1]} : vector<16x32xf32> to vector<16x8xf32>
    %96 = arith.truncf %95 : vector<16x8xf32> to vector<16x8xbf16>
    %cst_35 = arith.constant dense<0.000000e+00> : vector<16x16xf32>
    %97 = tpu.matmul %92, %94, %cst_35 {dimension_numbers = #tpu.dot_dimension_numbers<[1], [1], [0], [0], [0, 0, 1, 0], [], []>} : vector<16x8xbf16>, vector<16x8xbf16>, vector<16x16xf32> -> vector<16x16xf32>
    %cst_36 = arith.constant 0.353553385 : f32
    %98 = vector.broadcast %cst_36 : f32 to vector<16x16xf32>
    %99 = arith.mulf %97, %98 : vector<16x16xf32>
    %cst_37 = arith.constant dense<0xFF800000> : vector<16xf32>
    %100 = vector.multi_reduction <maximumf>, %99, %cst_37 [1] : vector<16x16xf32> to vector<16xf32>
    %101 = vector.shape_cast %100 : vector<16xf32> to vector<16x1xf32>
    %102 = vector.broadcast %101 : vector<16x1xf32> to vector<16x16xf32>
    %103 = arith.subf %99, %102 : vector<16x16xf32>
    %104 = math.exp %103 : vector<16x16xf32>
    %cst_38 = arith.constant dense<0.000000e+00> : vector<16xf32>
    %105 = vector.multi_reduction <add>, %104, %cst_38 [1] : vector<16x16xf32> to vector<16xf32>
    %106 = vector.shape_cast %105 : vector<16xf32> to vector<16x1xf32>
    %107 = tpu.reciprocal %106 {approx = true} : vector<16x1xf32> -> vector<16x1xf32>
    %108 = vector.broadcast %107 : vector<16x1xf32> to vector<16x16xf32>
    %109 = arith.mulf %104, %108 : vector<16x16xf32>
    %110 = arith.truncf %109 : vector<16x16xf32> to vector<16x16xbf16>
    %cst_39 = arith.constant dense<0.000000e+00> : vector<16x8xf32>
    %111 = tpu.matmul %110, %96, %cst_39 {dimension_numbers = #tpu.dot_dimension_numbers<[1], [0], [0], [1], [0, 0, 1, 1], [], []>} : vector<16x16xbf16>, vector<16x8xbf16>, vector<16x8xf32> -> vector<16x8xf32>
    %112 = vector.extract_strided_slice %46 {offsets = [0, 24], sizes = [16, 8], strides = [1, 1]} : vector<16x32xf32> to vector<16x8xf32>
    %113 = arith.truncf %112 : vector<16x8xf32> to vector<16x8xbf16>
    %114 = vector.extract_strided_slice %47 {offsets = [0, 24], sizes = [16, 8], strides = [1, 1]} : vector<16x32xf32> to vector<16x8xf32>
    %115 = arith.truncf %114 : vector<16x8xf32> to vector<16x8xbf16>
    %116 = vector.extract_strided_slice %48 {offsets = [0, 24], sizes = [16, 8], strides = [1, 1]} : vector<16x32xf32> to vector<16x8xf32>
    %117 = arith.truncf %116 : vector<16x8xf32> to vector<16x8xbf16>
    %cst_40 = arith.constant dense<0.000000e+00> : vector<16x16xf32>
    %118 = tpu.matmul %113, %115, %cst_40 {dimension_numbers = #tpu.dot_dimension_numbers<[1], [1], [0], [0], [0, 0, 1, 0], [], []>} : vector<16x8xbf16>, vector<16x8xbf16>, vector<16x16xf32> -> vector<16x16xf32>
    %cst_41 = arith.constant 0.353553385 : f32
    %119 = vector.broadcast %cst_41 : f32 to vector<16x16xf32>
    %120 = arith.mulf %118, %119 : vector<16x16xf32>
    %cst_42 = arith.constant dense<0xFF800000> : vector<16xf32>
    %121 = vector.multi_reduction <maximumf>, %120, %cst_42 [1] : vector<16x16xf32> to vector<16xf32>
    %122 = vector.shape_cast %121 : vector<16xf32> to vector<16x1xf32>
    %123 = vector.broadcast %122 : vector<16x1xf32> to vector<16x16xf32>
    %124 = arith.subf %120, %123 : vector<16x16xf32>
    %125 = math.exp %124 : vector<16x16xf32>
    %cst_43 = arith.constant dense<0.000000e+00> : vector<16xf32>
    %126 = vector.multi_reduction <add>, %125, %cst_43 [1] : vector<16x16xf32> to vector<16xf32>
    %127 = vector.shape_cast %126 : vector<16xf32> to vector<16x1xf32>
    %128 = tpu.reciprocal %127 {approx = true} : vector<16x1xf32> -> vector<16x1xf32>
    %129 = vector.broadcast %128 : vector<16x1xf32> to vector<16x16xf32>
    %130 = arith.mulf %125, %129 : vector<16x16xf32>
    %131 = arith.truncf %130 : vector<16x16xf32> to vector<16x16xbf16>
    %cst_44 = arith.constant dense<0.000000e+00> : vector<16x8xf32>
    %132 = tpu.matmul %131, %117, %cst_44 {dimension_numbers = #tpu.dot_dimension_numbers<[1], [0], [0], [1], [0, 0, 1, 1], [], []>} : vector<16x16xbf16>, vector<16x8xbf16>, vector<16x8xf32> -> vector<16x8xf32>
    %133 = tpu.concatenate %69, %90, %111, %132 in 1 : vector<16x8xf32>, vector<16x8xf32>, vector<16x8xf32>, vector<16x8xf32> -> vector<16x32xf32>
    %134 = arith.truncf %133 : vector<16x32xf32> to vector<16x32xbf16>
    %c0_45 = arith.constant 0 : index
    %c0_46 = arith.constant 0 : index
    %c0_47 = arith.constant 0 : index
    %135 = vector.load %arg8[%c0_45, %c0_46, %c0_47] : memref<2x32x32xbf16, #tpu.memory_space<vmem>>, vector<1x32x32xbf16>
    %136 = vector.shape_cast %135 : vector<1x32x32xbf16> to vector<32x32xbf16>
    %cst_48 = arith.constant dense<0.000000e+00> : vector<16x32xf32>
    %137 = tpu.matmul %134, %136, %cst_48 {dimension_numbers = #tpu.dot_dimension_numbers<[1], [0], [0], [1], [0, 0, 1, 1], [], []>} : vector<16x32xbf16>, vector<32x32xbf16>, vector<16x32xf32> -> vector<16x32xf32>
    %138 = arith.addf %11, %137 : vector<16x32xf32>
    %c0_49 = arith.constant 0 : index
    %c0_50 = arith.constant 0 : index
    %c0_51 = arith.constant 0 : index
    %139 = vector.load %arg9[%c0_49, %c0_50, %c0_51] : memref<2x1x32xf32, #tpu.memory_space<vmem>>, vector<1x1x32xf32>
    %140 = vector.shape_cast %139 : vector<1x1x32xf32> to vector<1x32xf32>
    %141 = vector.broadcast %140 : vector<1x32xf32> to vector<16x32xf32>
    %142 = arith.addf %138, %141 : vector<16x32xf32>
    %c0_52 = arith.constant 0 : index
    %c0_53 = arith.constant 0 : index
    %c0_54 = arith.constant 0 : index
    %143 = vector.load %arg10[%c0_52, %c0_53, %c0_54] : memref<2x1x32xf32, #tpu.memory_space<vmem>>, vector<1x1x32xf32>
    %144 = vector.shape_cast %143 : vector<1x1x32xf32> to vector<1x32xf32>
    %c0_55 = arith.constant 0 : index
    %c0_56 = arith.constant 0 : index
    %c0_57 = arith.constant 0 : index
    %145 = vector.load %arg11[%c0_55, %c0_56, %c0_57] : memref<2x1x32xf32, #tpu.memory_space<vmem>>, vector<1x1x32xf32>
    %146 = vector.shape_cast %145 : vector<1x1x32xf32> to vector<1x32xf32>
    %cst_58 = arith.constant dense<0.000000e+00> : vector<16xf32>
    %147 = vector.multi_reduction <add>, %142, %cst_58 [1] : vector<16x32xf32> to vector<16xf32>
    %148 = vector.shape_cast %147 : vector<16xf32> to vector<16x1xf32>
    %cst_59 = arith.constant 3.200000e+01 : f32
    %149 = vector.broadcast %cst_59 : f32 to vector<16x1xf32>
    %150 = arith.divf %148, %149 : vector<16x1xf32>
    %151 = vector.broadcast %150 : vector<16x1xf32> to vector<16x32xf32>
    %152 = arith.subf %142, %151 : vector<16x32xf32>
    %153 = arith.mulf %152, %152 : vector<16x32xf32>
    %cst_60 = arith.constant dense<0.000000e+00> : vector<16xf32>
    %154 = vector.multi_reduction <add>, %153, %cst_60 [1] : vector<16x32xf32> to vector<16xf32>
    %155 = vector.shape_cast %154 : vector<16xf32> to vector<16x1xf32>
    %cst_61 = arith.constant 3.200000e+01 : f32
    %156 = vector.broadcast %cst_61 : f32 to vector<16x1xf32>
    %157 = arith.divf %155, %156 : vector<16x1xf32>
    %158 = vector.broadcast %150 : vector<16x1xf32> to vector<16x32xf32>
    %159 = arith.subf %142, %158 : vector<16x32xf32>
    %cst_62 = arith.constant 9.99999974E-6 : f32
    %160 = vector.broadcast %cst_62 : f32 to vector<16x1xf32>
    %161 = arith.addf %157, %160 : vector<16x1xf32>
    %162 = math.rsqrt %161 : vector<16x1xf32>
    %163 = vector.broadcast %162 : vector<16x1xf32> to vector<16x32xf32>
    %164 = arith.mulf %159, %163 : vector<16x32xf32>
    %165 = vector.broadcast %144 : vector<1x32xf32> to vector<16x32xf32>
    %166 = arith.mulf %164, %165 : vector<16x32xf32>
    %167 = vector.broadcast %146 : vector<1x32xf32> to vector<16x32xf32>
    %168 = arith.addf %166, %167 : vector<16x32xf32>
    %169 = arith.truncf %168 : vector<16x32xf32> to vector<16x32xbf16>
    %c0_63 = arith.constant 0 : index
    %c0_64 = arith.constant 0 : index
    %c0_65 = arith.constant 0 : index
    %170 = vector.load %arg12[%c0_63, %c0_64, %c0_65] : memref<2x32x128xbf16, #tpu.memory_space<vmem>>, vector<1x32x128xbf16>
    %171 = vector.shape_cast %170 : vector<1x32x128xbf16> to vector<32x128xbf16>
    %cst_66 = arith.constant dense<0.000000e+00> : vector<16x128xf32>
    %172 = tpu.matmul %169, %171, %cst_66 {dimension_numbers = #tpu.dot_dimension_numbers<[1], [0], [0], [1], [0, 0, 1, 1], [], []>} : vector<16x32xbf16>, vector<32x128xbf16>, vector<16x128xf32> -> vector<16x128xf32>
    %c0_67 = arith.constant 0 : index
    %c0_68 = arith.constant 0 : index
    %c0_69 = arith.constant 0 : index
    %173 = vector.load %arg13[%c0_67, %c0_68, %c0_69] : memref<2x1x128xf32, #tpu.memory_space<vmem>>, vector<1x1x128xf32>
    %174 = vector.shape_cast %173 : vector<1x1x128xf32> to vector<1x128xf32>
    %175 = vector.broadcast %174 : vector<1x128xf32> to vector<16x128xf32>
    %176 = arith.addf %172, %175 : vector<16x128xf32>
    %177 = arith.mulf %176, %176 : vector<16x128xf32>
    %178 = arith.mulf %176, %177 : vector<16x128xf32>
    %cst_70 = arith.constant 4.471500e-02 : f32
    %179 = vector.broadcast %cst_70 : f32 to vector<16x128xf32>
    %180 = arith.mulf %179, %178 : vector<16x128xf32>
    %181 = arith.addf %176, %180 : vector<16x128xf32>
    %cst_71 = arith.constant 0.797884583 : f32
    %182 = vector.broadcast %cst_71 : f32 to vector<16x128xf32>
    %183 = arith.mulf %182, %181 : vector<16x128xf32>
    %184 = math.tanh %183 : vector<16x128xf32>
    %cst_72 = arith.constant 1.000000e+00 : f32
    %185 = vector.broadcast %cst_72 : f32 to vector<16x128xf32>
    %186 = arith.addf %185, %184 : vector<16x128xf32>
    %cst_73 = arith.constant 5.000000e-01 : f32
    %187 = vector.broadcast %cst_73 : f32 to vector<16x128xf32>
    %188 = arith.mulf %187, %186 : vector<16x128xf32>
    %189 = arith.mulf %176, %188 : vector<16x128xf32>
    %190 = arith.truncf %189 : vector<16x128xf32> to vector<16x128xbf16>
    %c0_74 = arith.constant 0 : index
    %c0_75 = arith.constant 0 : index
    %c0_76 = arith.constant 0 : index
    %191 = vector.load %arg14[%c0_74, %c0_75, %c0_76] : memref<2x128x32xbf16, #tpu.memory_space<vmem>>, vector<1x128x32xbf16>
    %192 = vector.shape_cast %191 : vector<1x128x32xbf16> to vector<128x32xbf16>
    %cst_77 = arith.constant dense<0.000000e+00> : vector<16x32xf32>
    %193 = tpu.matmul %190, %192, %cst_77 {dimension_numbers = #tpu.dot_dimension_numbers<[1], [0], [0], [1], [0, 0, 1, 1], [], []>} : vector<16x128xbf16>, vector<128x32xbf16>, vector<16x32xf32> -> vector<16x32xf32>
    %194 = arith.addf %142, %193 : vector<16x32xf32>
    %c0_78 = arith.constant 0 : index
    %c0_79 = arith.constant 0 : index
    %c0_80 = arith.constant 0 : index
    %195 = vector.load %arg15[%c0_78, %c0_79, %c0_80] : memref<2x1x32xf32, #tpu.memory_space<vmem>>, vector<1x1x32xf32>
    %196 = vector.shape_cast %195 : vector<1x1x32xf32> to vector<1x32xf32>
    %197 = vector.broadcast %196 : vector<1x32xf32> to vector<16x32xf32>
    %198 = arith.addf %194, %197 : vector<16x32xf32>
    %c1 = arith.constant 1 : index
    %c0_81 = arith.constant 0 : index
    %c0_82 = arith.constant 0 : index
    %199 = vector.load %arg4[%c1, %c0_81, %c0_82] : memref<2x1x32xf32, #tpu.memory_space<vmem>>, vector<1x1x32xf32>
    %200 = vector.shape_cast %199 : vector<1x1x32xf32> to vector<1x32xf32>
    %c1_83 = arith.constant 1 : index
    %c0_84 = arith.constant 0 : index
    %c0_85 = arith.constant 0 : index
    %201 = vector.load %arg5[%c1_83, %c0_84, %c0_85] : memref<2x1x32xf32, #tpu.memory_space<vmem>>, vector<1x1x32xf32>
    %202 = vector.shape_cast %201 : vector<1x1x32xf32> to vector<1x32xf32>
    %cst_86 = arith.constant dense<0.000000e+00> : vector<16xf32>
    %203 = vector.multi_reduction <add>, %198, %cst_86 [1] : vector<16x32xf32> to vector<16xf32>
    %204 = vector.shape_cast %203 : vector<16xf32> to vector<16x1xf32>
    %cst_87 = arith.constant 3.200000e+01 : f32
    %205 = vector.broadcast %cst_87 : f32 to vector<16x1xf32>
    %206 = arith.divf %204, %205 : vector<16x1xf32>
    %207 = vector.broadcast %206 : vector<16x1xf32> to vector<16x32xf32>
    %208 = arith.subf %198, %207 : vector<16x32xf32>
    %209 = arith.mulf %208, %208 : vector<16x32xf32>
    %cst_88 = arith.constant dense<0.000000e+00> : vector<16xf32>
    %210 = vector.multi_reduction <add>, %209, %cst_88 [1] : vector<16x32xf32> to vector<16xf32>
    %211 = vector.shape_cast %210 : vector<16xf32> to vector<16x1xf32>
    %cst_89 = arith.constant 3.200000e+01 : f32
    %212 = vector.broadcast %cst_89 : f32 to vector<16x1xf32>
    %213 = arith.divf %211, %212 : vector<16x1xf32>
    %214 = vector.broadcast %206 : vector<16x1xf32> to vector<16x32xf32>
    %215 = arith.subf %198, %214 : vector<16x32xf32>
    %cst_90 = arith.constant 9.99999974E-6 : f32
    %216 = vector.broadcast %cst_90 : f32 to vector<16x1xf32>
    %217 = arith.addf %213, %216 : vector<16x1xf32>
    %218 = math.rsqrt %217 : vector<16x1xf32>
    %219 = vector.broadcast %218 : vector<16x1xf32> to vector<16x32xf32>
    %220 = arith.mulf %215, %219 : vector<16x32xf32>
    %221 = vector.broadcast %200 : vector<1x32xf32> to vector<16x32xf32>
    %222 = arith.mulf %220, %221 : vector<16x32xf32>
    %223 = vector.broadcast %202 : vector<1x32xf32> to vector<16x32xf32>
    %224 = arith.addf %222, %223 : vector<16x32xf32>
    %225 = arith.truncf %224 : vector<16x32xf32> to vector<16x32xbf16>
    %c1_91 = arith.constant 1 : index
    %c0_92 = arith.constant 0 : index
    %c0_93 = arith.constant 0 : index
    %226 = vector.load %arg6[%c1_91, %c0_92, %c0_93] : memref<2x32x96xbf16, #tpu.memory_space<vmem>>, vector<1x32x96xbf16>
    %227 = vector.shape_cast %226 : vector<1x32x96xbf16> to vector<32x96xbf16>
    %cst_94 = arith.constant dense<0.000000e+00> : vector<16x96xf32>
    %228 = tpu.matmul %225, %227, %cst_94 {dimension_numbers = #tpu.dot_dimension_numbers<[1], [0], [0], [1], [0, 0, 1, 1], [], []>} : vector<16x32xbf16>, vector<32x96xbf16>, vector<16x96xf32> -> vector<16x96xf32>
    %c1_95 = arith.constant 1 : index
    %c0_96 = arith.constant 0 : index
    %c0_97 = arith.constant 0 : index
    %229 = vector.load %arg7[%c1_95, %c0_96, %c0_97] : memref<2x1x96xf32, #tpu.memory_space<vmem>>, vector<1x1x96xf32>
    %230 = vector.shape_cast %229 : vector<1x1x96xf32> to vector<1x96xf32>
    %231 = vector.broadcast %230 : vector<1x96xf32> to vector<16x96xf32>
    %232 = arith.addf %228, %231 : vector<16x96xf32>
    %233 = vector.extract_strided_slice %232 {offsets = [0, 0], sizes = [16, 32], strides = [1, 1]} : vector<16x96xf32> to vector<16x32xf32>
    %234 = vector.extract_strided_slice %232 {offsets = [0, 32], sizes = [16, 32], strides = [1, 1]} : vector<16x96xf32> to vector<16x32xf32>
    %235 = vector.extract_strided_slice %232 {offsets = [0, 64], sizes = [16, 32], strides = [1, 1]} : vector<16x96xf32> to vector<16x32xf32>
    %236 = vector.extract_strided_slice %233 {offsets = [0, 0], sizes = [16, 8], strides = [1, 1]} : vector<16x32xf32> to vector<16x8xf32>
    %237 = arith.truncf %236 : vector<16x8xf32> to vector<16x8xbf16>
    %238 = vector.extract_strided_slice %234 {offsets = [0, 0], sizes = [16, 8], strides = [1, 1]} : vector<16x32xf32> to vector<16x8xf32>
    %239 = arith.truncf %238 : vector<16x8xf32> to vector<16x8xbf16>
    %240 = vector.extract_strided_slice %235 {offsets = [0, 0], sizes = [16, 8], strides = [1, 1]} : vector<16x32xf32> to vector<16x8xf32>
    %241 = arith.truncf %240 : vector<16x8xf32> to vector<16x8xbf16>
    %cst_98 = arith.constant dense<0.000000e+00> : vector<16x16xf32>
    %242 = tpu.matmul %237, %239, %cst_98 {dimension_numbers = #tpu.dot_dimension_numbers<[1], [1], [0], [0], [0, 0, 1, 0], [], []>} : vector<16x8xbf16>, vector<16x8xbf16>, vector<16x16xf32> -> vector<16x16xf32>
    %cst_99 = arith.constant 0.353553385 : f32
    %243 = vector.broadcast %cst_99 : f32 to vector<16x16xf32>
    %244 = arith.mulf %242, %243 : vector<16x16xf32>
    %cst_100 = arith.constant dense<0xFF800000> : vector<16xf32>
    %245 = vector.multi_reduction <maximumf>, %244, %cst_100 [1] : vector<16x16xf32> to vector<16xf32>
    %246 = vector.shape_cast %245 : vector<16xf32> to vector<16x1xf32>
    %247 = vector.broadcast %246 : vector<16x1xf32> to vector<16x16xf32>
    %248 = arith.subf %244, %247 : vector<16x16xf32>
    %249 = math.exp %248 : vector<16x16xf32>
    %cst_101 = arith.constant dense<0.000000e+00> : vector<16xf32>
    %250 = vector.multi_reduction <add>, %249, %cst_101 [1] : vector<16x16xf32> to vector<16xf32>
    %251 = vector.shape_cast %250 : vector<16xf32> to vector<16x1xf32>
    %252 = tpu.reciprocal %251 {approx = true} : vector<16x1xf32> -> vector<16x1xf32>
    %253 = vector.broadcast %252 : vector<16x1xf32> to vector<16x16xf32>
    %254 = arith.mulf %249, %253 : vector<16x16xf32>
    %255 = arith.truncf %254 : vector<16x16xf32> to vector<16x16xbf16>
    %cst_102 = arith.constant dense<0.000000e+00> : vector<16x8xf32>
    %256 = tpu.matmul %255, %241, %cst_102 {dimension_numbers = #tpu.dot_dimension_numbers<[1], [0], [0], [1], [0, 0, 1, 1], [], []>} : vector<16x16xbf16>, vector<16x8xbf16>, vector<16x8xf32> -> vector<16x8xf32>
    %257 = vector.extract_strided_slice %233 {offsets = [0, 8], sizes = [16, 8], strides = [1, 1]} : vector<16x32xf32> to vector<16x8xf32>
    %258 = arith.truncf %257 : vector<16x8xf32> to vector<16x8xbf16>
    %259 = vector.extract_strided_slice %234 {offsets = [0, 8], sizes = [16, 8], strides = [1, 1]} : vector<16x32xf32> to vector<16x8xf32>
    %260 = arith.truncf %259 : vector<16x8xf32> to vector<16x8xbf16>
    %261 = vector.extract_strided_slice %235 {offsets = [0, 8], sizes = [16, 8], strides = [1, 1]} : vector<16x32xf32> to vector<16x8xf32>
    %262 = arith.truncf %261 : vector<16x8xf32> to vector<16x8xbf16>
    %cst_103 = arith.constant dense<0.000000e+00> : vector<16x16xf32>
    %263 = tpu.matmul %258, %260, %cst_103 {dimension_numbers = #tpu.dot_dimension_numbers<[1], [1], [0], [0], [0, 0, 1, 0], [], []>} : vector<16x8xbf16>, vector<16x8xbf16>, vector<16x16xf32> -> vector<16x16xf32>
    %cst_104 = arith.constant 0.353553385 : f32
    %264 = vector.broadcast %cst_104 : f32 to vector<16x16xf32>
    %265 = arith.mulf %263, %264 : vector<16x16xf32>
    %cst_105 = arith.constant dense<0xFF800000> : vector<16xf32>
    %266 = vector.multi_reduction <maximumf>, %265, %cst_105 [1] : vector<16x16xf32> to vector<16xf32>
    %267 = vector.shape_cast %266 : vector<16xf32> to vector<16x1xf32>
    %268 = vector.broadcast %267 : vector<16x1xf32> to vector<16x16xf32>
    %269 = arith.subf %265, %268 : vector<16x16xf32>
    %270 = math.exp %269 : vector<16x16xf32>
    %cst_106 = arith.constant dense<0.000000e+00> : vector<16xf32>
    %271 = vector.multi_reduction <add>, %270, %cst_106 [1] : vector<16x16xf32> to vector<16xf32>
    %272 = vector.shape_cast %271 : vector<16xf32> to vector<16x1xf32>
    %273 = tpu.reciprocal %272 {approx = true} : vector<16x1xf32> -> vector<16x1xf32>
    %274 = vector.broadcast %273 : vector<16x1xf32> to vector<16x16xf32>
    %275 = arith.mulf %270, %274 : vector<16x16xf32>
    %276 = arith.truncf %275 : vector<16x16xf32> to vector<16x16xbf16>
    %cst_107 = arith.constant dense<0.000000e+00> : vector<16x8xf32>
    %277 = tpu.matmul %276, %262, %cst_107 {dimension_numbers = #tpu.dot_dimension_numbers<[1], [0], [0], [1], [0, 0, 1, 1], [], []>} : vector<16x16xbf16>, vector<16x8xbf16>, vector<16x8xf32> -> vector<16x8xf32>
    %278 = vector.extract_strided_slice %233 {offsets = [0, 16], sizes = [16, 8], strides = [1, 1]} : vector<16x32xf32> to vector<16x8xf32>
    %279 = arith.truncf %278 : vector<16x8xf32> to vector<16x8xbf16>
    %280 = vector.extract_strided_slice %234 {offsets = [0, 16], sizes = [16, 8], strides = [1, 1]} : vector<16x32xf32> to vector<16x8xf32>
    %281 = arith.truncf %280 : vector<16x8xf32> to vector<16x8xbf16>
    %282 = vector.extract_strided_slice %235 {offsets = [0, 16], sizes = [16, 8], strides = [1, 1]} : vector<16x32xf32> to vector<16x8xf32>
    %283 = arith.truncf %282 : vector<16x8xf32> to vector<16x8xbf16>
    %cst_108 = arith.constant dense<0.000000e+00> : vector<16x16xf32>
    %284 = tpu.matmul %279, %281, %cst_108 {dimension_numbers = #tpu.dot_dimension_numbers<[1], [1], [0], [0], [0, 0, 1, 0], [], []>} : vector<16x8xbf16>, vector<16x8xbf16>, vector<16x16xf32> -> vector<16x16xf32>
    %cst_109 = arith.constant 0.353553385 : f32
    %285 = vector.broadcast %cst_109 : f32 to vector<16x16xf32>
    %286 = arith.mulf %284, %285 : vector<16x16xf32>
    %cst_110 = arith.constant dense<0xFF800000> : vector<16xf32>
    %287 = vector.multi_reduction <maximumf>, %286, %cst_110 [1] : vector<16x16xf32> to vector<16xf32>
    %288 = vector.shape_cast %287 : vector<16xf32> to vector<16x1xf32>
    %289 = vector.broadcast %288 : vector<16x1xf32> to vector<16x16xf32>
    %290 = arith.subf %286, %289 : vector<16x16xf32>
    %291 = math.exp %290 : vector<16x16xf32>
    %cst_111 = arith.constant dense<0.000000e+00> : vector<16xf32>
    %292 = vector.multi_reduction <add>, %291, %cst_111 [1] : vector<16x16xf32> to vector<16xf32>
    %293 = vector.shape_cast %292 : vector<16xf32> to vector<16x1xf32>
    %294 = tpu.reciprocal %293 {approx = true} : vector<16x1xf32> -> vector<16x1xf32>
    %295 = vector.broadcast %294 : vector<16x1xf32> to vector<16x16xf32>
    %296 = arith.mulf %291, %295 : vector<16x16xf32>
    %297 = arith.truncf %296 : vector<16x16xf32> to vector<16x16xbf16>
    %cst_112 = arith.constant dense<0.000000e+00> : vector<16x8xf32>
    %298 = tpu.matmul %297, %283, %cst_112 {dimension_numbers = #tpu.dot_dimension_numbers<[1], [0], [0], [1], [0, 0, 1, 1], [], []>} : vector<16x16xbf16>, vector<16x8xbf16>, vector<16x8xf32> -> vector<16x8xf32>
    %299 = vector.extract_strided_slice %233 {offsets = [0, 24], sizes = [16, 8], strides = [1, 1]} : vector<16x32xf32> to vector<16x8xf32>
    %300 = arith.truncf %299 : vector<16x8xf32> to vector<16x8xbf16>
    %301 = vector.extract_strided_slice %234 {offsets = [0, 24], sizes = [16, 8], strides = [1, 1]} : vector<16x32xf32> to vector<16x8xf32>
    %302 = arith.truncf %301 : vector<16x8xf32> to vector<16x8xbf16>
    %303 = vector.extract_strided_slice %235 {offsets = [0, 24], sizes = [16, 8], strides = [1, 1]} : vector<16x32xf32> to vector<16x8xf32>
    %304 = arith.truncf %303 : vector<16x8xf32> to vector<16x8xbf16>
    %cst_113 = arith.constant dense<0.000000e+00> : vector<16x16xf32>
    %305 = tpu.matmul %300, %302, %cst_113 {dimension_numbers = #tpu.dot_dimension_numbers<[1], [1], [0], [0], [0, 0, 1, 0], [], []>} : vector<16x8xbf16>, vector<16x8xbf16>, vector<16x16xf32> -> vector<16x16xf32>
    %cst_114 = arith.constant 0.353553385 : f32
    %306 = vector.broadcast %cst_114 : f32 to vector<16x16xf32>
    %307 = arith.mulf %305, %306 : vector<16x16xf32>
    %cst_115 = arith.constant dense<0xFF800000> : vector<16xf32>
    %308 = vector.multi_reduction <maximumf>, %307, %cst_115 [1] : vector<16x16xf32> to vector<16xf32>
    %309 = vector.shape_cast %308 : vector<16xf32> to vector<16x1xf32>
    %310 = vector.broadcast %309 : vector<16x1xf32> to vector<16x16xf32>
    %311 = arith.subf %307, %310 : vector<16x16xf32>
    %312 = math.exp %311 : vector<16x16xf32>
    %cst_116 = arith.constant dense<0.000000e+00> : vector<16xf32>
    %313 = vector.multi_reduction <add>, %312, %cst_116 [1] : vector<16x16xf32> to vector<16xf32>
    %314 = vector.shape_cast %313 : vector<16xf32> to vector<16x1xf32>
    %315 = tpu.reciprocal %314 {approx = true} : vector<16x1xf32> -> vector<16x1xf32>
    %316 = vector.broadcast %315 : vector<16x1xf32> to vector<16x16xf32>
    %317 = arith.mulf %312, %316 : vector<16x16xf32>
    %318 = arith.truncf %317 : vector<16x16xf32> to vector<16x16xbf16>
    %cst_117 = arith.constant dense<0.000000e+00> : vector<16x8xf32>
    %319 = tpu.matmul %318, %304, %cst_117 {dimension_numbers = #tpu.dot_dimension_numbers<[1], [0], [0], [1], [0, 0, 1, 1], [], []>} : vector<16x16xbf16>, vector<16x8xbf16>, vector<16x8xf32> -> vector<16x8xf32>
    %320 = tpu.concatenate %256, %277, %298, %319 in 1 : vector<16x8xf32>, vector<16x8xf32>, vector<16x8xf32>, vector<16x8xf32> -> vector<16x32xf32>
    %321 = arith.truncf %320 : vector<16x32xf32> to vector<16x32xbf16>
    %c1_118 = arith.constant 1 : index
    %c0_119 = arith.constant 0 : index
    %c0_120 = arith.constant 0 : index
    %322 = vector.load %arg8[%c1_118, %c0_119, %c0_120] : memref<2x32x32xbf16, #tpu.memory_space<vmem>>, vector<1x32x32xbf16>
    %323 = vector.shape_cast %322 : vector<1x32x32xbf16> to vector<32x32xbf16>
    %cst_121 = arith.constant dense<0.000000e+00> : vector<16x32xf32>
    %324 = tpu.matmul %321, %323, %cst_121 {dimension_numbers = #tpu.dot_dimension_numbers<[1], [0], [0], [1], [0, 0, 1, 1], [], []>} : vector<16x32xbf16>, vector<32x32xbf16>, vector<16x32xf32> -> vector<16x32xf32>
    %325 = arith.addf %198, %324 : vector<16x32xf32>
    %c1_122 = arith.constant 1 : index
    %c0_123 = arith.constant 0 : index
    %c0_124 = arith.constant 0 : index
    %326 = vector.load %arg9[%c1_122, %c0_123, %c0_124] : memref<2x1x32xf32, #tpu.memory_space<vmem>>, vector<1x1x32xf32>
    %327 = vector.shape_cast %326 : vector<1x1x32xf32> to vector<1x32xf32>
    %328 = vector.broadcast %327 : vector<1x32xf32> to vector<16x32xf32>
    %329 = arith.addf %325, %328 : vector<16x32xf32>
    %c1_125 = arith.constant 1 : index
    %c0_126 = arith.constant 0 : index
    %c0_127 = arith.constant 0 : index
    %330 = vector.load %arg10[%c1_125, %c0_126, %c0_127] : memref<2x1x32xf32, #tpu.memory_space<vmem>>, vector<1x1x32xf32>
    %331 = vector.shape_cast %330 : vector<1x1x32xf32> to vector<1x32xf32>
    %c1_128 = arith.constant 1 : index
    %c0_129 = arith.constant 0 : index
    %c0_130 = arith.constant 0 : index
    %332 = vector.load %arg11[%c1_128, %c0_129, %c0_130] : memref<2x1x32xf32, #tpu.memory_space<vmem>>, vector<1x1x32xf32>
    %333 = vector.shape_cast %332 : vector<1x1x32xf32> to vector<1x32xf32>
    %cst_131 = arith.constant dense<0.000000e+00> : vector<16xf32>
    %334 = vector.multi_reduction <add>, %329, %cst_131 [1] : vector<16x32xf32> to vector<16xf32>
    %335 = vector.shape_cast %334 : vector<16xf32> to vector<16x1xf32>
    %cst_132 = arith.constant 3.200000e+01 : f32
    %336 = vector.broadcast %cst_132 : f32 to vector<16x1xf32>
    %337 = arith.divf %335, %336 : vector<16x1xf32>
    %338 = vector.broadcast %337 : vector<16x1xf32> to vector<16x32xf32>
    %339 = arith.subf %329, %338 : vector<16x32xf32>
    %340 = arith.mulf %339, %339 : vector<16x32xf32>
    %cst_133 = arith.constant dense<0.000000e+00> : vector<16xf32>
    %341 = vector.multi_reduction <add>, %340, %cst_133 [1] : vector<16x32xf32> to vector<16xf32>
    %342 = vector.shape_cast %341 : vector<16xf32> to vector<16x1xf32>
    %cst_134 = arith.constant 3.200000e+01 : f32
    %343 = vector.broadcast %cst_134 : f32 to vector<16x1xf32>
    %344 = arith.divf %342, %343 : vector<16x1xf32>
    %345 = vector.broadcast %337 : vector<16x1xf32> to vector<16x32xf32>
    %346 = arith.subf %329, %345 : vector<16x32xf32>
    %cst_135 = arith.constant 9.99999974E-6 : f32
    %347 = vector.broadcast %cst_135 : f32 to vector<16x1xf32>
    %348 = arith.addf %344, %347 : vector<16x1xf32>
    %349 = math.rsqrt %348 : vector<16x1xf32>
    %350 = vector.broadcast %349 : vector<16x1xf32> to vector<16x32xf32>
    %351 = arith.mulf %346, %350 : vector<16x32xf32>
    %352 = vector.broadcast %331 : vector<1x32xf32> to vector<16x32xf32>
    %353 = arith.mulf %351, %352 : vector<16x32xf32>
    %354 = vector.broadcast %333 : vector<1x32xf32> to vector<16x32xf32>
    %355 = arith.addf %353, %354 : vector<16x32xf32>
    %356 = arith.truncf %355 : vector<16x32xf32> to vector<16x32xbf16>
    %c1_136 = arith.constant 1 : index
    %c0_137 = arith.constant 0 : index
    %c0_138 = arith.constant 0 : index
    %357 = vector.load %arg12[%c1_136, %c0_137, %c0_138] : memref<2x32x128xbf16, #tpu.memory_space<vmem>>, vector<1x32x128xbf16>
    %358 = vector.shape_cast %357 : vector<1x32x128xbf16> to vector<32x128xbf16>
    %cst_139 = arith.constant dense<0.000000e+00> : vector<16x128xf32>
    %359 = tpu.matmul %356, %358, %cst_139 {dimension_numbers = #tpu.dot_dimension_numbers<[1], [0], [0], [1], [0, 0, 1, 1], [], []>} : vector<16x32xbf16>, vector<32x128xbf16>, vector<16x128xf32> -> vector<16x128xf32>
    %c1_140 = arith.constant 1 : index
    %c0_141 = arith.constant 0 : index
    %c0_142 = arith.constant 0 : index
    %360 = vector.load %arg13[%c1_140, %c0_141, %c0_142] : memref<2x1x128xf32, #tpu.memory_space<vmem>>, vector<1x1x128xf32>
    %361 = vector.shape_cast %360 : vector<1x1x128xf32> to vector<1x128xf32>
    %362 = vector.broadcast %361 : vector<1x128xf32> to vector<16x128xf32>
    %363 = arith.addf %359, %362 : vector<16x128xf32>
    %364 = arith.mulf %363, %363 : vector<16x128xf32>
    %365 = arith.mulf %363, %364 : vector<16x128xf32>
    %cst_143 = arith.constant 4.471500e-02 : f32
    %366 = vector.broadcast %cst_143 : f32 to vector<16x128xf32>
    %367 = arith.mulf %366, %365 : vector<16x128xf32>
    %368 = arith.addf %363, %367 : vector<16x128xf32>
    %cst_144 = arith.constant 0.797884583 : f32
    %369 = vector.broadcast %cst_144 : f32 to vector<16x128xf32>
    %370 = arith.mulf %369, %368 : vector<16x128xf32>
    %371 = math.tanh %370 : vector<16x128xf32>
    %cst_145 = arith.constant 1.000000e+00 : f32
    %372 = vector.broadcast %cst_145 : f32 to vector<16x128xf32>
    %373 = arith.addf %372, %371 : vector<16x128xf32>
    %cst_146 = arith.constant 5.000000e-01 : f32
    %374 = vector.broadcast %cst_146 : f32 to vector<16x128xf32>
    %375 = arith.mulf %374, %373 : vector<16x128xf32>
    %376 = arith.mulf %363, %375 : vector<16x128xf32>
    %377 = arith.truncf %376 : vector<16x128xf32> to vector<16x128xbf16>
    %c1_147 = arith.constant 1 : index
    %c0_148 = arith.constant 0 : index
    %c0_149 = arith.constant 0 : index
    %378 = vector.load %arg14[%c1_147, %c0_148, %c0_149] : memref<2x128x32xbf16, #tpu.memory_space<vmem>>, vector<1x128x32xbf16>
    %379 = vector.shape_cast %378 : vector<1x128x32xbf16> to vector<128x32xbf16>
    %cst_150 = arith.constant dense<0.000000e+00> : vector<16x32xf32>
    %380 = tpu.matmul %377, %379, %cst_150 {dimension_numbers = #tpu.dot_dimension_numbers<[1], [0], [0], [1], [0, 0, 1, 1], [], []>} : vector<16x128xbf16>, vector<128x32xbf16>, vector<16x32xf32> -> vector<16x32xf32>
    %381 = arith.addf %329, %380 : vector<16x32xf32>
    %c1_151 = arith.constant 1 : index
    %c0_152 = arith.constant 0 : index
    %c0_153 = arith.constant 0 : index
    %382 = vector.load %arg15[%c1_151, %c0_152, %c0_153] : memref<2x1x32xf32, #tpu.memory_space<vmem>>, vector<1x1x32xf32>
    %383 = vector.shape_cast %382 : vector<1x1x32xf32> to vector<1x32xf32>
    %384 = vector.broadcast %383 : vector<1x32xf32> to vector<16x32xf32>
    %385 = arith.addf %381, %384 : vector<16x32xf32>
    %c0_154 = arith.constant 0 : index
    %c0_155 = arith.constant 0 : index
    %386 = vector.load %arg16[%c0_154, %c0_155] : memref<1x32xf32, #tpu.memory_space<vmem>>, vector<1x32xf32>
    %c0_156 = arith.constant 0 : index
    %c0_157 = arith.constant 0 : index
    %387 = vector.load %arg17[%c0_156, %c0_157] : memref<1x32xf32, #tpu.memory_space<vmem>>, vector<1x32xf32>
    %cst_158 = arith.constant dense<0.000000e+00> : vector<16xf32>
    %388 = vector.multi_reduction <add>, %385, %cst_158 [1] : vector<16x32xf32> to vector<16xf32>
    %389 = vector.shape_cast %388 : vector<16xf32> to vector<16x1xf32>
    %cst_159 = arith.constant 3.200000e+01 : f32
    %390 = vector.broadcast %cst_159 : f32 to vector<16x1xf32>
    %391 = arith.divf %389, %390 : vector<16x1xf32>
    %392 = vector.broadcast %391 : vector<16x1xf32> to vector<16x32xf32>
    %393 = arith.subf %385, %392 : vector<16x32xf32>
    %394 = arith.mulf %393, %393 : vector<16x32xf32>
    %cst_160 = arith.constant dense<0.000000e+00> : vector<16xf32>
    %395 = vector.multi_reduction <add>, %394, %cst_160 [1] : vector<16x32xf32> to vector<16xf32>
    %396 = vector.shape_cast %395 : vector<16xf32> to vector<16x1xf32>
    %cst_161 = arith.constant 3.200000e+01 : f32
    %397 = vector.broadcast %cst_161 : f32 to vector<16x1xf32>
    %398 = arith.divf %396, %397 : vector<16x1xf32>
    %399 = vector.broadcast %391 : vector<16x1xf32> to vector<16x32xf32>
    %400 = arith.subf %385, %399 : vector<16x32xf32>
    %cst_162 = arith.constant 9.99999974E-6 : f32
    %401 = vector.broadcast %cst_162 : f32 to vector<16x1xf32>
    %402 = arith.addf %398, %401 : vector<16x1xf32>
    %403 = math.rsqrt %402 : vector<16x1xf32>
    %404 = vector.broadcast %403 : vector<16x1xf32> to vector<16x32xf32>
    %405 = arith.mulf %400, %404 : vector<16x32xf32>
    %406 = vector.broadcast %386 : vector<1x32xf32> to vector<16x32xf32>
    %407 = arith.mulf %405, %406 : vector<16x32xf32>
    %408 = vector.broadcast %387 : vector<1x32xf32> to vector<16x32xf32>
    %409 = arith.addf %407, %408 : vector<16x32xf32>
    %410 = arith.truncf %409 : vector<16x32xf32> to vector<16x32xbf16>
    %c0_163 = arith.constant 0 : index
    %c0_164 = arith.constant 0 : index
    %411 = vector.load %arg18[%c0_163, %c0_164] : memref<32x128xbf16, #tpu.memory_space<vmem>>, vector<32x128xbf16>
    %cst_165 = arith.constant dense<0.000000e+00> : vector<16x128xf32>
    %412 = tpu.matmul %410, %411, %cst_165 {dimension_numbers = #tpu.dot_dimension_numbers<[1], [0], [0], [1], [0, 0, 1, 1], [], []>} : vector<16x32xbf16>, vector<32x128xbf16>, vector<16x128xf32> -> vector<16x128xf32>
    %c0_166 = arith.constant 0 : index
    %c0_167 = arith.constant 0 : index
    %413 = vector.load %arg19[%c0_166, %c0_167] : memref<1x128xf32, #tpu.memory_space<vmem>>, vector<1x128xf32>
    %414 = vector.broadcast %413 : vector<1x128xf32> to vector<16x128xf32>
    %415 = arith.addf %412, %414 : vector<16x128xf32>
    %c0_168 = arith.constant 0 : index
    %c0_169 = arith.constant 0 : index
    %416 = vector.load %arg20[%c0_168, %c0_169] : memref<16x128xf32, #tpu.memory_space<vmem>>, vector<16x128xf32>
    tpu.vector_store %arg20[%c0_168, %c0_169], %415 {strides = array<i32>} : memref<16x128xf32, #tpu.memory_space<vmem>>, vector<16x128xf32>,
    return
  }
  func.func @transform_0(%arg0: i32) -> (i32, i32) {
    %c0_i32 = arith.constant 0 : i32
    %c0_i32_0 = arith.constant 0 : i32
    return %arg0, %c0_i32 : i32, i32
  }
  func.func @transform_1(%arg0: i32) -> (i32, i32) {
    %c0_i32 = arith.constant 0 : i32
    %c0_i32_0 = arith.constant 0 : i32
    %c0_i32_1 = arith.constant 0 : i32
    return %c0_i32, %c0_i32_0 : i32, i32
  }
  func.func @transform_2(%arg0: i32) -> (i32, i32) {
    %c0_i32 = arith.constant 0 : i32
    %c0_i32_0 = arith.constant 0 : i32
    %c0_i32_1 = arith.constant 0 : i32
    return %c0_i32, %c0_i32_0 : i32, i32
  }
  func.func @transform_3(%arg0: i32) -> (i32, i32, i32) {
    %c0_i32 = arith.constant 0 : i32
    %c0_i32_0 = arith.constant 0 : i32
    %c0_i32_1 = arith.constant 0 : i32
    %c0_i32_2 = arith.constant 0 : i32
    return %c0_i32, %c0_i32_0, %c0_i32_1 : i32, i32, i32
  }
  func.func @transform_4(%arg0: i32) -> (i32, i32, i32) {
    %c0_i32 = arith.constant 0 : i32
    %c0_i32_0 = arith.constant 0 : i32
    %c0_i32_1 = arith.constant 0 : i32
    %c0_i32_2 = arith.constant 0 : i32
    return %c0_i32, %c0_i32_0, %c0_i32_1 : i32, i32, i32
  }
  func.func @transform_5(%arg0: i32) -> (i32, i32, i32) {
    %c0_i32 = arith.constant 0 : i32
    %c0_i32_0 = arith.constant 0 : i32
    %c0_i32_1 = arith.constant 0 : i32
    %c0_i32_2 = arith.constant 0 : i32
    return %c0_i32, %c0_i32_0, %c0_i32_1 : i32, i32, i32
  }
  func.func @transform_6(%arg0: i32) -> (i32, i32, i32) {
    %c0_i32 = arith.constant 0 : i32
    %c0_i32_0 = arith.constant 0 : i32
    %c0_i32_1 = arith.constant 0 : i32
    %c0_i32_2 = arith.constant 0 : i32
    return %c0_i32, %c0_i32_0, %c0_i32_1 : i32, i32, i32
  }
  func.func @transform_7(%arg0: i32) -> (i32, i32, i32) {
    %c0_i32 = arith.constant 0 : i32
    %c0_i32_0 = arith.constant 0 : i32
    %c0_i32_1 = arith.constant 0 : i32
    %c0_i32_2 = arith.constant 0 : i32
    return %c0_i32, %c0_i32_0, %c0_i32_1 : i32, i32, i32
  }
  func.func @transform_8(%arg0: i32) -> (i32, i32, i32) {
    %c0_i32 = arith.constant 0 : i32
    %c0_i32_0 = arith.constant 0 : i32
    %c0_i32_1 = arith.constant 0 : i32
    %c0_i32_2 = arith.constant 0 : i32
    return %c0_i32, %c0_i32_0, %c0_i32_1 : i32, i32, i32
  }
  func.func @transform_9(%arg0: i32) -> (i32, i32, i32) {
    %c0_i32 = arith.constant 0 : i32
    %c0_i32_0 = arith.constant 0 : i32
    %c0_i32_1 = arith.constant 0 : i32
    %c0_i32_2 = arith.constant 0 : i32
    return %c0_i32, %c0_i32_0, %c0_i32_1 : i32, i32, i32
  }
  func.func @transform_10(%arg0: i32) -> (i32, i32, i32) {
    %c0_i32 = arith.constant 0 : i32
    %c0_i32_0 = arith.constant 0 : i32
    %c0_i32_1 = arith.constant 0 : i32
    %c0_i32_2 = arith.constant 0 : i32
    return %c0_i32, %c0_i32_0, %c0_i32_1 : i32, i32, i32
  }
  func.func @transform_11(%arg0: i32) -> (i32, i32, i32) {
    %c0_i32 = arith.constant 0 : i32
    %c0_i32_0 = arith.constant 0 : i32
    %c0_i32_1 = arith.constant 0 : i32
    %c0_i32_2 = arith.constant 0 : i32
    return %c0_i32, %c0_i32_0, %c0_i32_1 : i32, i32, i32
  }
  func.func @transform_12(%arg0: i32) -> (i32, i32, i32) {
    %c0_i32 = arith.constant 0 : i32
    %c0_i32_0 = arith.constant 0 : i32
    %c0_i32_1 = arith.constant 0 : i32
    %c0_i32_2 = arith.constant 0 : i32
    return %c0_i32, %c0_i32_0, %c0_i32_1 : i32, i32, i32
  }
  func.func @transform_13(%arg0: i32) -> (i32, i32, i32) {
    %c0_i32 = arith.constant 0 : i32
    %c0_i32_0 = arith.constant 0 : i32
    %c0_i32_1 = arith.constant 0 : i32
    %c0_i32_2 = arith.constant 0 : i32
    return %c0_i32, %c0_i32_0, %c0_i32_1 : i32, i32, i32
  }
  func.func @transform_14(%arg0: i32) -> (i32, i32, i32) {
    %c0_i32 = arith.constant 0 : i32
    %c0_i32_0 = arith.constant 0 : i32
    %c0_i32_1 = arith.constant 0 : i32
    %c0_i32_2 = arith.constant 0 : i32
    return %c0_i32, %c0_i32_0, %c0_i32_1 : i32, i32, i32
  }
  func.func @transform_15(%arg0: i32) -> (i32, i32) {
    %c0_i32 = arith.constant 0 : i32
    %c0_i32_0 = arith.constant 0 : i32
    %c0_i32_1 = arith.constant 0 : i32
    return %c0_i32, %c0_i32_0 : i32, i32
  }
  func.func @transform_16(%arg0: i32) -> (i32, i32) {
    %c0_i32 = arith.constant 0 : i32
    %c0_i32_0 = arith.constant 0 : i32
    %c0_i32_1 = arith.constant 0 : i32
    return %c0_i32, %c0_i32_0 : i32, i32
  }
  func.func @transform_17(%arg0: i32) -> (i32, i32) {
    %c0_i32 = arith.constant 0 : i32
    %c0_i32_0 = arith.constant 0 : i32
    %c0_i32_1 = arith.constant 0 : i32
    return %c0_i32, %c0_i32_0 : i32, i32
  }
  func.func @transform_18(%arg0: i32) -> (i32, i32) {
    %c0_i32 = arith.constant 0 : i32
    %c0_i32_0 = arith.constant 0 : i32
    %c0_i32_1 = arith.constant 0 : i32
    return %c0_i32, %c0_i32_0 : i32, i32
  }
  func.func @transform_19(%arg0: i32) -> (i32, i32) {
    %c0_i32 = arith.constant 0 : i32
    %c0_i32_0 = arith.constant 0 : i32
    return %arg0, %c0_i32 : i32, i32
  }
}

</mosaic_0001>

<llo_original>
// kernel: _lambda_.2
$region0: #{_lambda_.2}
  #allocation0 [shape = 'u32[]', space=smem, size = 0x4, offset = 0x4, fixed_abs, tag = 'smem constant byte address 0x4 - core index']
  #allocation1 [shape = 'u32[144,128]{1,0:T(1,128)}', space=vmem, size = 0x12000, scoped, tag = 'internal scratch']
  %s0 = inlined_call_operand.vmem [shape: f32[32,64], index: 0, kind: input, shape index: {}]
  %s1 = inlined_call_operand.vmem [shape: f32[64,16], index: 1, kind: input, shape index: {}]
  %s2 = inlined_call_operand.vmem [shape: f32[1,16], index: 2, kind: input, shape index: {}]
  %s3 = inlined_call_operand.vmem [shape: f32[16,64], index: 3, kind: input, shape index: {}]
  %s4 = inlined_call_operand.vmem [shape: f32[1,64], index: 4, kind: input, shape index: {}]
  %s5 = inlined_call_operand.vmem [shape: s32[32,128], index: 5, kind: output, shape index: {}]
  %s6 = sld [smem:[#allocation0]]
  $region53: #{_lambda_.2} parent=0
    _
  %s8 = ssub.s32 1, %s6
  %s9 = scalar_select 0, %s8, %s6
  loop: start=0, step=1, limit=4
  $region2: #{_lambda_.2} parent=0 // loop_pre_header
    _
  $region3: #{_lambda_.2} parent=0 // loop_header
    %s11 = sphi 0, %s15
    %p12 = scmp.ge.s32.totalorder %s11, 4
    %s21 = sphi 0, %s23
    %s24 = sphi 0, %s21
    %s25 = sphi 0, %s24
    %s41 = sphi 0, %s25
    %s45 = sphi 0, %s45
    %s47 = sphi 0, %s45
    %s48 = sphi 0, %s47
    %s62 = sphi 0, %s48
    %s66 = sphi 0, %s66
    %s68 = sphi 0, %s66
    %s69 = sphi 0, %s68
    %s83 = sphi 0, %s69
    %s87 = sphi 0, %s87
    %s89 = sphi 0, %s87
    %s90 = sphi 0, %s89
    %s104 = sphi 0, %s90
    %s108 = sphi 0, %s108
    %s110 = sphi 0, %s108
    %s111 = sphi 0, %s110
    %s125 = sphi 0, %s111
    %s131 = sphi 0, %s133
    %s134 = sphi 0, %s131
    %s135 = sphi 0, %s134
    %s151 = sphi 0, %s135
  $region4: #{_lambda_.2} parent=0 // loop_header_branch
    %14 = sbr.rel (%p12) target = $region8
  $region5: #{_lambda_.2} parent=0 // loop_body
    %s16 = ssub.s32 %s11, 1
    %s17 = ssub.s32 %s11, 2
    %s18 = sadd.s32 %s11, 1
    %s19 = ssub.s32 %s11, %s18
    %p20 = scmp.eq.s32.totalorder %s19, 0
    %s22 = sadd.s32 %s21, 1
    %s23 = scalar_select %p20, %s21, %s22
    %p26 = pneg %p20
    %p27 = scmp.eq.s32.totalorder %s11, 1
    %p28 = por %p26, %p27
    %p29 = scmp.ne.s32.totalorder %s21, %s24
    %p30 = scmp.eq.s32.totalorder %s11, 0
    %p31 = por %p29, %p30
    %p32 = scmp.ne.s32.totalorder %s21, %s24
    %p33 = scmp.eq.s32.totalorder %s16, 1
    %p34 = por %p32, %p33
    %p35 = scmp.ne.s32.totalorder %s24, %s25
    %p36 = scmp.eq.s32.totalorder %s16, 0
    %p37 = por %p35, %p36
    %p38 = scmp.ne.s32.totalorder %s24, %s25
    %p39 = scmp.eq.s32.totalorder %s17, 1
    %p40 = por %p38, %p39
    %p42 = scmp.ne.s32.totalorder %s25, %s41
    %p43 = scmp.eq.s32.totalorder %s17, 0
    %p44 = por %p42, %p43
    %s46 = sadd.s32 %s45, 1
    %p49 = scmp.eq.s32.totalorder %s11, 1
    %p50 = scmp.ne.s32.totalorder %s45, %s47
    %p51 = scmp.eq.s32.totalorder %s11, 0
    %p52 = por %p50, %p51
    %p53 = scmp.ne.s32.totalorder %s45, %s47
    %p54 = scmp.eq.s32.totalorder %s16, 1
    %p55 = por %p53, %p54
    %p56 = scmp.ne.s32.totalorder %s47, %s48
    %p57 = scmp.eq.s32.totalorder %s16, 0
    %p58 = por %p56, %p57
    %p59 = scmp.ne.s32.totalorder %s47, %s48
    %p60 = scmp.eq.s32.totalorder %s17, 1
    %p61 = por %p59, %p60
    %p63 = scmp.ne.s32.totalorder %s48, %s62
    %p64 = scmp.eq.s32.totalorder %s17, 0
    %p65 = por %p63, %p64
    %s67 = sadd.s32 %s66, 1
    %p70 = scmp.eq.s32.totalorder %s11, 1
    %p71 = scmp.ne.s32.totalorder %s66, %s68
    %p72 = scmp.eq.s32.totalorder %s11, 0
    %p73 = por %p71, %p72
    %p74 = scmp.ne.s32.totalorder %s66, %s68
    %p75 = scmp.eq.s32.totalorder %s16, 1
    %p76 = por %p74, %p75
    %p77 = scmp.ne.s32.totalorder %s68, %s69
    %p78 = scmp.eq.s32.totalorder %s16, 0
    %p79 = por %p77, %p78
    %p80 = scmp.ne.s32.totalorder %s68, %s69
    %p81 = scmp.eq.s32.totalorder %s17, 1
    %p82 = por %p80, %p81
    %p84 = scmp.ne.s32.totalorder %s69, %s83
    %p85 = scmp.eq.s32.totalorder %s17, 0
    %p86 = por %p84, %p85
    %s88 = sadd.s32 %s87, 1
    %p91 = scmp.eq.s32.totalorder %s11, 1
    %p92 = scmp.ne.s32.totalorder %s87, %s89
    %p93 = scmp.eq.s32.totalorder %s11, 0
    %p94 = por %p92, %p93
    %p95 = scmp.ne.s32.totalorder %s87, %s89
    %p96 = scmp.eq.s32.totalorder %s16, 1
    %p97 = por %p95, %p96
    %p98 = scmp.ne.s32.totalorder %s89, %s90
    %p99 = scmp.eq.s32.totalorder %s16, 0
    %p100 = por %p98, %p99
    %p101 = scmp.ne.s32.totalorder %s89, %s90
    %p102 = scmp.eq.s32.totalorder %s17, 1
    %p103 = por %p101, %p102
    %p105 = scmp.ne.s32.totalorder %s90, %s104
    %p106 = scmp.eq.s32.totalorder %s17, 0
    %p107 = por %p105, %p106
    %s109 = sadd.s32 %s108, 1
    %p112 = scmp.eq.s32.totalorder %s11, 1
    %p113 = scmp.ne.s32.totalorder %s108, %s110
    %p114 = scmp.eq.s32.totalorder %s11, 0
    %p115 = por %p113, %p114
    %p116 = scmp.ne.s32.totalorder %s108, %s110
    %p117 = scmp.eq.s32.totalorder %s16, 1
    %p118 = por %p116, %p117
    %p119 = scmp.ne.s32.totalorder %s110, %s111
    %p120 = scmp.eq.s32.totalorder %s16, 0
    %p121 = por %p119, %p120
    %p122 = scmp.ne.s32.totalorder %s110, %s111
    %p123 = scmp.eq.s32.totalorder %s17, 1
    %p124 = por %p122, %p123
    %p126 = scmp.ne.s32.totalorder %s111, %s125
    %p127 = scmp.eq.s32.totalorder %s17, 0
    %p128 = por %p126, %p127
    %s129 = ssub.s32 %s11, %s18
    %p130 = scmp.eq.s32.totalorder %s129, 0
    %s132 = sadd.s32 %s131, 1
    %s133 = scalar_select %p130, %s131, %s132
    %p136 = pneg %p130
    %p137 = scmp.eq.s32.totalorder %s11, 1
    %p138 = por %p136, %p137
    %p139 = scmp.ne.s32.totalorder %s131, %s134
    %p140 = scmp.eq.s32.totalorder %s11, 0
    %p141 = por %p139, %p140
    %p142 = scmp.ne.s32.totalorder %s131, %s134
    %p143 = scmp.eq.s32.totalorder %s16, 1
    %p144 = por %p142, %p143
    %p145 = scmp.ne.s32.totalorder %s134, %s135
    %p146 = scmp.eq.s32.totalorder %s16, 0
    %p147 = por %p145, %p146
    %p148 = scmp.ne.s32.totalorder %s134, %s135
    %p149 = scmp.eq.s32.totalorder %s17, 1
    %p150 = por %p148, %p149
    %p152 = scmp.ne.s32.totalorder %s135, %s151
    %p153 = scmp.eq.s32.totalorder %s17, 0
    %p154 = por %p152, %p153
    %p155 = scmp.le.s32.totalorder 1, %s11
    %p156 = scmp.lt.s32.totalorder %s11, 3
    %p157 = pnand %p155, %p156
    %p158 = pneg %p157
    // Predicated region
    $region9: #{_lambda_.2} parent=5 // pred_check
      _
    $region10: #{_lambda_.2} parent=5 // pred_check_branch
      %160 = sbr.rel (%p157) target = $region12
    $region11: #{_lambda_.2} parent=5 // pred_region
      %s161 = ssub.s32 %s11, 1
      // Predicated region
      $region13: #{_lambda_.2} parent=11 // pred_check
        %p162 = pneg %p58
      $region14: #{_lambda_.2} parent=11 // pred_check_branch
        %164 = sbr.rel (%p162) target = $region16
      $region15: #{_lambda_.2} parent=11 // pred_region
        _
      $region16: #{_lambda_.2} parent=11 // pred_fallthru
        _
      // Predicated region
      $region17: #{_lambda_.2} parent=11 // pred_check
        %p165 = pneg %p79
      $region18: #{_lambda_.2} parent=11 // pred_check_branch
        %167 = sbr.rel (%p165) target = $region20
      $region19: #{_lambda_.2} parent=11 // pred_region
        _
      $region20: #{_lambda_.2} parent=11 // pred_fallthru
        _
      // Predicated region
      $region21: #{_lambda_.2} parent=11 // pred_check
        %p168 = pneg %p100
      $region22: #{_lambda_.2} parent=11 // pred_check_branch
        %170 = sbr.rel (%p168) target = $region24
      $region23: #{_lambda_.2} parent=11 // pred_region
        _
      $region24: #{_lambda_.2} parent=11 // pred_fallthru
        _
      // Predicated region
      $region25: #{_lambda_.2} parent=11 // pred_check
        %p171 = pneg %p121
      $region26: #{_lambda_.2} parent=11 // pred_check_branch
        %173 = sbr.rel (%p171) target = $region28
      $region27: #{_lambda_.2} parent=11 // pred_region
        _
      $region28: #{_lambda_.2} parent=11 // pred_fallthru
        _
    $region12: #{_lambda_.2} parent=5 // pred_fallthru
      _
    %p174 = scmp.lt.s32.totalorder %s11, 2
    // Predicated region
    $region29: #{_lambda_.2} parent=5 // pred_check
      %p175 = pneg %p174
    $region30: #{_lambda_.2} parent=5 // pred_check_branch
      %177 = sbr.rel (%p175) target = $region32
    $region31: #{_lambda_.2} parent=5 // pred_region
      // Predicated region
      $region33: #{_lambda_.2} parent=31 // pred_check
        %p178 = pneg %p31
      $region34: #{_lambda_.2} parent=31 // pred_check_branch
        %180 = sbr.rel (%p178) target = $region36
      $region35: #{_lambda_.2} parent=31 // pred_region
        %s181 = smul.u32 2, %s11
        %p182 = scmp.lt.s32.totalorder %s181, 3
        %s183 = scalar_select %p182, %s181, 3
        %s184 = smul.addr %s183, 8
        %s185 = scalar_lea.vmem %s0, %s184
        %s186 = smul.u32 2, %s11
      $region36: #{_lambda_.2} parent=31 // pred_fallthru
        _
    $region32: #{_lambda_.2} parent=5 // pred_fallthru
      _
    %p187 = scmp.le.s32.totalorder 1, %s11
    %p188 = scmp.lt.s32.totalorder %s11, 3
    %p189 = pnand %p187, %p188
    %p190 = pneg %p189
    // Predicated region
    $region37: #{_lambda_.2} parent=5 // pred_check
      _
    $region38: #{_lambda_.2} parent=5 // pred_check_branch
      %192 = sbr.rel (%p189) target = $region40
    $region39: #{_lambda_.2} parent=5 // pred_region
      %s193 = ssub.s32 %s11, 1
      %s194 = smul.u32 2, %s16
      %p195 = scmp.lt.s32.totalorder %s194, 3
      %s196 = scalar_select %p195, %s194, 3
      %s197 = smul.addr %s196, 8
      %s198 = scalar_lea.vmem %s0, %s197
      %p199 = pneg %p37
      %p200 = pneg %p34
      %p201 = pneg %p58
      %p202 = pneg %p55
      %p203 = pneg %p79
      %p204 = pneg %p76
      %p205 = pneg %p100
      %p206 = pneg %p97
      %p207 = pneg %p121
      %p208 = pneg %p118
      %p209 = pneg %p147
      %p210 = pneg %p144
      %s211 = smul.u32 2, %s16
      %p212 = scmp.lt.s32.totalorder %s211, 3
      %s213 = scalar_select %p212, %s211, 3
      %s214 = smul.addr %s213, 8
      %s215 = scalar_lea.vmem %s5, %s214
      %s216 = smul.u32 2, %s16
      %p217 = scmp.lt.s32.totalorder %s216, 3
      %s218 = scalar_select %p217, %s216, 3
      %s219 = smul.addr %s218, 8
      %s220 = scalar_lea.vmem %s0, %s219
      %s221 = smul.u32 2, %s16
      %s222 = smul.u32 2, %s16
      %p223 = scmp.lt.s32.totalorder %s222, 3
      %s224 = scalar_select %p223, %s222, 3
      %s225 = smul.addr %s224, 8
      %s226 = scalar_lea.vmem %s5, %s225
      %s227 = smul.u32 2, %s16
      %v228 = vld [vmem:[%s220] sm:$0xff]
      %v229 = vld [vmem:[%s220 + $0x8] sm:$0xff]
      %v230 = vld [vmem:[%s1] sm:$0xff]
      %v231 = vld [vmem:[%s1 + $0x8] sm:$0xff]
      %v232 = vld [vmem:[%s1 + $0x10] sm:$0xff]
      %v233 = vld [vmem:[%s1 + $0x18] sm:$0xff]
      %v234 = vld [vmem:[%s1 + $0x20] sm:$0xff]
      %v235 = vld [vmem:[%s1 + $0x28] sm:$0xff]
      %v236 = vld [vmem:[%s1 + $0x30] sm:$0xff]
      %v237 = vld [vmem:[%s1 + $0x38] sm:$0xff]
      %v238 = vld [vmem:[%s2] sm:$0x1]
      %v240 = vlaneseq
      %v241 = vshrl.u32 %v240, 7
      %v242 = vsub.s32 0, %v241
      %v243 = vrot.slane %v238, %v242
      %vm245 = vcmask 523264
      %v247 = vsel %vm245, %v228, 0
      %v250 = vsel %vm245, %v229, 0
      %252 = vmatprep.subr.mxu0 0.0
      %253 = vmatpush1.msra.mxu0 0.0
      %254 = vmatprep.subr.mxu0 0.0
      %255 = vmatpush1.msra.mxu0 0.0
      %256 = vmatprep.subr.mxu0 0.0
      %257 = vmatpush1.msra.mxu0 0.0
      %258 = vmatprep.subr.mxu0 0.0
      %259 = vmatpush1.msra.mxu0 0.0
      %260 = vmatprep.subr.mxu0 0.0
      %261 = vmatpush1.msra.mxu0 0.0
      %262 = vmatprep.subr.mxu0 0.0
      %263 = vmatpush1.msra.mxu0 0.0
      %264 = vmatprep.subr.mxu0 0.0
      %265 = vmatpush1.msra.mxu0 0.0
      %266 = vmatprep.subr.mxu0 0.0
      %267 = vmatpush1.msra.mxu0 0.0
      %268 = vmatprep.subr.mxu0 0.0
      %269 = vmatpush1.msra.mxu0 %v237
      %270 = vmatprep.subr.mxu0 0.0
      %271 = vmatpush1.msra.mxu0 %v236
      %272 = vmatprep.subr.mxu0 0.0
      %273 = vmatpush1.msra.mxu0 %v235
      %274 = vmatprep.subr.mxu0 0.0
      %275 = vmatpush1.msra.mxu0 %v234
      %276 = vmatprep.subr.mxu0 0.0
      %277 = vmatpush1.msra.mxu0 %v233
      %278 = vmatprep.subr.mxu0 0.0
      %279 = vmatpush1.msra.mxu0 %v232
      %280 = vmatprep.subr.mxu0 0.0
      %281 = vmatpush1.msra.mxu0 %v231
      %282 = vmatprep.subr.mxu0 0.0
      %283 = vmatpush1.msra.mxu0 %v230
      %284 = vmatprep.subr.mxu0 0.0
      %285 = vmatpush2.msra.mxu0 0.0
      %286 = vmatprep.subr.mxu0 0.0
      %287 = vmatpush2.msra.mxu0 0.0
      %288 = vmatprep.subr.mxu0 0.0
      %289 = vmatpush2.msra.mxu0 0.0
      %290 = vmatprep.subr.mxu0 0.0
      %291 = vmatpush2.msra.mxu0 0.0
      %292 = vmatprep.subr.mxu0 0.0
      %293 = vmatpush2.msra.mxu0 0.0
      %294 = vmatprep.subr.mxu0 0.0
      %295 = vmatpush2.msra.mxu0 0.0
      %296 = vmatprep.subr.mxu0 0.0
      %297 = vmatpush2.msra.mxu0 0.0
      %298 = vmatprep.subr.mxu0 0.0
      %299 = vmatpush2.msra.mxu0 0.0
      %300 = vmatprep.subr.mxu0 0.0
      %301 = vmatpush2.msra.mxu0 0.0
      %302 = vmatprep.subr.mxu0 0.0
      %303 = vmatpush2.msra.mxu0 0.0
      %304 = vmatprep.subr.mxu0 0.0
      %305 = vmatpush2.msra.mxu0 0.0
      %306 = vmatprep.subr.mxu0 0.0
      %307 = vmatpush2.msra.mxu0 0.0
      %308 = vmatprep.subr.mxu0 0.0
      %309 = vmatpush2.msra.mxu0 0.0
      %310 = vmatprep.subr.mxu0 0.0
      %311 = vmatpush2.msra.mxu0 0.0
      %312 = vmatprep.subr.mxu0 0.0
      %313 = vmatpush2.msra.mxu0 0.0
      %314 = vmatprep.subr.mxu0 0.0
      %315 = vmatpush2.msra.mxu0 0.0
      %316 = vmatprep.mubr.f32.mxu0 0.0
      %317 = vmatmul.mubr.f32.gmra.mxu0 %v247
      %v318 = vpop.f32.mrf.mxu0
      %v319 = vadd.f32 %v243, %v318
      %v320 = vpop.f32.mrf.mxu0
      %321 = vmatprep.mubr.f32.mxu0 0.0
      %322 = vmatmul.mubr.f32.gmra.mxu0 %v250
      %v323 = vpop.f32.mrf.mxu0
      %v324 = vadd.f32 %v243, %v323
      %v325 = vpop.f32.mrf.mxu0
      %326 = vdwg.mxu0
      %v327 = vld [vmem:[%s3] sm:$0xff]
      %v328 = vld [vmem:[%s3 + $0x8] sm:$0xff]
      %vm329 = vcmask 130048
      %v331 = vsel %vm329, %v319, 0
      %v334 = vsel %vm329, %v324, 0
      %336 = vmatprep.subr.mxu0 0.0
      %337 = vmatpush1.msra.mxu0 0.0
      %338 = vmatprep.subr.mxu0 0.0
      %339 = vmatpush1.msra.mxu0 0.0
      %340 = vmatprep.subr.mxu0 0.0
      %341 = vmatpush1.msra.mxu0 0.0
      %342 = vmatprep.subr.mxu0 0.0
      %343 = vmatpush1.msra.mxu0 0.0
      %344 = vmatprep.subr.mxu0 0.0
      %345 = vmatpush1.msra.mxu0 0.0
      %346 = vmatprep.subr.mxu0 0.0
      %347 = vmatpush1.msra.mxu0 0.0
      %348 = vmatprep.subr.mxu0 0.0
      %349 = vmatpush1.msra.mxu0 0.0
      %350 = vmatprep.subr.mxu0 0.0
      %351 = vmatpush1.msra.mxu0 0.0
      %352 = vmatprep.subr.mxu0 0.0
      %353 = vmatpush1.msra.mxu0 0.0
      %354 = vmatprep.subr.mxu0 0.0
      %355 = vmatpush1.msra.mxu0 0.0
      %356 = vmatprep.subr.mxu0 0.0
      %357 = vmatpush1.msra.mxu0 0.0
      %358 = vmatprep.subr.mxu0 0.0
      %359 = vmatpush1.msra.mxu0 0.0
      %360 = vmatprep.subr.mxu0 0.0
      %361 = vmatpush1.msra.mxu0 0.0
      %362 = vmatprep.subr.mxu0 0.0
      %363 = vmatpush1.msra.mxu0 0.0
      %364 = vmatprep.subr.mxu0 0.0
      %365 = vmatpush1.msra.mxu0 %v328
      %366 = vmatprep.subr.mxu0 0.0
      %367 = vmatpush1.msra.mxu0 %v327
      %368 = vmatprep.subr.mxu0 0.0
      %369 = vmatpush2.msra.mxu0 0.0
      %370 = vmatprep.subr.mxu0 0.0
      %371 = vmatpush2.msra.mxu0 0.0
      %372 = vmatprep.subr.mxu0 0.0
      %373 = vmatpush2.msra.mxu0 0.0
      %374 = vmatprep.subr.mxu0 0.0
      %375 = vmatpush2.msra.mxu0 0.0
      %376 = vmatprep.subr.mxu0 0.0
      %377 = vmatpush2.msra.mxu0 0.0
      %378 = vmatprep.subr.mxu0 0.0
      %379 = vmatpush2.msra.mxu0 0.0
      %380 = vmatprep.subr.mxu0 0.0
      %381 = vmatpush2.msra.mxu0 0.0
      %382 = vmatprep.subr.mxu0 0.0
      %383 = vmatpush2.msra.mxu0 0.0
      %384 = vmatprep.subr.mxu0 0.0
      %385 = vmatpush2.msra.mxu0 0.0
      %386 = vmatprep.subr.mxu0 0.0
      %387 = vmatpush2.msra.mxu0 0.0
      %388 = vmatprep.subr.mxu0 0.0
      %389 = vmatpush2.msra.mxu0 0.0
      %390 = vmatprep.subr.mxu0 0.0
      %391 = vmatpush2.msra.mxu0 0.0
      %392 = vmatprep.subr.mxu0 0.0
      %393 = vmatpush2.msra.mxu0 0.0
      %394 = vmatprep.subr.mxu0 0.0
      %395 = vmatpush2.msra.mxu0 0.0
      %396 = vmatprep.subr.mxu0 0.0
      %397 = vmatpush2.msra.mxu0 0.0
      %398 = vmatprep.subr.mxu0 0.0
      %399 = vmatpush2.msra.mxu0 0.0
      %400 = vmatprep.mubr.f32.mxu0 0.0
      %401 = vmatmul.mubr.f32.gmra.mxu0 %v331
      %v402 = vpop.f32.mrf.mxu0
      %v403 = vadd.f32 0.0, %v402
      %v404 = vpop.f32.mrf.mxu0
      %405 = vmatprep.mubr.f32.mxu0 0.0
      %406 = vmatmul.mubr.f32.gmra.mxu0 %v334
      %v407 = vpop.f32.mrf.mxu0
      %v408 = vadd.f32 0.0, %v407
      %v409 = vpop.f32.mrf.mxu0
      %410 = vdwg.mxu0
      %v411 = vmul.f32 %v319, %v319
      %v412 = vmul.f32 %v324, %v324
      %v413 = vsel %vm329, %v411, 0.0
      %414 = vadd.xlane.f32.xlu0 %v413
      %v415 = vpop.xlane.xlu0 %414
      %v416 = vsel %vm329, %v412, 0.0
      %417 = vadd.xlane.f32.xlu0 %v416
      %v418 = vpop.xlane.xlu0 %417
      %v419 = vmul.f32 %v403, 2.0
      %v420 = vmul.f32 %v408, 2.0
      %v421 = vsub.f32 %v415, %v419
      %v422 = vsub.f32 %v418, %v420
      %v423 = vld [vmem:[%s4] sm:$0x1]
      %v425 = vlaneseq
      %v426 = vshrl.u32 %v425, 7
      %v427 = vsub.s32 0, %v426
      %v428 = vrot.slane %v423, %v427
      %v430 = vadd.f32 %v421, %v428
      %v431 = vadd.f32 %v422, %v428
      %v432 = vsel %vm245, %v430, inf
      %433 = vmin.xlane.f32.xlu0 %v432
      %v434 = vpop.xlane.xlu0 %433
      %v435 = vsel %vm245, %v431, inf
      %436 = vmin.xlane.f32.xlu0 %v435
      %v437 = vpop.xlane.xlu0 %436
      %v438 = vlaneseq
      %v439 = vand.u32 %v438, 127
      %vm440 = vcmp.le.f32.partialorder %v430, %v434
      %vm441 = vcmp.le.f32.partialorder %v431, %v437
      %v442 = vsel %vm440, %v439, 2147483647
      %v443 = vsel %vm441, %v439, 2147483647
      %v444 = vsel %vm245, %v442, 2147483647
      %v445 = vand.u32 %v444, 65535
      %v446 = vshra.s32 %v444, 16
      %v447 = vcvt.s32.f32 %v445
      %v448 = vcvt.s32.f32 %v446
      %449 = vmin.xlane.f32.xlu0 %v448
      %v450 = vpop.xlane.xlu0 %449
      %vm451 = vcmp.eq.f32.partialorder %v448, %v450
      %v452 = vsel %vm451, %v447, inf
      %453 = vmin.xlane.f32.xlu0 %v452
      %v454 = vpop.xlane.xlu0 %453
      %v455 = vcvt.f32.s32 %v454
      %v456 = vcvt.f32.s32 %v450
      %v457 = vshll.u32 %v456, 16
      %v458 = vadd.s32 %v457, %v455
      %v459 = vsel %vm245, %v443, 2147483647
      %v460 = vand.u32 %v459, 65535
      %v461 = vshra.s32 %v459, 16
      %v462 = vcvt.s32.f32 %v460
      %v463 = vcvt.s32.f32 %v461
      %464 = vmin.xlane.f32.xlu0 %v463
      %v465 = vpop.xlane.xlu0 %464
      %vm466 = vcmp.eq.f32.partialorder %v463, %v465
      %v467 = vsel %vm466, %v462, inf
      %468 = vmin.xlane.f32.xlu0 %v467
      %v469 = vpop.xlane.xlu0 %468
      %v470 = vcvt.f32.s32 %v469
      %v471 = vcvt.f32.s32 %v465
      %v472 = vshll.u32 %v471, 16
      %v473 = vadd.s32 %v472, %v470
      %474 = vst [vmem:[%s226] sm:$0xff] %v458
      %475 = vst [vmem:[%s226 + $0x8] sm:$0xff] %v473
      %s476 = smul.u32 2, %s16
      %p477 = scmp.lt.s32.totalorder %s476, 3
      %s478 = scalar_select %p477, %s476, 3
      %s479 = smul.addr %s478, 8
      %s480 = scalar_lea.vmem %s5, %s479
      // Predicated region
      $region41: #{_lambda_.2} parent=39 // pred_check
        %p481 = pneg %p144
      $region42: #{_lambda_.2} parent=39 // pred_check_branch
        %483 = sbr.rel (%p481) target = $region44
      $region43: #{_lambda_.2} parent=39 // pred_region
        %s484 = smul.u32 2, %s16
      $region44: #{_lambda_.2} parent=39 // pred_fallthru
        _
    $region40: #{_lambda_.2} parent=5 // pred_fallthru
      _
    %p485 = scmp.le.s32.totalorder 2, %s11
    // Predicated region
    $region45: #{_lambda_.2} parent=5 // pred_check
      %p486 = pneg %p485
    $region46: #{_lambda_.2} parent=5 // pred_check_branch
      %488 = sbr.rel (%p486) target = $region48
    $region47: #{_lambda_.2} parent=5 // pred_region
      %s489 = ssub.s32 %s11, 2
      // Predicated region
      $region49: #{_lambda_.2} parent=47 // pred_check
        %p490 = pneg %p150
      $region50: #{_lambda_.2} parent=47 // pred_check_branch
        %492 = sbr.rel (%p490) target = $region52
      $region51: #{_lambda_.2} parent=47 // pred_region
        %s493 = smul.u32 2, %s17
        %p494 = scmp.lt.s32.totalorder %s493, 3
        %s495 = scalar_select %p494, %s493, 3
        %s496 = smul.addr %s495, 8
        %s497 = scalar_lea.vmem %s5, %s496
      $region52: #{_lambda_.2} parent=47 // pred_fallthru
        _
    $region48: #{_lambda_.2} parent=5 // pred_fallthru
      _
  $region6: #{_lambda_.2} parent=0 // loop_footer
    %s15 = sadd.s32 1, %s11
  $region7: #{_lambda_.2} parent=0 // loop_footer_branch
    %10 = sbr.rel target = $region3
  $region8: #{_lambda_.2} parent=0 // loop_exit
    _

// kernel: _lambda_.3
$region0: #{_lambda_.3}
  #allocation0 [shape = 'u32[]', space=smem, size = 0x4, offset = 0x4, fixed_abs, tag = 'smem constant byte address 0x4 - core index']
  #allocation1 [shape = 'u32[144,128]{1,0:T(1,128)}', space=vmem, size = 0x12000, scoped, tag = 'internal scratch']
  %s0 = inlined_call_operand.vmem [shape: s32[32,1], index: 0, kind: input, shape index: {}]
  %s1 = inlined_call_operand.vmem [shape: bf16[128,32], index: 1, kind: input, shape index: {}]
  %s2 = inlined_call_operand.vmem [shape: f32[16,32], index: 2, kind: input, shape index: {}]
  %s3 = inlined_call_operand.vmem [shape: f32[2,1,32], index: 3, kind: input, shape index: {}]
  %s4 = inlined_call_operand.vmem [shape: f32[2,1,32], index: 4, kind: input, shape index: {}]
  %s5 = inlined_call_operand.vmem [shape: bf16[2,32,96], index: 5, kind: input, shape index: {}]
  %s6 = inlined_call_operand.vmem [shape: f32[2,1,96], index: 6, kind: input, shape index: {}]
  %s7 = inlined_call_operand.vmem [shape: bf16[2,32,32], index: 7, kind: input, shape index: {}]
  %s8 = inlined_call_operand.vmem [shape: f32[2,1,32], index: 8, kind: input, shape index: {}]
  %s9 = inlined_call_operand.vmem [shape: f32[2,1,32], index: 9, kind: input, shape index: {}]
  %s10 = inlined_call_operand.vmem [shape: f32[2,1,32], index: 10, kind: input, shape index: {}]
  %s11 = inlined_call_operand.vmem [shape: bf16[2,32,128], index: 11, kind: input, shape index: {}]
  %s12 = inlined_call_operand.vmem [shape: f32[2,1,128], index: 12, kind: input, shape index: {}]
  %s13 = inlined_call_operand.vmem [shape: bf16[2,128,32], index: 13, kind: input, shape index: {}]
  %s14 = inlined_call_operand.vmem [shape: f32[2,1,32], index: 14, kind: input, shape index: {}]
  %s15 = inlined_call_operand.vmem [shape: f32[1,32], index: 15, kind: input, shape index: {}]
  %s16 = inlined_call_operand.vmem [shape: f32[1,32], index: 16, kind: input, shape index: {}]
  %s17 = inlined_call_operand.vmem [shape: bf16[32,128], index: 17, kind: input, shape index: {}]
  %s18 = inlined_call_operand.vmem [shape: f32[1,128], index: 18, kind: input, shape index: {}]
  %s19 = inlined_call_operand.hbm [shape: f32[32,128], index: 19, kind: output, shape index: {}]
  %s20 = sld [smem:[#allocation0]]
  $region109: #{_lambda_.3} parent=0
    _
  %s22 = ssub.s32 1, %s20
  %s23 = scalar_select 0, %s22, %s20
  $region1: #{_lambda_.3} parent=0
    #allocation2 [shape = 'u8[16384]{0}', space=vmem, size = 0x4000, scoped, tag = 'output window, operand 0']
    #allocation3 [shape = 's32[2]{0}', space=sflag, size = 0x8, scoped, tag = 'scoped memory for _lambda_.3']
    %24 = vsyncpa [#allocation3], 0
    %s25 = scalar_lea.sflag [#allocation3], 1
    %26 = vsyncpa %s25, 0
    loop: start=0, step=1, limit=4
    $region2: #{_lambda_.3} parent=1 // loop_pre_header
      _
    $region3: #{_lambda_.3} parent=1 // loop_header
      %s28 = sphi 0, %s32
      %p29 = scmp.ge.s32.totalorder %s28, 4
      %s38 = sphi 0, %s40
      %s41 = sphi 0, %s38
      %s42 = sphi 0, %s41
      %s58 = sphi 0, %s42
      %s62 = sphi 0, %s62
      %s64 = sphi 0, %s62
      %s65 = sphi 0, %s64
      %s79 = sphi 0, %s65
      %s83 = sphi 0, %s83
      %s85 = sphi 0, %s83
      %s86 = sphi 0, %s85
      %s100 = sphi 0, %s86
      %s104 = sphi 0, %s104
      %s106 = sphi 0, %s104
      %s107 = sphi 0, %s106
      %s121 = sphi 0, %s107
      %s125 = sphi 0, %s125
      %s127 = sphi 0, %s125
      %s128 = sphi 0, %s127
      %s142 = sphi 0, %s128
      %s146 = sphi 0, %s146
      %s148 = sphi 0, %s146
      %s149 = sphi 0, %s148
      %s163 = sphi 0, %s149
      %s167 = sphi 0, %s167
      %s169 = sphi 0, %s167
      %s170 = sphi 0, %s169
      %s184 = sphi 0, %s170
      %s188 = sphi 0, %s188
      %s190 = sphi 0, %s188
      %s191 = sphi 0, %s190
      %s205 = sphi 0, %s191
      %s209 = sphi 0, %s209
      %s211 = sphi 0, %s209
      %s212 = sphi 0, %s211
      %s226 = sphi 0, %s212
      %s230 = sphi 0, %s230
      %s232 = sphi 0, %s230
      %s233 = sphi 0, %s232
      %s247 = sphi 0, %s233
      %s251 = sphi 0, %s251
      %s253 = sphi 0, %s251
      %s254 = sphi 0, %s253
      %s268 = sphi 0, %s254
      %s272 = sphi 0, %s272
      %s274 = sphi 0, %s272
      %s275 = sphi 0, %s274
      %s289 = sphi 0, %s275
      %s293 = sphi 0, %s293
      %s295 = sphi 0, %s293
      %s296 = sphi 0, %s295
      %s310 = sphi 0, %s296
      %s314 = sphi 0, %s314
      %s316 = sphi 0, %s314
      %s317 = sphi 0, %s316
      %s331 = sphi 0, %s317
      %s335 = sphi 0, %s335
      %s337 = sphi 0, %s335
      %s338 = sphi 0, %s337
      %s352 = sphi 0, %s338
      %s356 = sphi 0, %s356
      %s358 = sphi 0, %s356
      %s359 = sphi 0, %s358
      %s373 = sphi 0, %s359
      %s377 = sphi 0, %s377
      %s379 = sphi 0, %s377
      %s380 = sphi 0, %s379
      %s394 = sphi 0, %s380
      %s398 = sphi 0, %s398
      %s400 = sphi 0, %s398
      %s401 = sphi 0, %s400
      %s415 = sphi 0, %s401
      %s419 = sphi 0, %s419
      %s421 = sphi 0, %s419
      %s422 = sphi 0, %s421
      %s436 = sphi 0, %s422
      %s442 = sphi 0, %s444
      %s445 = sphi 0, %s442
      %s446 = sphi 0, %s445
      %s462 = sphi 0, %s446
    $region4: #{_lambda_.3} parent=1 // loop_header_branch
      %31 = sbr.rel (%p29) target = $region8
    $region5: #{_lambda_.3} parent=1 // loop_body
      %s33 = ssub.s32 %s28, 1
      %s34 = ssub.s32 %s28, 2
      %s35 = sadd.s32 %s28, 1
      %s36 = ssub.s32 %s28, %s35
      %p37 = scmp.eq.s32.totalorder %s36, 0
      %s39 = sadd.s32 %s38, 1
      %s40 = scalar_select %p37, %s38, %s39
      %p43 = pneg %p37
      %p44 = scmp.eq.s32.totalorder %s28, 1
      %p45 = por %p43, %p44
      %p46 = scmp.ne.s32.totalorder %s38, %s41
      %p47 = scmp.eq.s32.totalorder %s28, 0
      %p48 = por %p46, %p47
      %p49 = scmp.ne.s32.totalorder %s38, %s41
      %p50 = scmp.eq.s32.totalorder %s33, 1
      %p51 = por %p49, %p50
      %p52 = scmp.ne.s32.totalorder %s41, %s42
      %p53 = scmp.eq.s32.totalorder %s33, 0
      %p54 = por %p52, %p53
      %p55 = scmp.ne.s32.totalorder %s41, %s42
      %p56 = scmp.eq.s32.totalorder %s34, 1
      %p57 = por %p55, %p56
      %p59 = scmp.ne.s32.totalorder %s42, %s58
      %p60 = scmp.eq.s32.totalorder %s34, 0
      %p61 = por %p59, %p60
      %s63 = sadd.s32 %s62, 1
      %p66 = scmp.eq.s32.totalorder %s28, 1
      %p67 = scmp.ne.s32.totalorder %s62, %s64
      %p68 = scmp.eq.s32.totalorder %s28, 0
      %p69 = por %p67, %p68
      %p70 = scmp.ne.s32.totalorder %s62, %s64
      %p71 = scmp.eq.s32.totalorder %s33, 1
      %p72 = por %p70, %p71
      %p73 = scmp.ne.s32.totalorder %s64, %s65
      %p74 = scmp.eq.s32.totalorder %s33, 0
      %p75 = por %p73, %p74
      %p76 = scmp.ne.s32.totalorder %s64, %s65
      %p77 = scmp.eq.s32.totalorder %s34, 1
      %p78 = por %p76, %p77
      %p80 = scmp.ne.s32.totalorder %s65, %s79
      %p81 = scmp.eq.s32.totalorder %s34, 0
      %p82 = por %p80, %p81
      %s84 = sadd.s32 %s83, 1
      %p87 = scmp.eq.s32.totalorder %s28, 1
      %p88 = scmp.ne.s32.totalorder %s83, %s85
      %p89 = scmp.eq.s32.totalorder %s28, 0
      %p90 = por %p88, %p89
      %p91 = scmp.ne.s32.totalorder %s83, %s85
      %p92 = scmp.eq.s32.totalorder %s33, 1
      %p93 = por %p91, %p92
      %p94 = scmp.ne.s32.totalorder %s85, %s86
      %p95 = scmp.eq.s32.totalorder %s33, 0
      %p96 = por %p94, %p95
      %p97 = scmp.ne.s32.totalorder %s85, %s86
      %p98 = scmp.eq.s32.totalorder %s34, 1
      %p99 = por %p97, %p98
      %p101 = scmp.ne.s32.totalorder %s86, %s100
      %p102 = scmp.eq.s32.totalorder %s34, 0
      %p103 = por %p101, %p102
      %s105 = sadd.s32 %s104, 1
      %p108 = scmp.eq.s32.totalorder %s28, 1
      %p109 = scmp.ne.s32.totalorder %s104, %s106
      %p110 = scmp.eq.s32.totalorder %s28, 0
      %p111 = por %p109, %p110
      %p112 = scmp.ne.s32.totalorder %s104, %s106
      %p113 = scmp.eq.s32.totalorder %s33, 1
      %p114 = por %p112, %p113
      %p115 = scmp.ne.s32.totalorder %s106, %s107
      %p116 = scmp.eq.s32.totalorder %s33, 0
      %p117 = por %p115, %p116
      %p118 = scmp.ne.s32.totalorder %s106, %s107
      %p119 = scmp.eq.s32.totalorder %s34, 1
      %p120 = por %p118, %p119
      %p122 = scmp.ne.s32.totalorder %s107, %s121
      %p123 = scmp.eq.s32.totalorder %s34, 0
      %p124 = por %p122, %p123
      %s126 = sadd.s32 %s125, 1
      %p129 = scmp.eq.s32.totalorder %s28, 1
      %p130 = scmp.ne.s32.totalorder %s125, %s127
      %p131 = scmp.eq.s32.totalorder %s28, 0
      %p132 = por %p130, %p131
      %p133 = scmp.ne.s32.totalorder %s125, %s127
      %p134 = scmp.eq.s32.totalorder %s33, 1
      %p135 = por %p133, %p134
      %p136 = scmp.ne.s32.totalorder %s127, %s128
      %p137 = scmp.eq.s32.totalorder %s33, 0
      %p138 = por %p136, %p137
      %p139 = scmp.ne.s32.totalorder %s127, %s128
      %p140 = scmp.eq.s32.totalorder %s34, 1
      %p141 = por %p139, %p140
      %p143 = scmp.ne.s32.totalorder %s128, %s142
      %p144 = scmp.eq.s32.totalorder %s34, 0
      %p145 = por %p143, %p144
      %s147 = sadd.s32 %s146, 1
      %p150 = scmp.eq.s32.totalorder %s28, 1
      %p151 = scmp.ne.s32.totalorder %s146, %s148
      %p152 = scmp.eq.s32.totalorder %s28, 0
      %p153 = por %p151, %p152
      %p154 = scmp.ne.s32.totalorder %s146, %s148
      %p155 = scmp.eq.s32.totalorder %s33, 1
      %p156 = por %p154, %p155
      %p157 = scmp.ne.s32.totalorder %s148, %s149
      %p158 = scmp.eq.s32.totalorder %s33, 0
      %p159 = por %p157, %p158
      %p160 = scmp.ne.s32.totalorder %s148, %s149
      %p161 = scmp.eq.s32.totalorder %s34, 1
      %p162 = por %p160, %p161
      %p164 = scmp.ne.s32.totalorder %s149, %s163
      %p165 = scmp.eq.s32.totalorder %s34, 0
      %p166 = por %p164, %p165
      %s168 = sadd.s32 %s167, 1
      %p171 = scmp.eq.s32.totalorder %s28, 1
      %p172 = scmp.ne.s32.totalorder %s167, %s169
      %p173 = scmp.eq.s32.totalorder %s28, 0
      %p174 = por %p172, %p173
      %p175 = scmp.ne.s32.totalorder %s167, %s169
      %p176 = scmp.eq.s32.totalorder %s33, 1
      %p177 = por %p175, %p176
      %p178 = scmp.ne.s32.totalorder %s169, %s170
      %p179 = scmp.eq.s32.totalorder %s33, 0
      %p180 = por %p178, %p179
      %p181 = scmp.ne.s32.totalorder %s169, %s170
      %p182 = scmp.eq.s32.totalorder %s34, 1
      %p183 = por %p181, %p182
      %p185 = scmp.ne.s32.totalorder %s170, %s184
      %p186 = scmp.eq.s32.totalorder %s34, 0
      %p187 = por %p185, %p186
      %s189 = sadd.s32 %s188, 1
      %p192 = scmp.eq.s32.totalorder %s28, 1
      %p193 = scmp.ne.s32.totalorder %s188, %s190
      %p194 = scmp.eq.s32.totalorder %s28, 0
      %p195 = por %p193, %p194
      %p196 = scmp.ne.s32.totalorder %s188, %s190
      %p197 = scmp.eq.s32.totalorder %s33, 1
      %p198 = por %p196, %p197
      %p199 = scmp.ne.s32.totalorder %s190, %s191
      %p200 = scmp.eq.s32.totalorder %s33, 0
      %p201 = por %p199, %p200
      %p202 = scmp.ne.s32.totalorder %s190, %s191
      %p203 = scmp.eq.s32.totalorder %s34, 1
      %p204 = por %p202, %p203
      %p206 = scmp.ne.s32.totalorder %s191, %s205
      %p207 = scmp.eq.s32.totalorder %s34, 0
      %p208 = por %p206, %p207
      %s210 = sadd.s32 %s209, 1
      %p213 = scmp.eq.s32.totalorder %s28, 1
      %p214 = scmp.ne.s32.totalorder %s209, %s211
      %p215 = scmp.eq.s32.totalorder %s28, 0
      %p216 = por %p214, %p215
      %p217 = scmp.ne.s32.totalorder %s209, %s211
      %p218 = scmp.eq.s32.totalorder %s33, 1
      %p219 = por %p217, %p218
      %p220 = scmp.ne.s32.totalorder %s211, %s212
      %p221 = scmp.eq.s32.totalorder %s33, 0
      %p222 = por %p220, %p221
      %p223 = scmp.ne.s32.totalorder %s211, %s212
      %p224 = scmp.eq.s32.totalorder %s34, 1
      %p225 = por %p223, %p224
      %p227 = scmp.ne.s32.totalorder %s212, %s226
      %p228 = scmp.eq.s32.totalorder %s34, 0
      %p229 = por %p227, %p228
      %s231 = sadd.s32 %s230, 1
      %p234 = scmp.eq.s32.totalorder %s28, 1
      %p235 = scmp.ne.s32.totalorder %s230, %s232
      %p236 = scmp.eq.s32.totalorder %s28, 0
      %p237 = por %p235, %p236
      %p238 = scmp.ne.s32.totalorder %s230, %s232
      %p239 = scmp.eq.s32.totalorder %s33, 1
      %p240 = por %p238, %p239
      %p241 = scmp.ne.s32.totalorder %s232, %s233
      %p242 = scmp.eq.s32.totalorder %s33, 0
      %p243 = por %p241, %p242
      %p244 = scmp.ne.s32.totalorder %s232, %s233
      %p245 = scmp.eq.s32.totalorder %s34, 1
      %p246 = por %p244, %p245
      %p248 = scmp.ne.s32.totalorder %s233, %s247
      %p249 = scmp.eq.s32.totalorder %s34, 0
      %p250 = por %p248, %p249
      %s252 = sadd.s32 %s251, 1
      %p255 = scmp.eq.s32.totalorder %s28, 1
      %p256 = scmp.ne.s32.totalorder %s251, %s253
      %p257 = scmp.eq.s32.totalorder %s28, 0
      %p258 = por %p256, %p257
      %p259 = scmp.ne.s32.totalorder %s251, %s253
      %p260 = scmp.eq.s32.totalorder %s33, 1
      %p261 = por %p259, %p260
      %p262 = scmp.ne.s32.totalorder %s253, %s254
      %p263 = scmp.eq.s32.totalorder %s33, 0
      %p264 = por %p262, %p263
      %p265 = scmp.ne.s32.totalorder %s253, %s254
      %p266 = scmp.eq.s32.totalorder %s34, 1
      %p267 = por %p265, %p266
      %p269 = scmp.ne.s32.totalorder %s254, %s268
      %p270 = scmp.eq.s32.totalorder %s34, 0
      %p271 = por %p269, %p270
      %s273 = sadd.s32 %s272, 1
      %p276 = scmp.eq.s32.totalorder %s28, 1
      %p277 = scmp.ne.s32.totalorder %s272, %s274
      %p278 = scmp.eq.s32.totalorder %s28, 0
      %p279 = por %p277, %p278
      %p280 = scmp.ne.s32.totalorder %s272, %s274
      %p281 = scmp.eq.s32.totalorder %s33, 1
      %p282 = por %p280, %p281
      %p283 = scmp.ne.s32.totalorder %s274, %s275
      %p284 = scmp.eq.s32.totalorder %s33, 0
      %p285 = por %p283, %p284
      %p286 = scmp.ne.s32.totalorder %s274, %s275
      %p287 = scmp.eq.s32.totalorder %s34, 1
      %p288 = por %p286, %p287
      %p290 = scmp.ne.s32.totalorder %s275, %s289
      %p291 = scmp.eq.s32.totalorder %s34, 0
      %p292 = por %p290, %p291
      %s294 = sadd.s32 %s293, 1
      %p297 = scmp.eq.s32.totalorder %s28, 1
      %p298 = scmp.ne.s32.totalorder %s293, %s295
      %p299 = scmp.eq.s32.totalorder %s28, 0
      %p300 = por %p298, %p299
      %p301 = scmp.ne.s32.totalorder %s293, %s295
      %p302 = scmp.eq.s32.totalorder %s33, 1
      %p303 = por %p301, %p302
      %p304 = scmp.ne.s32.totalorder %s295, %s296
      %p305 = scmp.eq.s32.totalorder %s33, 0
      %p306 = por %p304, %p305
      %p307 = scmp.ne.s32.totalorder %s295, %s296
      %p308 = scmp.eq.s32.totalorder %s34, 1
      %p309 = por %p307, %p308
      %p311 = scmp.ne.s32.totalorder %s296, %s310
      %p312 = scmp.eq.s32.totalorder %s34, 0
      %p313 = por %p311, %p312
      %s315 = sadd.s32 %s314, 1
      %p318 = scmp.eq.s32.totalorder %s28, 1
      %p319 = scmp.ne.s32.totalorder %s314, %s316
      %p320 = scmp.eq.s32.totalorder %s28, 0
      %p321 = por %p319, %p320
      %p322 = scmp.ne.s32.totalorder %s314, %s316
      %p323 = scmp.eq.s32.totalorder %s33, 1
      %p324 = por %p322, %p323
      %p325 = scmp.ne.s32.totalorder %s316, %s317
      %p326 = scmp.eq.s32.totalorder %s33, 0
      %p327 = por %p325, %p326
      %p328 = scmp.ne.s32.totalorder %s316, %s317
      %p329 = scmp.eq.s32.totalorder %s34, 1
      %p330 = por %p328, %p329
      %p332 = scmp.ne.s32.totalorder %s317, %s331
      %p333 = scmp.eq.s32.totalorder %s34, 0
      %p334 = por %p332, %p333
      %s336 = sadd.s32 %s335, 1
      %p339 = scmp.eq.s32.totalorder %s28, 1
      %p340 = scmp.ne.s32.totalorder %s335, %s337
      %p341 = scmp.eq.s32.totalorder %s28, 0
      %p342 = por %p340, %p341
      %p343 = scmp.ne.s32.totalorder %s335, %s337
      %p344 = scmp.eq.s32.totalorder %s33, 1
      %p345 = por %p343, %p344
      %p346 = scmp.ne.s32.totalorder %s337, %s338
      %p347 = scmp.eq.s32.totalorder %s33, 0
      %p348 = por %p346, %p347
      %p349 = scmp.ne.s32.totalorder %s337, %s338
      %p350 = scmp.eq.s32.totalorder %s34, 1
      %p351 = por %p349, %p350
      %p353 = scmp.ne.s32.totalorder %s338, %s352
      %p354 = scmp.eq.s32.totalorder %s34, 0
      %p355 = por %p353, %p354
      %s357 = sadd.s32 %s356, 1
      %p360 = scmp.eq.s32.totalorder %s28, 1
      %p361 = scmp.ne.s32.totalorder %s356, %s358
      %p362 = scmp.eq.s32.totalorder %s28, 0
      %p363 = por %p361, %p362
      %p364 = scmp.ne.s32.totalorder %s356, %s358
      %p365 = scmp.eq.s32.totalorder %s33, 1
      %p366 = por %p364, %p365
      %p367 = scmp.ne.s32.totalorder %s358, %s359
      %p368 = scmp.eq.s32.totalorder %s33, 0
      %p369 = por %p367, %p368
      %p370 = scmp.ne.s32.totalorder %s358, %s359
      %p371 = scmp.eq.s32.totalorder %s34, 1
      %p372 = por %p370, %p371
      %p374 = scmp.ne.s32.totalorder %s359, %s373
      %p375 = scmp.eq.s32.totalorder %s34, 0
      %p376 = por %p374, %p375
      %s378 = sadd.s32 %s377, 1
      %p381 = scmp.eq.s32.totalorder %s28, 1
      %p382 = scmp.ne.s32.totalorder %s377, %s379
      %p383 = scmp.eq.s32.totalorder %s28, 0
      %p384 = por %p382, %p383
      %p385 = scmp.ne.s32.totalorder %s377, %s379
      %p386 = scmp.eq.s32.totalorder %s33, 1
      %p387 = por %p385, %p386
      %p388 = scmp.ne.s32.totalorder %s379, %s380
      %p389 = scmp.eq.s32.totalorder %s33, 0
      %p390 = por %p388, %p389
      %p391 = scmp.ne.s32.totalorder %s379, %s380
      %p392 = scmp.eq.s32.totalorder %s34, 1
      %p393 = por %p391, %p392
      %p395 = scmp.ne.s32.totalorder %s380, %s394
      %p396 = scmp.eq.s32.totalorder %s34, 0
      %p397 = por %p395, %p396
      %s399 = sadd.s32 %s398, 1
      %p402 = scmp.eq.s32.totalorder %s28, 1
      %p403 = scmp.ne.s32.totalorder %s398, %s400
      %p404 = scmp.eq.s32.totalorder %s28, 0
      %p405 = por %p403, %p404
      %p406 = scmp.ne.s32.totalorder %s398, %s400
      %p407 = scmp.eq.s32.totalorder %s33, 1
      %p408 = por %p406, %p407
      %p409 = scmp.ne.s32.totalorder %s400, %s401
      %p410 = scmp.eq.s32.totalorder %s33, 0
      %p411 = por %p409, %p410
      %p412 = scmp.ne.s32.totalorder %s400, %s401
      %p413 = scmp.eq.s32.totalorder %s34, 1
      %p414 = por %p412, %p413
      %p416 = scmp.ne.s32.totalorder %s401, %s415
      %p417 = scmp.eq.s32.totalorder %s34, 0
      %p418 = por %p416, %p417
      %s420 = sadd.s32 %s419, 1
      %p423 = scmp.eq.s32.totalorder %s28, 1
      %p424 = scmp.ne.s32.totalorder %s419, %s421
      %p425 = scmp.eq.s32.totalorder %s28, 0
      %p426 = por %p424, %p425
      %p427 = scmp.ne.s32.totalorder %s419, %s421
      %p428 = scmp.eq.s32.totalorder %s33, 1
      %p429 = por %p427, %p428
      %p430 = scmp.ne.s32.totalorder %s421, %s422
      %p431 = scmp.eq.s32.totalorder %s33, 0
      %p432 = por %p430, %p431
      %p433 = scmp.ne.s32.totalorder %s421, %s422
      %p434 = scmp.eq.s32.totalorder %s34, 1
      %p435 = por %p433, %p434
      %p437 = scmp.ne.s32.totalorder %s422, %s436
      %p438 = scmp.eq.s32.totalorder %s34, 0
      %p439 = por %p437, %p438
      %s440 = ssub.s32 %s28, %s35
      %p441 = scmp.eq.s32.totalorder %s440, 0
      %s443 = sadd.s32 %s442, 1
      %s444 = scalar_select %p441, %s442, %s443
      %p447 = pneg %p441
      %p448 = scmp.eq.s32.totalorder %s28, 1
      %p449 = por %p447, %p448
      %p450 = scmp.ne.s32.totalorder %s442, %s445
      %p451 = scmp.eq.s32.totalorder %s28, 0
      %p452 = por %p450, %p451
      %p453 = scmp.ne.s32.totalorder %s442, %s445
      %p454 = scmp.eq.s32.totalorder %s33, 1
      %p455 = por %p453, %p454
      %p456 = scmp.ne.s32.totalorder %s445, %s446
      %p457 = scmp.eq.s32.totalorder %s33, 0
      %p458 = por %p456, %p457
      %p459 = scmp.ne.s32.totalorder %s445, %s446
      %p460 = scmp.eq.s32.totalorder %s34, 1
      %p461 = por %p459, %p460
      %p463 = scmp.ne.s32.totalorder %s446, %s462
      %p464 = scmp.eq.s32.totalorder %s34, 0
      %p465 = por %p463, %p464
      %p466 = scmp.le.s32.totalorder 1, %s28
      %p467 = scmp.lt.s32.totalorder %s28, 3
      %p468 = pnand %p466, %p467
      %p469 = pneg %p468
      // Predicated region
      $region9: #{_lambda_.3} parent=5 // pred_check
        _
      $region10: #{_lambda_.3} parent=5 // pred_check_branch
        %471 = sbr.rel (%p468) target = $region12
      $region11: #{_lambda_.3} parent=5 // pred_region
        %s472 = ssub.s32 %s28, 1
        // Predicated region
        $region13: #{_lambda_.3} parent=11 // pred_check
          %p473 = pneg %p75
        $region14: #{_lambda_.3} parent=11 // pred_check_branch
          %475 = sbr.rel (%p473) target = $region16
        $region15: #{_lambda_.3} parent=11 // pred_region
          _
        $region16: #{_lambda_.3} parent=11 // pred_fallthru
          _
        // Predicated region
        $region17: #{_lambda_.3} parent=11 // pred_check
          %p476 = pneg %p96
        $region18: #{_lambda_.3} parent=11 // pred_check_branch
          %478 = sbr.rel (%p476) target = $region20
        $region19: #{_lambda_.3} parent=11 // pred_region
          _
        $region20: #{_lambda_.3} parent=11 // pred_fallthru
          _
        // Predicated region
        $region21: #{_lambda_.3} parent=11 // pred_check
          %p479 = pneg %p117
        $region22: #{_lambda_.3} parent=11 // pred_check_branch
          %481 = sbr.rel (%p479) target = $region24
        $region23: #{_lambda_.3} parent=11 // pred_region
          _
        $region24: #{_lambda_.3} parent=11 // pred_fallthru
          _
        // Predicated region
        $region25: #{_lambda_.3} parent=11 // pred_check
          %p482 = pneg %p138
        $region26: #{_lambda_.3} parent=11 // pred_check_branch
          %484 = sbr.rel (%p482) target = $region28
        $region27: #{_lambda_.3} parent=11 // pred_region
          _
        $region28: #{_lambda_.3} parent=11 // pred_fallthru
          _
        // Predicated region
        $region29: #{_lambda_.3} parent=11 // pred_check
          %p485 = pneg %p159
        $region30: #{_lambda_.3} parent=11 // pred_check_branch
          %487 = sbr.rel (%p485) target = $region32
        $region31: #{_lambda_.3} parent=11 // pred_region
          _
        $region32: #{_lambda_.3} parent=11 // pred_fallthru
          _
        // Predicated region
        $region33: #{_lambda_.3} parent=11 // pred_check
          %p488 = pneg %p180
        $region34: #{_lambda_.3} parent=11 // pred_check_branch
          %490 = sbr.rel (%p488) target = $region36
        $region35: #{_lambda_.3} parent=11 // pred_region
          _
        $region36: #{_lambda_.3} parent=11 // pred_fallthru
          _
        // Predicated region
        $region37: #{_lambda_.3} parent=11 // pred_check
          %p491 = pneg %p201
        $region38: #{_lambda_.3} parent=11 // pred_check_branch
          %493 = sbr.rel (%p491) target = $region40
        $region39: #{_lambda_.3} parent=11 // pred_region
          _
        $region40: #{_lambda_.3} parent=11 // pred_fallthru
          _
        // Predicated region
        $region41: #{_lambda_.3} parent=11 // pred_check
          %p494 = pneg %p222
        $region42: #{_lambda_.3} parent=11 // pred_check_branch
          %496 = sbr.rel (%p494) target = $region44
        $region43: #{_lambda_.3} parent=11 // pred_region
          _
        $region44: #{_lambda_.3} parent=11 // pred_fallthru
          _
        // Predicated region
        $region45: #{_lambda_.3} parent=11 // pred_check
          %p497 = pneg %p243
        $region46: #{_lambda_.3} parent=11 // pred_check_branch
          %499 = sbr.rel (%p497) target = $region48
        $region47: #{_lambda_.3} parent=11 // pred_region
          _
        $region48: #{_lambda_.3} parent=11 // pred_fallthru
          _
        // Predicated region
        $region49: #{_lambda_.3} parent=11 // pred_check
          %p500 = pneg %p264
        $region50: #{_lambda_.3} parent=11 // pred_check_branch
          %502 = sbr.rel (%p500) target = $region52
        $region51: #{_lambda_.3} parent=11 // pred_region
          _
        $region52: #{_lambda_.3} parent=11 // pred_fallthru
          _
        // Predicated region
        $region53: #{_lambda_.3} parent=11 // pred_check
          %p503 = pneg %p285
        $region54: #{_lambda_.3} parent=11 // pred_check_branch
          %505 = sbr.rel (%p503) target = $region56
        $region55: #{_lambda_.3} parent=11 // pred_region
          _
        $region56: #{_lambda_.3} parent=11 // pred_fallthru
          _
        // Predicated region
        $region57: #{_lambda_.3} parent=11 // pred_check
          %p506 = pneg %p306
        $region58: #{_lambda_.3} parent=11 // pred_check_branch
          %508 = sbr.rel (%p506) target = $region60
        $region59: #{_lambda_.3} parent=11 // pred_region
          _
        $region60: #{_lambda_.3} parent=11 // pred_fallthru
          _
        // Predicated region
        $region61: #{_lambda_.3} parent=11 // pred_check
          %p509 = pneg %p327
        $region62: #{_lambda_.3} parent=11 // pred_check_branch
          %511 = sbr.rel (%p509) target = $region64
        $region63: #{_lambda_.3} parent=11 // pred_region
          _
        $region64: #{_lambda_.3} parent=11 // pred_fallthru
          _
        // Predicated region
        $region65: #{_lambda_.3} parent=11 // pred_check
          %p512 = pneg %p348
        $region66: #{_lambda_.3} parent=11 // pred_check_branch
          %514 = sbr.rel (%p512) target = $region68
        $region67: #{_lambda_.3} parent=11 // pred_region
          _
        $region68: #{_lambda_.3} parent=11 // pred_fallthru
          _
        // Predicated region
        $region69: #{_lambda_.3} parent=11 // pred_check
          %p515 = pneg %p369
        $region70: #{_lambda_.3} parent=11 // pred_check_branch
          %517 = sbr.rel (%p515) target = $region72
        $region71: #{_lambda_.3} parent=11 // pred_region
          _
        $region72: #{_lambda_.3} parent=11 // pred_fallthru
          _
        // Predicated region
        $region73: #{_lambda_.3} parent=11 // pred_check
          %p518 = pneg %p390
        $region74: #{_lambda_.3} parent=11 // pred_check_branch
          %520 = sbr.rel (%p518) target = $region76
        $region75: #{_lambda_.3} parent=11 // pred_region
          _
        $region76: #{_lambda_.3} parent=11 // pred_fallthru
          _
        // Predicated region
        $region77: #{_lambda_.3} parent=11 // pred_check
          %p521 = pneg %p411
        $region78: #{_lambda_.3} parent=11 // pred_check_branch
          %523 = sbr.rel (%p521) target = $region80
        $region79: #{_lambda_.3} parent=11 // pred_region
          _
        $region80: #{_lambda_.3} parent=11 // pred_fallthru
          _
        // Predicated region
        $region81: #{_lambda_.3} parent=11 // pred_check
          %p524 = pneg %p432
        $region82: #{_lambda_.3} parent=11 // pred_check_branch
          %526 = sbr.rel (%p524) target = $region84
        $region83: #{_lambda_.3} parent=11 // pred_region
          _
        $region84: #{_lambda_.3} parent=11 // pred_fallthru
          _
      $region12: #{_lambda_.3} parent=5 // pred_fallthru
        _
      %p527 = scmp.lt.s32.totalorder %s28, 2
      // Predicated region
      $region85: #{_lambda_.3} parent=5 // pred_check
        %p528 = pneg %p527
      $region86: #{_lambda_.3} parent=5 // pred_check_branch
        %530 = sbr.rel (%p528) target = $region88
      $region87: #{_lambda_.3} parent=5 // pred_region
        // Predicated region
        $region89: #{_lambda_.3} parent=87 // pred_check
          %p531 = pneg %p48
        $region90: #{_lambda_.3} parent=87 // pred_check_branch
          %533 = sbr.rel (%p531) target = $region92
        $region91: #{_lambda_.3} parent=87 // pred_region
          %s534 = smul.u32 2, %s28
          %p535 = scmp.lt.s32.totalorder %s534, 3
          %s536 = scalar_select %p535, %s534, 3
          %s537 = smul.addr %s536, 8
          %s538 = scalar_lea.vmem %s0, %s537
          %s539 = smul.u32 2, %s28
        $region92: #{_lambda_.3} parent=87 // pred_fallthru
          _
      $region88: #{_lambda_.3} parent=5 // pred_fallthru
        _
      %p540 = scmp.le.s32.totalorder 1, %s28
      %p541 = scmp.lt.s32.totalorder %s28, 3
      %p542 = pnand %p540, %p541
      %p543 = pneg %p542
      // Predicated region
      $region93: #{_lambda_.3} parent=5 // pred_check
        _
      $region94: #{_lambda_.3} parent=5 // pred_check_branch
        %545 = sbr.rel (%p542) target = $region96
      $region95: #{_lambda_.3} parent=5 // pred_region
        %s546 = ssub.s32 %s28, 1
        %s547 = smul.u32 2, %s33
        %p548 = scmp.lt.s32.totalorder %s547, 3
        %s549 = scalar_select %p548, %s547, 3
        %s550 = smul.addr %s549, 8
        %s551 = scalar_lea.vmem %s0, %s550
        %p552 = pneg %p54
        %p553 = pneg %p51
        %p554 = pneg %p75
        %p555 = pneg %p72
        %p556 = pneg %p96
        %p557 = pneg %p93
        %p558 = pneg %p117
        %p559 = pneg %p114
        %p560 = pneg %p138
        %p561 = pneg %p135
        %p562 = pneg %p159
        %p563 = pneg %p156
        %p564 = pneg %p180
        %p565 = pneg %p177
        %p566 = pneg %p201
        %p567 = pneg %p198
        %p568 = pneg %p222
        %p569 = pneg %p219
        %p570 = pneg %p243
        %p571 = pneg %p240
        %p572 = pneg %p264
        %p573 = pneg %p261
        %p574 = pneg %p285
        %p575 = pneg %p282
        %p576 = pneg %p306
        %p577 = pneg %p303
        %p578 = pneg %p327
        %p579 = pneg %p324
        %p580 = pneg %p348
        %p581 = pneg %p345
        %p582 = pneg %p369
        %p583 = pneg %p366
        %p584 = pneg %p390
        %p585 = pneg %p387
        %p586 = pneg %p411
        %p587 = pneg %p408
        %p588 = pneg %p432
        %p589 = pneg %p429
        %p590 = pneg %p458
        %p591 = pneg %p455
        %s592 = sand.u32 %s445, 1
        %s593 = scalar_lea.sflag [#allocation3], %s592
        %s594 = sand.u32 %s445, 1
        %s595 = smul.addr %s594, 16
        %s596 = scalar_lea.vmem [#allocation2], %s595
        %s597 = smul.u32 2, %s33
        %p598 = scmp.lt.s32.totalorder %s597, 3
        %s599 = scalar_select %p598, %s597, 3
        %s600 = smul.addr %s599, 8
        %s601 = scalar_lea.vmem %s0, %s600
        %s602 = smul.u32 2, %s33
        %s603 = smul.u32 2, %s33
        %v605 = vld [vmem:[%s601] sm:$0xff]
        %v606 = vld [vmem:[%s601 + $0x8] sm:$0xff]
        %v607 = vlaneseq
        %v608 = vand.u32 %v607, 127
        %609 = vset.pattern.permute.xlu0 0
        %610 = vperm.xlu0 %609, %v605
        %v611 = vpop.permute.xlu0 %610
        %612 = vset.pattern.permute.xlu0 0
        %613 = vperm.xlu0 %612, %v606
        %v614 = vpop.permute.xlu0 %613
        %vm615 = vcmp.eq.s32.totalorder %v608, %v611
        %vm616 = vcmp.eq.s32.totalorder %v608, %v614
        %v617 = vsel %vm615, 1.0, 0.0
        %v618 = vsel %vm616, 1.0, 0.0
        %v619 = vpack.c.bf16 %v618, %v617
        %v620 = vld [vmem:[%s1] sm:$0xf]
        %v621 = vld [vmem:[%s1 + $0x4] sm:$0xf]
        %v622 = vld [vmem:[%s1 + $0x8] sm:$0xf]
        %v623 = vld [vmem:[%s1 + $0xc] sm:$0xf]
        %v624 = vld [vmem:[%s1 + $0x10] sm:$0xf]
        %v625 = vld [vmem:[%s1 + $0x14] sm:$0xf]
        %v626 = vld [vmem:[%s1 + $0x18] sm:$0xf]
        %v627 = vld [vmem:[%s1 + $0x1c] sm:$0xf]
        %v628 = vld [vmem:[%s1 + $0x20] sm:$0xf]
        %v629 = vld [vmem:[%s1 + $0x24] sm:$0xf]
        %v630 = vld [vmem:[%s1 + $0x28] sm:$0xf]
        %v631 = vld [vmem:[%s1 + $0x2c] sm:$0xf]
        %v632 = vld [vmem:[%s1 + $0x30] sm:$0xf]
        %v633 = vld [vmem:[%s1 + $0x34] sm:$0xf]
        %v634 = vld [vmem:[%s1 + $0x38] sm:$0xf]
        %v635 = vld [vmem:[%s1 + $0x3c] sm:$0xf]
        %v636 = vld [vmem:[%s2] sm:$0xff]
        %v637 = vld [vmem:[%s2 + $0x8] sm:$0xff]
        %v654 = vunpack.c.l.b16 %v620
        %v655 = vunpack.c.l.b16 %v621
        %v656 = vunpack.c.l.b16 %v622
        %v657 = vunpack.c.l.b16 %v623
        %v658 = vunpack.c.l.b16 %v624
        %v659 = vunpack.c.l.b16 %v625
        %v660 = vunpack.c.l.b16 %v626
        %v661 = vunpack.c.l.b16 %v627
        %v662 = vunpack.c.l.b16 %v628
        %v663 = vunpack.c.l.b16 %v629
        %v664 = vunpack.c.l.b16 %v630
        %v665 = vunpack.c.l.b16 %v631
        %v666 = vunpack.c.l.b16 %v632
        %v667 = vunpack.c.l.b16 %v633
        %v668 = vunpack.c.l.b16 %v634
        %v669 = vunpack.c.l.b16 %v635
        %v670 = vpack.c.b16 %v655, %v654
        %v671 = vpack.c.b16 %v657, %v656
        %v672 = vpack.c.b16 %v659, %v658
        %v673 = vpack.c.b16 %v661, %v660
        %v674 = vpack.c.b16 %v663, %v662
        %v675 = vpack.c.b16 %v665, %v664
        %v676 = vpack.c.b16 %v667, %v666
        %v677 = vpack.c.b16 %v669, %v668
        %686 = vmatprep.subr.bf16.mxu0 0
        %687 = vmatpush1.bf16.msra.mxu0 %v677
        %688 = vmatprep.subr.bf16.mxu0 0
        %689 = vmatpush1.bf16.msra.mxu0 %v676
        %690 = vmatprep.subr.bf16.mxu0 0
        %691 = vmatpush1.bf16.msra.mxu0 %v675
        %692 = vmatprep.subr.bf16.mxu0 0
        %693 = vmatpush1.bf16.msra.mxu0 %v674
        %694 = vmatprep.subr.bf16.mxu0 0
        %695 = vmatpush1.bf16.msra.mxu0 %v673
        %696 = vmatprep.subr.bf16.mxu0 0
        %697 = vmatpush1.bf16.msra.mxu0 %v672
        %698 = vmatprep.subr.bf16.mxu0 0
        %699 = vmatpush1.bf16.msra.mxu0 %v671
        %700 = vmatprep.subr.bf16.mxu0 0
        %701 = vmatpush1.bf16.msra.mxu0 %v670
        %702 = vmatprep.subr.bf16.mxu0 0
        %703 = vmatpush2.bf16.msra.mxu0 0
        %704 = vmatprep.subr.bf16.mxu0 0
        %705 = vmatpush2.bf16.msra.mxu0 0
        %706 = vmatprep.subr.bf16.mxu0 0
        %707 = vmatpush2.bf16.msra.mxu0 0
        %708 = vmatprep.subr.bf16.mxu0 0
        %709 = vmatpush2.bf16.msra.mxu0 0
        %710 = vmatprep.subr.bf16.mxu0 0
        %711 = vmatpush2.bf16.msra.mxu0 0
        %712 = vmatprep.subr.bf16.mxu0 0
        %713 = vmatpush2.bf16.msra.mxu0 0
        %714 = vmatprep.subr.bf16.mxu0 0
        %715 = vmatpush2.bf16.msra.mxu0 0
        %716 = vmatprep.subr.bf16.mxu0 0
        %717 = vmatpush2.bf16.msra.mxu0 0
        %718 = vmatprep.mubr.bf16.mxu0 0
        %719 = vmatmul.mubr.bf16.gmra.mxu0 %v619
        %v720 = vpop.f32.mrf.mxu0
        %v721 = vadd.f32 %v636, %v720
        %v722 = vpop.f32.mrf.mxu0
        %v723 = vpop.f32.mrf.mxu0
        %v724 = vadd.f32 %v637, %v723
        %v725 = vpop.f32.mrf.mxu0
        %726 = vdwg.mxu0
        %v727 = vld [vmem:[%s3] sm:$0x1]
        %v728 = vld [vmem:[%s4] sm:$0x1]
        %vm729 = vcmask 261120
        %v730 = vsel %vm729, %v721, 0.0
        %731 = vadd.xlane.f32.xlu0 %v730
        %v732 = vpop.xlane.xlu0 %731
        %v733 = vsel %vm729, %v724, 0.0
        %734 = vadd.xlane.f32.xlu0 %v733
        %v735 = vpop.xlane.xlu0 %734
        %v736 = vrcp.pop 32.0
        %v737 = vmul.f32 %v732, %v736
        %v738 = vmul.f32 %v735, %v736
        %v739 = vsub.f32 %v721, %v737
        %v740 = vsub.f32 %v724, %v738
        %v741 = vmul.f32 %v739, %v739
        %v742 = vmul.f32 %v740, %v740
        %v743 = vsel %vm729, %v741, 0.0
        %744 = vadd.xlane.f32.xlu0 %v743
        %v745 = vpop.xlane.xlu0 %744
        %v746 = vsel %vm729, %v742, 0.0
        %747 = vadd.xlane.f32.xlu0 %v746
        %v748 = vpop.xlane.xlu0 %747
        %v749 = vmul.f32 %v745, %v736
        %v750 = vmul.f32 %v748, %v736
        %v751 = vadd.f32 %v749, 1e-05
        %v752 = vadd.f32 %v750, 1e-05
        %v753 = vrsqrt.pop %v751
        %v754 = vrsqrt.pop %v752
        %v755 = vmul.f32 %v739, %v753
        %v756 = vmul.f32 %v740, %v754
        %v758 = vlaneseq
        %v759 = vshrl.u32 %v758, 7
        %v760 = vsub.s32 0, %v759
        %v761 = vrot.slane %v727, %v760
        %v763 = vmul.f32 %v755, %v761
        %v764 = vmul.f32 %v756, %v761
        %v766 = vlaneseq
        %v767 = vshrl.u32 %v766, 7
        %v768 = vsub.s32 0, %v767
        %v769 = vrot.slane %v728, %v768
        %v771 = vadd.f32 %v763, %v769
        %v772 = vadd.f32 %v764, %v769
        %v773 = vpack.c.bf16 %v772, %v771
        %v774 = vld [vmem:[%s5] sm:$0xf]
        %v775 = vld [vmem:[%s5 + $0x4] sm:$0xf]
        %v776 = vld [vmem:[%s5 + $0x8] sm:$0xf]
        %v777 = vld [vmem:[%s5 + $0xc] sm:$0xf]
        %v778 = vld [vmem:[%s6] sm:$0x1]
        %v780 = vlaneseq
        %v781 = vshrl.u32 %v780, 7
        %v782 = vsub.s32 0, %v781
        %v783 = vrot.slane %v778, %v782
        %v789 = vunpack.c.l.b16 %v774
        %v790 = vunpack.c.l.b16 %v775
        %v791 = vunpack.c.l.b16 %v776
        %v792 = vunpack.c.l.b16 %v777
        %v793 = vpack.c.b16 %v790, %v789
        %v794 = vpack.c.b16 %v792, %v791
        %v798 = vsel %vm729, %v773, 0
        %800 = vmatprep.subr.bf16.mxu0 0
        %801 = vmatpush1.bf16.msra.mxu0 0
        %802 = vmatprep.subr.bf16.mxu0 0
        %803 = vmatpush1.bf16.msra.mxu0 0
        %804 = vmatprep.subr.bf16.mxu0 0
        %805 = vmatpush1.bf16.msra.mxu0 0
        %806 = vmatprep.subr.bf16.mxu0 0
        %807 = vmatpush1.bf16.msra.mxu0 0
        %808 = vmatprep.subr.bf16.mxu0 0
        %809 = vmatpush1.bf16.msra.mxu0 0
        %810 = vmatprep.subr.bf16.mxu0 0
        %811 = vmatpush1.bf16.msra.mxu0 0
        %812 = vmatprep.subr.bf16.mxu0 0
        %813 = vmatpush1.bf16.msra.mxu0 %v794
        %814 = vmatprep.subr.bf16.mxu0 0
        %815 = vmatpush1.bf16.msra.mxu0 %v793
        %816 = vmatprep.subr.bf16.mxu0 0
        %817 = vmatpush2.bf16.msra.mxu0 0
        %818 = vmatprep.subr.bf16.mxu0 0
        %819 = vmatpush2.bf16.msra.mxu0 0
        %820 = vmatprep.subr.bf16.mxu0 0
        %821 = vmatpush2.bf16.msra.mxu0 0
        %822 = vmatprep.subr.bf16.mxu0 0
        %823 = vmatpush2.bf16.msra.mxu0 0
        %824 = vmatprep.subr.bf16.mxu0 0
        %825 = vmatpush2.bf16.msra.mxu0 0
        %826 = vmatprep.subr.bf16.mxu0 0
        %827 = vmatpush2.bf16.msra.mxu0 0
        %828 = vmatprep.subr.bf16.mxu0 0
        %829 = vmatpush2.bf16.msra.mxu0 0
        %830 = vmatprep.subr.bf16.mxu0 0
        %831 = vmatpush2.bf16.msra.mxu0 0
        %832 = vmatprep.mubr.bf16.mxu0 0
        %833 = vmatmul.mubr.bf16.gmra.mxu0 %v798
        %v834 = vpop.f32.mrf.mxu0
        %v835 = vadd.f32 %v783, %v834
        %v836 = vpop.f32.mrf.mxu0
        %v837 = vpop.f32.mrf.mxu0
        %v838 = vadd.f32 %v783, %v837
        %v839 = vpop.f32.mrf.mxu0
        %840 = vdwg.mxu0
        %v841 = vpack.c.bf16 %v838, %v835
        %843 = vrot.lane.b32.xlu0 %v841, 96
        %v844 = vpop.permute.xlu0 %843
        %vm845 = vcmask 64512
        %v847 = vsel %vm845, %v841, 0
        %v850 = vsel %vm845, %v844, 0
        %852 = vmatprep.subr.bf16.mxu0 0
        %853 = vmatpush1.bf16.xpose.msra.mxu0 0
        %854 = vmatprep.subr.bf16.mxu0 0
        %855 = vmatpush1.bf16.xpose.msra.mxu0 0
        %856 = vmatprep.subr.bf16.mxu0 0
        %857 = vmatpush1.bf16.xpose.msra.mxu0 0
        %858 = vmatprep.subr.bf16.mxu0 0
        %859 = vmatpush1.bf16.xpose.msra.mxu0 0
        %860 = vmatprep.subr.bf16.mxu0 0
        %861 = vmatpush1.bf16.xpose.msra.mxu0 0
        %862 = vmatprep.subr.bf16.mxu0 0
        %863 = vmatpush1.bf16.xpose.msra.mxu0 0
        %864 = vmatprep.subr.bf16.mxu0 0
        %865 = vmatpush1.bf16.xpose.msra.mxu0 0
        %866 = vmatprep.subr.bf16.mxu0 0
        %867 = vmatpush1.bf16.xpose.msra.mxu0 %v850
        %868 = vmatprep.subr.bf16.mxu0 0
        %869 = vmatpush2.bf16.xpose.msra.mxu0 0
        %870 = vmatprep.subr.bf16.mxu0 0
        %871 = vmatpush2.bf16.xpose.msra.mxu0 0
        %872 = vmatprep.subr.bf16.mxu0 0
        %873 = vmatpush2.bf16.xpose.msra.mxu0 0
        %874 = vmatprep.subr.bf16.mxu0 0
        %875 = vmatpush2.bf16.xpose.msra.mxu0 0
        %876 = vmatprep.subr.bf16.mxu0 0
        %877 = vmatpush2.bf16.xpose.msra.mxu0 0
        %878 = vmatprep.subr.bf16.mxu0 0
        %879 = vmatpush2.bf16.xpose.msra.mxu0 0
        %880 = vmatprep.subr.bf16.mxu0 0
        %881 = vmatpush2.bf16.xpose.msra.mxu0 0
        %882 = vmatprep.subr.bf16.mxu0 0
        %883 = vmatpush2.bf16.xpose.msra.mxu0 0
        %884 = vmatprep.mubr.bf16.mxu0 0
        %885 = vmatmul.mubr.bf16.gmra.mxu0 %v847
        %v886 = vpop.f32.mrf.mxu0
        %v887 = vadd.f32 0.0, %v886
        %v888 = vpop.f32.mrf.mxu0
        %v889 = vpop.f32.mrf.mxu0
        %v890 = vadd.f32 0.0, %v889
        %v891 = vpop.f32.mrf.mxu0
        %892 = vdwg.mxu0
        %v893 = vmul.f32 %v887, 0.35355338
        %v894 = vmul.f32 %v890, 0.35355338
        %vm895 = vcmask 130048
        %v896 = vsel %vm895, %v893, -inf
        %897 = vmax.xlane.f32.xlu0 %v896
        %v898 = vpop.xlane.xlu0 %897
        %v899 = vsel %vm895, %v894, -inf
        %900 = vmax.xlane.f32.xlu0 %v899
        %v901 = vpop.xlane.xlu0 %900
        %v902 = vsub.f32 %v893, %v898
        %v903 = vsub.f32 %v894, %v901
        %v904 = vmul.f32 %v902, 1.442695
        %v905 = vpow.pop %v904
        %v906 = vmul.f32 %v903, 1.442695
        %v907 = vpow.pop %v906
        %v908 = vsel %vm895, %v905, 0.0
        %909 = vadd.xlane.f32.xlu0 %v908
        %v910 = vpop.xlane.xlu0 %909
        %v911 = vsel %vm895, %v907, 0.0
        %912 = vadd.xlane.f32.xlu0 %v911
        %v913 = vpop.xlane.xlu0 %912
        %v914 = vrcp.pop %v910
        %v915 = vrcp.pop %v913
        %v916 = vmul.f32 %v905, %v914
        %v917 = vmul.f32 %v907, %v915
        %v918 = vpack.c.bf16 %v917, %v916
        %919 = vrot.lane.b32.xlu0 %v841, 64
        %v920 = vpop.permute.xlu0 %919
        %v923 = vsel %vm895, %v918, 0
        %925 = vmatprep.subr.bf16.mxu0 0
        %926 = vmatpush1.bf16.msra.mxu0 0
        %927 = vmatprep.subr.bf16.mxu0 0
        %928 = vmatpush1.bf16.msra.mxu0 0
        %929 = vmatprep.subr.bf16.mxu0 0
        %930 = vmatpush1.bf16.msra.mxu0 0
        %931 = vmatprep.subr.bf16.mxu0 0
        %932 = vmatpush1.bf16.msra.mxu0 0
        %933 = vmatprep.subr.bf16.mxu0 0
        %934 = vmatpush1.bf16.msra.mxu0 0
        %935 = vmatprep.subr.bf16.mxu0 0
        %936 = vmatpush1.bf16.msra.mxu0 0
        %937 = vmatprep.subr.bf16.mxu0 0
        %938 = vmatpush1.bf16.msra.mxu0 0
        %939 = vmatprep.subr.bf16.mxu0 0
        %940 = vmatpush1.bf16.msra.mxu0 %v920
        %941 = vmatprep.subr.bf16.mxu0 0
        %942 = vmatpush2.bf16.msra.mxu0 0
        %943 = vmatprep.subr.bf16.mxu0 0
        %944 = vmatpush2.bf16.msra.mxu0 0
        %945 = vmatprep.subr.bf16.mxu0 0
        %946 = vmatpush2.bf16.msra.mxu0 0
        %947 = vmatprep.subr.bf16.mxu0 0
        %948 = vmatpush2.bf16.msra.mxu0 0
        %949 = vmatprep.subr.bf16.mxu0 0
        %950 = vmatpush2.bf16.msra.mxu0 0
        %951 = vmatprep.subr.bf16.mxu0 0
        %952 = vmatpush2.bf16.msra.mxu0 0
        %953 = vmatprep.subr.bf16.mxu0 0
        %954 = vmatpush2.bf16.msra.mxu0 0
        %955 = vmatprep.subr.bf16.mxu0 0
        %956 = vmatpush2.bf16.msra.mxu0 0
        %957 = vmatprep.mubr.bf16.mxu0 0
        %958 = vmatmul.mubr.bf16.gmra.mxu0 %v923
        %v959 = vpop.f32.mrf.mxu0
        %v960 = vadd.f32 0.0, %v959
        %v961 = vpop.f32.mrf.mxu0
        %v962 = vpop.f32.mrf.mxu0
        %v963 = vadd.f32 0.0, %v962
        %v964 = vpop.f32.mrf.mxu0
        %965 = vdwg.mxu0
        %966 = vrot.lane.b32.xlu0 %v841, 120
        %v967 = vpop.permute.xlu0 %966
        %968 = vrot.lane.b32.xlu0 %v841, 88
        %v969 = vpop.permute.xlu0 %968
        %v971 = vsel %vm845, %v967, 0
        %v974 = vsel %vm845, %v969, 0
        %976 = vmatprep.subr.bf16.mxu0 0
        %977 = vmatpush1.bf16.xpose.msra.mxu0 0
        %978 = vmatprep.subr.bf16.mxu0 0
        %979 = vmatpush1.bf16.xpose.msra.mxu0 0
        %980 = vmatprep.subr.bf16.mxu0 0
        %981 = vmatpush1.bf16.xpose.msra.mxu0 0
        %982 = vmatprep.subr.bf16.mxu0 0
        %983 = vmatpush1.bf16.xpose.msra.mxu0 0
        %984 = vmatprep.subr.bf16.mxu0 0
        %985 = vmatpush1.bf16.xpose.msra.mxu0 0
        %986 = vmatprep.subr.bf16.mxu0 0
        %987 = vmatpush1.bf16.xpose.msra.mxu0 0
        %988 = vmatprep.subr.bf16.mxu0 0
        %989 = vmatpush1.bf16.xpose.msra.mxu0 0
        %990 = vmatprep.subr.bf16.mxu0 0
        %991 = vmatpush1.bf16.xpose.msra.mxu0 %v974
        %992 = vmatprep.subr.bf16.mxu0 0
        %993 = vmatpush2.bf16.xpose.msra.mxu0 0
        %994 = vmatprep.subr.bf16.mxu0 0
        %995 = vmatpush2.bf16.xpose.msra.mxu0 0
        %996 = vmatprep.subr.bf16.mxu0 0
        %997 = vmatpush2.bf16.xpose.msra.mxu0 0
        %998 = vmatprep.subr.bf16.mxu0 0
        %999 = vmatpush2.bf16.xpose.msra.mxu0 0
        %1000 = vmatprep.subr.bf16.mxu0 0
        %1001 = vmatpush2.bf16.xpose.msra.mxu0 0
        %1002 = vmatprep.subr.bf16.mxu0 0
        %1003 = vmatpush2.bf16.xpose.msra.mxu0 0
        %1004 = vmatprep.subr.bf16.mxu0 0
        %1005 = vmatpush2.bf16.xpose.msra.mxu0 0
        %1006 = vmatprep.subr.bf16.mxu0 0
        %1007 = vmatpush2.bf16.xpose.msra.mxu0 0
        %1008 = vmatprep.mubr.bf16.mxu0 0
        %1009 = vmatmul.mubr.bf16.gmra.mxu0 %v971
        %v1010 = vpop.f32.mrf.mxu0
        %v1011 = vadd.f32 0.0, %v1010
        %v1012 = vpop.f32.mrf.mxu0
        %v1013 = vpop.f32.mrf.mxu0
        %v1014 = vadd.f32 0.0, %v1013
        %v1015 = vpop.f32.mrf.mxu0
        %1016 = vdwg.mxu0
        %v1017 = vmul.f32 %v1011, 0.35355338
        %v1018 = vmul.f32 %v1014, 0.35355338
        %v1019 = vsel %vm895, %v1017, -inf
        %1020 = vmax.xlane.f32.xlu0 %v1019
        %v1021 = vpop.xlane.xlu0 %1020
        %v1022 = vsel %vm895, %v1018, -inf
        %1023 = vmax.xlane.f32.xlu0 %v1022
        %v1024 = vpop.xlane.xlu0 %1023
        %v1025 = vsub.f32 %v1017, %v1021
        %v1026 = vsub.f32 %v1018, %v1024
        %v1027 = vmul.f32 %v1025, 1.442695
        %v1028 = vpow.pop %v1027
        %v1029 = vmul.f32 %v1026, 1.442695
        %v1030 = vpow.pop %v1029
        %v1031 = vsel %vm895, %v1028, 0.0
        %1032 = vadd.xlane.f32.xlu0 %v1031
        %v1033 = vpop.xlane.xlu0 %1032
        %v1034 = vsel %vm895, %v1030, 0.0
        %1035 = vadd.xlane.f32.xlu0 %v1034
        %v1036 = vpop.xlane.xlu0 %1035
        %v1037 = vrcp.pop %v1033
        %v1038 = vrcp.pop %v1036
        %v1039 = vmul.f32 %v1028, %v1037
        %v1040 = vmul.f32 %v1030, %v1038
        %v1041 = vpack.c.bf16 %v1040, %v1039
        %1042 = vrot.lane.b32.xlu0 %v841, 56
        %v1043 = vpop.permute.xlu0 %1042
        %v1046 = vsel %vm895, %v1041, 0
        %1048 = vmatprep.subr.bf16.mxu0 0
        %1049 = vmatpush1.bf16.msra.mxu0 0
        %1050 = vmatprep.subr.bf16.mxu0 0
        %1051 = vmatpush1.bf16.msra.mxu0 0
        %1052 = vmatprep.subr.bf16.mxu0 0
        %1053 = vmatpush1.bf16.msra.mxu0 0
        %1054 = vmatprep.subr.bf16.mxu0 0
        %1055 = vmatpush1.bf16.msra.mxu0 0
        %1056 = vmatprep.subr.bf16.mxu0 0
        %1057 = vmatpush1.bf16.msra.mxu0 0
        %1058 = vmatprep.subr.bf16.mxu0 0
        %1059 = vmatpush1.bf16.msra.mxu0 0
        %1060 = vmatprep.subr.bf16.mxu0 0
        %1061 = vmatpush1.bf16.msra.mxu0 0
        %1062 = vmatprep.subr.bf16.mxu0 0
        %1063 = vmatpush1.bf16.msra.mxu0 %v1043
        %1064 = vmatprep.subr.bf16.mxu0 0
        %1065 = vmatpush2.bf16.msra.mxu0 0
        %1066 = vmatprep.subr.bf16.mxu0 0
        %1067 = vmatpush2.bf16.msra.mxu0 0
        %1068 = vmatprep.subr.bf16.mxu0 0
        %1069 = vmatpush2.bf16.msra.mxu0 0
        %1070 = vmatprep.subr.bf16.mxu0 0
        %1071 = vmatpush2.bf16.msra.mxu0 0
        %1072 = vmatprep.subr.bf16.mxu0 0
        %1073 = vmatpush2.bf16.msra.mxu0 0
        %1074 = vmatprep.subr.bf16.mxu0 0
        %1075 = vmatpush2.bf16.msra.mxu0 0
        %1076 = vmatprep.subr.bf16.mxu0 0
        %1077 = vmatpush2.bf16.msra.mxu0 0
        %1078 = vmatprep.subr.bf16.mxu0 0
        %1079 = vmatpush2.bf16.msra.mxu0 0
        %1080 = vmatprep.mubr.bf16.mxu0 0
        %1081 = vmatmul.mubr.bf16.gmra.mxu0 %v1046
        %v1082 = vpop.f32.mrf.mxu0
        %v1083 = vadd.f32 0.0, %v1082
        %v1084 = vpop.f32.mrf.mxu0
        %v1085 = vpop.f32.mrf.mxu0
        %v1086 = vadd.f32 0.0, %v1085
        %v1087 = vpop.f32.mrf.mxu0
        %1088 = vdwg.mxu0
        %1089 = vrot.lane.b32.xlu0 %v841, 112
        %v1090 = vpop.permute.xlu0 %1089
        %1091 = vrot.lane.b32.xlu0 %v841, 80
        %v1092 = vpop.permute.xlu0 %1091
        %v1094 = vsel %vm845, %v1090, 0
        %v1097 = vsel %vm845, %v1092, 0
        %1099 = vmatprep.subr.bf16.mxu0 0
        %1100 = vmatpush1.bf16.xpose.msra.mxu0 0
        %1101 = vmatprep.subr.bf16.mxu0 0
        %1102 = vmatpush1.bf16.xpose.msra.mxu0 0
        %1103 = vmatprep.subr.bf16.mxu0 0
        %1104 = vmatpush1.bf16.xpose.msra.mxu0 0
        %1105 = vmatprep.subr.bf16.mxu0 0
        %1106 = vmatpush1.bf16.xpose.msra.mxu0 0
        %1107 = vmatprep.subr.bf16.mxu0 0
        %1108 = vmatpush1.bf16.xpose.msra.mxu0 0
        %1109 = vmatprep.subr.bf16.mxu0 0
        %1110 = vmatpush1.bf16.xpose.msra.mxu0 0
        %1111 = vmatprep.subr.bf16.mxu0 0
        %1112 = vmatpush1.bf16.xpose.msra.mxu0 0
        %1113 = vmatprep.subr.bf16.mxu0 0
        %1114 = vmatpush1.bf16.xpose.msra.mxu0 %v1097
        %1115 = vmatprep.subr.bf16.mxu0 0
        %1116 = vmatpush2.bf16.xpose.msra.mxu0 0
        %1117 = vmatprep.subr.bf16.mxu0 0
        %1118 = vmatpush2.bf16.xpose.msra.mxu0 0
        %1119 = vmatprep.subr.bf16.mxu0 0
        %1120 = vmatpush2.bf16.xpose.msra.mxu0 0
        %1121 = vmatprep.subr.bf16.mxu0 0
        %1122 = vmatpush2.bf16.xpose.msra.mxu0 0
        %1123 = vmatprep.subr.bf16.mxu0 0
        %1124 = vmatpush2.bf16.xpose.msra.mxu0 0
        %1125 = vmatprep.subr.bf16.mxu0 0
        %1126 = vmatpush2.bf16.xpose.msra.mxu0 0
        %1127 = vmatprep.subr.bf16.mxu0 0
        %1128 = vmatpush2.bf16.xpose.msra.mxu0 0
        %1129 = vmatprep.subr.bf16.mxu0 0
        %1130 = vmatpush2.bf16.xpose.msra.mxu0 0
        %1131 = vmatprep.mubr.bf16.mxu0 0
        %1132 = vmatmul.mubr.bf16.gmra.mxu0 %v1094
        %v1133 = vpop.f32.mrf.mxu0
        %v1134 = vadd.f32 0.0, %v1133
        %v1135 = vpop.f32.mrf.mxu0
        %v1136 = vpop.f32.mrf.mxu0
        %v1137 = vadd.f32 0.0, %v1136
        %v1138 = vpop.f32.mrf.mxu0
        %1139 = vdwg.mxu0
        %v1140 = vmul.f32 %v1134, 0.35355338
        %v1141 = vmul.f32 %v1137, 0.35355338
        %v1142 = vsel %vm895, %v1140, -inf
        %1143 = vmax.xlane.f32.xlu0 %v1142
        %v1144 = vpop.xlane.xlu0 %1143
        %v1145 = vsel %vm895, %v1141, -inf
        %1146 = vmax.xlane.f32.xlu0 %v1145
        %v1147 = vpop.xlane.xlu0 %1146
        %v1148 = vsub.f32 %v1140, %v1144
        %v1149 = vsub.f32 %v1141, %v1147
        %v1150 = vmul.f32 %v1148, 1.442695
        %v1151 = vpow.pop %v1150
        %v1152 = vmul.f32 %v1149, 1.442695
        %v1153 = vpow.pop %v1152
        %v1154 = vsel %vm895, %v1151, 0.0
        %1155 = vadd.xlane.f32.xlu0 %v1154
        %v1156 = vpop.xlane.xlu0 %1155
        %v1157 = vsel %vm895, %v1153, 0.0
        %1158 = vadd.xlane.f32.xlu0 %v1157
        %v1159 = vpop.xlane.xlu0 %1158
        %v1160 = vrcp.pop %v1156
        %v1161 = vrcp.pop %v1159
        %v1162 = vmul.f32 %v1151, %v1160
        %v1163 = vmul.f32 %v1153, %v1161
        %v1164 = vpack.c.bf16 %v1163, %v1162
        %1165 = vrot.lane.b32.xlu0 %v841, 48
        %v1166 = vpop.permute.xlu0 %1165
        %v1169 = vsel %vm895, %v1164, 0
        %1171 = vmatprep.subr.bf16.mxu0 0
        %1172 = vmatpush1.bf16.msra.mxu0 0
        %1173 = vmatprep.subr.bf16.mxu0 0
        %1174 = vmatpush1.bf16.msra.mxu0 0
        %1175 = vmatprep.subr.bf16.mxu0 0
        %1176 = vmatpush1.bf16.msra.mxu0 0
        %1177 = vmatprep.subr.bf16.mxu0 0
        %1178 = vmatpush1.bf16.msra.mxu0 0
        %1179 = vmatprep.subr.bf16.mxu0 0
        %1180 = vmatpush1.bf16.msra.mxu0 0
        %1181 = vmatprep.subr.bf16.mxu0 0
        %1182 = vmatpush1.bf16.msra.mxu0 0
        %1183 = vmatprep.subr.bf16.mxu0 0
        %1184 = vmatpush1.bf16.msra.mxu0 0
        %1185 = vmatprep.subr.bf16.mxu0 0
        %1186 = vmatpush1.bf16.msra.mxu0 %v1166
        %1187 = vmatprep.subr.bf16.mxu0 0
        %1188 = vmatpush2.bf16.msra.mxu0 0
        %1189 = vmatprep.subr.bf16.mxu0 0
        %1190 = vmatpush2.bf16.msra.mxu0 0
        %1191 = vmatprep.subr.bf16.mxu0 0
        %1192 = vmatpush2.bf16.msra.mxu0 0
        %1193 = vmatprep.subr.bf16.mxu0 0
        %1194 = vmatpush2.bf16.msra.mxu0 0
        %1195 = vmatprep.subr.bf16.mxu0 0
        %1196 = vmatpush2.bf16.msra.mxu0 0
        %1197 = vmatprep.subr.bf16.mxu0 0
        %1198 = vmatpush2.bf16.msra.mxu0 0
        %1199 = vmatprep.subr.bf16.mxu0 0
        %1200 = vmatpush2.bf16.msra.mxu0 0
        %1201 = vmatprep.subr.bf16.mxu0 0
        %1202 = vmatpush2.bf16.msra.mxu0 0
        %1203 = vmatprep.mubr.bf16.mxu0 0
        %1204 = vmatmul.mubr.bf16.gmra.mxu0 %v1169
        %v1205 = vpop.f32.mrf.mxu0
        %v1206 = vadd.f32 0.0, %v1205
        %v1207 = vpop.f32.mrf.mxu0
        %v1208 = vpop.f32.mrf.mxu0
        %v1209 = vadd.f32 0.0, %v1208
        %v1210 = vpop.f32.mrf.mxu0
        %1211 = vdwg.mxu0
        %1212 = vrot.lane.b32.xlu0 %v841, 104
        %v1213 = vpop.permute.xlu0 %1212
        %1214 = vrot.lane.b32.xlu0 %v841, 72
        %v1215 = vpop.permute.xlu0 %1214
        %v1217 = vsel %vm845, %v1213, 0
        %v1220 = vsel %vm845, %v1215, 0
        %1222 = vmatprep.subr.bf16.mxu0 0
        %1223 = vmatpush1.bf16.xpose.msra.mxu0 0
        %1224 = vmatprep.subr.bf16.mxu0 0
        %1225 = vmatpush1.bf16.xpose.msra.mxu0 0
        %1226 = vmatprep.subr.bf16.mxu0 0
        %1227 = vmatpush1.bf16.xpose.msra.mxu0 0
        %1228 = vmatprep.subr.bf16.mxu0 0
        %1229 = vmatpush1.bf16.xpose.msra.mxu0 0
        %1230 = vmatprep.subr.bf16.mxu0 0
        %1231 = vmatpush1.bf16.xpose.msra.mxu0 0
        %1232 = vmatprep.subr.bf16.mxu0 0
        %1233 = vmatpush1.bf16.xpose.msra.mxu0 0
        %1234 = vmatprep.subr.bf16.mxu0 0
        %1235 = vmatpush1.bf16.xpose.msra.mxu0 0
        %1236 = vmatprep.subr.bf16.mxu0 0
        %1237 = vmatpush1.bf16.xpose.msra.mxu0 %v1220
        %1238 = vmatprep.subr.bf16.mxu0 0
        %1239 = vmatpush2.bf16.xpose.msra.mxu0 0
        %1240 = vmatprep.subr.bf16.mxu0 0
        %1241 = vmatpush2.bf16.xpose.msra.mxu0 0
        %1242 = vmatprep.subr.bf16.mxu0 0
        %1243 = vmatpush2.bf16.xpose.msra.mxu0 0
        %1244 = vmatprep.subr.bf16.mxu0 0
        %1245 = vmatpush2.bf16.xpose.msra.mxu0 0
        %1246 = vmatprep.subr.bf16.mxu0 0
        %1247 = vmatpush2.bf16.xpose.msra.mxu0 0
        %1248 = vmatprep.subr.bf16.mxu0 0
        %1249 = vmatpush2.bf16.xpose.msra.mxu0 0
        %1250 = vmatprep.subr.bf16.mxu0 0
        %1251 = vmatpush2.bf16.xpose.msra.mxu0 0
        %1252 = vmatprep.subr.bf16.mxu0 0
        %1253 = vmatpush2.bf16.xpose.msra.mxu0 0
        %1254 = vmatprep.mubr.bf16.mxu0 0
        %1255 = vmatmul.mubr.bf16.gmra.mxu0 %v1217
        %v1256 = vpop.f32.mrf.mxu0
        %v1257 = vadd.f32 0.0, %v1256
        %v1258 = vpop.f32.mrf.mxu0
        %v1259 = vpop.f32.mrf.mxu0
        %v1260 = vadd.f32 0.0, %v1259
        %v1261 = vpop.f32.mrf.mxu0
        %1262 = vdwg.mxu0
        %v1263 = vmul.f32 %v1257, 0.35355338
        %v1264 = vmul.f32 %v1260, 0.35355338
        %v1265 = vsel %vm895, %v1263, -inf
        %1266 = vmax.xlane.f32.xlu0 %v1265
        %v1267 = vpop.xlane.xlu0 %1266
        %v1268 = vsel %vm895, %v1264, -inf
        %1269 = vmax.xlane.f32.xlu0 %v1268
        %v1270 = vpop.xlane.xlu0 %1269
        %v1271 = vsub.f32 %v1263, %v1267
        %v1272 = vsub.f32 %v1264, %v1270
        %v1273 = vmul.f32 %v1271, 1.442695
        %v1274 = vpow.pop %v1273
        %v1275 = vmul.f32 %v1272, 1.442695
        %v1276 = vpow.pop %v1275
        %v1277 = vsel %vm895, %v1274, 0.0
        %1278 = vadd.xlane.f32.xlu0 %v1277
        %v1279 = vpop.xlane.xlu0 %1278
        %v1280 = vsel %vm895, %v1276, 0.0
        %1281 = vadd.xlane.f32.xlu0 %v1280
        %v1282 = vpop.xlane.xlu0 %1281
        %v1283 = vrcp.pop %v1279
        %v1284 = vrcp.pop %v1282
        %v1285 = vmul.f32 %v1274, %v1283
        %v1286 = vmul.f32 %v1276, %v1284
        %v1287 = vpack.c.bf16 %v1286, %v1285
        %1288 = vrot.lane.b32.xlu0 %v841, 40
        %v1289 = vpop.permute.xlu0 %1288
        %v1292 = vsel %vm895, %v1287, 0
        %1294 = vmatprep.subr.bf16.mxu0 0
        %1295 = vmatpush1.bf16.msra.mxu0 0
        %1296 = vmatprep.subr.bf16.mxu0 0
        %1297 = vmatpush1.bf16.msra.mxu0 0
        %1298 = vmatprep.subr.bf16.mxu0 0
        %1299 = vmatpush1.bf16.msra.mxu0 0
        %1300 = vmatprep.subr.bf16.mxu0 0
        %1301 = vmatpush1.bf16.msra.mxu0 0
        %1302 = vmatprep.subr.bf16.mxu0 0
        %1303 = vmatpush1.bf16.msra.mxu0 0
        %1304 = vmatprep.subr.bf16.mxu0 0
        %1305 = vmatpush1.bf16.msra.mxu0 0
        %1306 = vmatprep.subr.bf16.mxu0 0
        %1307 = vmatpush1.bf16.msra.mxu0 0
        %1308 = vmatprep.subr.bf16.mxu0 0
        %1309 = vmatpush1.bf16.msra.mxu0 %v1289
        %1310 = vmatprep.subr.bf16.mxu0 0
        %1311 = vmatpush2.bf16.msra.mxu0 0
        %1312 = vmatprep.subr.bf16.mxu0 0
        %1313 = vmatpush2.bf16.msra.mxu0 0
        %1314 = vmatprep.subr.bf16.mxu0 0
        %1315 = vmatpush2.bf16.msra.mxu0 0
        %1316 = vmatprep.subr.bf16.mxu0 0
        %1317 = vmatpush2.bf16.msra.mxu0 0
        %1318 = vmatprep.subr.bf16.mxu0 0
        %1319 = vmatpush2.bf16.msra.mxu0 0
        %1320 = vmatprep.subr.bf16.mxu0 0
        %1321 = vmatpush2.bf16.msra.mxu0 0
        %1322 = vmatprep.subr.bf16.mxu0 0
        %1323 = vmatpush2.bf16.msra.mxu0 0
        %1324 = vmatprep.subr.bf16.mxu0 0
        %1325 = vmatpush2.bf16.msra.mxu0 0
        %1326 = vmatprep.mubr.bf16.mxu0 0
        %1327 = vmatmul.mubr.bf16.gmra.mxu0 %v1292
        %v1328 = vpop.f32.mrf.mxu0
        %v1329 = vadd.f32 0.0, %v1328
        %v1330 = vpop.f32.mrf.mxu0
        %v1331 = vpop.f32.mrf.mxu0
        %v1332 = vadd.f32 0.0, %v1331
        %v1333 = vpop.f32.mrf.mxu0
        %1334 = vdwg.mxu0
        %1337 = vrot.lane.b32.xlu0 %v1083, 8
        %v1338 = vpop.permute.xlu0 %1337
        %1339 = vrot.lane.b32.xlu0 %v1086, 8
        %v1340 = vpop.permute.xlu0 %1339
        %1345 = vrot.lane.b32.xlu0 %v1206, 16
        %v1346 = vpop.permute.xlu0 %1345
        %1347 = vrot.lane.b32.xlu0 %v1209, 16
        %v1348 = vpop.permute.xlu0 %1347
        %1353 = vrot.lane.b32.xlu0 %v1329, 24
        %v1354 = vpop.permute.xlu0 %1353
        %1355 = vrot.lane.b32.xlu0 %v1332, 24
        %v1356 = vpop.permute.xlu0 %1355
        %v1359 = vsel %vm845, %v960, %v1338
        %v1360 = vsel %vm845, %v963, %v1340
        %v1361 = vsel %vm895, %v1359, %v1346
        %v1362 = vsel %vm895, %v1360, %v1348
        %vm1363 = vcmask 195584
        %v1364 = vsel %vm1363, %v1361, %v1354
        %v1365 = vsel %vm1363, %v1362, %v1356
        %v1366 = vpack.c.bf16 %v1365, %v1364
        %v1367 = vld [vmem:[%s7] sm:$0xf]
        %v1368 = vld [vmem:[%s7 + $0x4] sm:$0xf]
        %v1369 = vld [vmem:[%s7 + $0x8] sm:$0xf]
        %v1370 = vld [vmem:[%s7 + $0xc] sm:$0xf]
        %v1375 = vunpack.c.l.b16 %v1367
        %v1376 = vunpack.c.l.b16 %v1368
        %v1377 = vunpack.c.l.b16 %v1369
        %v1378 = vunpack.c.l.b16 %v1370
        %v1379 = vpack.c.b16 %v1376, %v1375
        %v1380 = vpack.c.b16 %v1378, %v1377
        %v1384 = vsel %vm729, %v1366, 0
        %1386 = vmatprep.subr.bf16.mxu0 0
        %1387 = vmatpush1.bf16.msra.mxu0 0
        %1388 = vmatprep.subr.bf16.mxu0 0
        %1389 = vmatpush1.bf16.msra.mxu0 0
        %1390 = vmatprep.subr.bf16.mxu0 0
        %1391 = vmatpush1.bf16.msra.mxu0 0
        %1392 = vmatprep.subr.bf16.mxu0 0
        %1393 = vmatpush1.bf16.msra.mxu0 0
        %1394 = vmatprep.subr.bf16.mxu0 0
        %1395 = vmatpush1.bf16.msra.mxu0 0
        %1396 = vmatprep.subr.bf16.mxu0 0
        %1397 = vmatpush1.bf16.msra.mxu0 0
        %1398 = vmatprep.subr.bf16.mxu0 0
        %1399 = vmatpush1.bf16.msra.mxu0 %v1380
        %1400 = vmatprep.subr.bf16.mxu0 0
        %1401 = vmatpush1.bf16.msra.mxu0 %v1379
        %1402 = vmatprep.subr.bf16.mxu0 0
        %1403 = vmatpush2.bf16.msra.mxu0 0
        %1404 = vmatprep.subr.bf16.mxu0 0
        %1405 = vmatpush2.bf16.msra.mxu0 0
        %1406 = vmatprep.subr.bf16.mxu0 0
        %1407 = vmatpush2.bf16.msra.mxu0 0
        %1408 = vmatprep.subr.bf16.mxu0 0
        %1409 = vmatpush2.bf16.msra.mxu0 0
        %1410 = vmatprep.subr.bf16.mxu0 0
        %1411 = vmatpush2.bf16.msra.mxu0 0
        %1412 = vmatprep.subr.bf16.mxu0 0
        %1413 = vmatpush2.bf16.msra.mxu0 0
        %1414 = vmatprep.subr.bf16.mxu0 0
        %1415 = vmatpush2.bf16.msra.mxu0 0
        %1416 = vmatprep.subr.bf16.mxu0 0
        %1417 = vmatpush2.bf16.msra.mxu0 0
        %1418 = vmatprep.mubr.bf16.mxu0 0
        %1419 = vmatmul.mubr.bf16.gmra.mxu0 %v1384
        %v1420 = vpop.f32.mrf.mxu0
        %v1421 = vadd.f32 0.0, %v1420
        %v1422 = vpop.f32.mrf.mxu0
        %v1423 = vpop.f32.mrf.mxu0
        %v1424 = vadd.f32 0.0, %v1423
        %v1425 = vpop.f32.mrf.mxu0
        %1426 = vdwg.mxu0
        %v1427 = vadd.f32 %v721, %v1421
        %v1428 = vadd.f32 %v724, %v1424
        %v1429 = vld [vmem:[%s8] sm:$0x1]
        %v1431 = vlaneseq
        %v1432 = vshrl.u32 %v1431, 7
        %v1433 = vsub.s32 0, %v1432
        %v1434 = vrot.slane %v1429, %v1433
        %v1436 = vadd.f32 %v1427, %v1434
        %v1437 = vadd.f32 %v1428, %v1434
        %v1438 = vld [vmem:[%s9] sm:$0x1]
        %v1439 = vld [vmem:[%s10] sm:$0x1]
        %v1440 = vsel %vm729, %v1436, 0.0
        %1441 = vadd.xlane.f32.xlu0 %v1440
        %v1442 = vpop.xlane.xlu0 %1441
        %v1443 = vsel %vm729, %v1437, 0.0
        %1444 = vadd.xlane.f32.xlu0 %v1443
        %v1445 = vpop.xlane.xlu0 %1444
        %v1446 = vmul.f32 %v1442, %v736
        %v1447 = vmul.f32 %v1445, %v736
        %v1448 = vsub.f32 %v1436, %v1446
        %v1449 = vsub.f32 %v1437, %v1447
        %v1450 = vmul.f32 %v1448, %v1448
        %v1451 = vmul.f32 %v1449, %v1449
        %v1452 = vsel %vm729, %v1450, 0.0
        %1453 = vadd.xlane.f32.xlu0 %v1452
        %v1454 = vpop.xlane.xlu0 %1453
        %v1455 = vsel %vm729, %v1451, 0.0
        %1456 = vadd.xlane.f32.xlu0 %v1455
        %v1457 = vpop.xlane.xlu0 %1456
        %v1458 = vmul.f32 %v1454, %v736
        %v1459 = vmul.f32 %v1457, %v736
        %v1460 = vadd.f32 %v1458, 1e-05
        %v1461 = vadd.f32 %v1459, 1e-05
        %v1462 = vrsqrt.pop %v1460
        %v1463 = vrsqrt.pop %v1461
        %v1464 = vmul.f32 %v1448, %v1462
        %v1465 = vmul.f32 %v1449, %v1463
        %v1467 = vlaneseq
        %v1468 = vshrl.u32 %v1467, 7
        %v1469 = vsub.s32 0, %v1468
        %v1470 = vrot.slane %v1438, %v1469
        %v1472 = vmul.f32 %v1464, %v1470
        %v1473 = vmul.f32 %v1465, %v1470
        %v1475 = vlaneseq
        %v1476 = vshrl.u32 %v1475, 7
        %v1477 = vsub.s32 0, %v1476
        %v1478 = vrot.slane %v1439, %v1477
        %v1480 = vadd.f32 %v1472, %v1478
        %v1481 = vadd.f32 %v1473, %v1478
        %v1482 = vpack.c.bf16 %v1481, %v1480
        %v1483 = vld [vmem:[%s11] sm:$0xf]
        %v1484 = vld [vmem:[%s11 + $0x4] sm:$0xf]
        %v1485 = vld [vmem:[%s11 + $0x8] sm:$0xf]
        %v1486 = vld [vmem:[%s11 + $0xc] sm:$0xf]
        %v1487 = vld [vmem:[%s12] sm:$0x1]
        %v1489 = vlaneseq
        %v1490 = vshrl.u32 %v1489, 7
        %v1491 = vsub.s32 0, %v1490
        %v1492 = vrot.slane %v1487, %v1491
        %v1498 = vunpack.c.l.b16 %v1483
        %v1499 = vunpack.c.l.b16 %v1484
        %v1500 = vunpack.c.l.b16 %v1485
        %v1501 = vunpack.c.l.b16 %v1486
        %v1502 = vpack.c.b16 %v1499, %v1498
        %v1503 = vpack.c.b16 %v1501, %v1500
        %v1507 = vsel %vm729, %v1482, 0
        %1509 = vmatprep.subr.bf16.mxu0 0
        %1510 = vmatpush1.bf16.msra.mxu0 0
        %1511 = vmatprep.subr.bf16.mxu0 0
        %1512 = vmatpush1.bf16.msra.mxu0 0
        %1513 = vmatprep.subr.bf16.mxu0 0
        %1514 = vmatpush1.bf16.msra.mxu0 0
        %1515 = vmatprep.subr.bf16.mxu0 0
        %1516 = vmatpush1.bf16.msra.mxu0 0
        %1517 = vmatprep.subr.bf16.mxu0 0
        %1518 = vmatpush1.bf16.msra.mxu0 0
        %1519 = vmatprep.subr.bf16.mxu0 0
        %1520 = vmatpush1.bf16.msra.mxu0 0
        %1521 = vmatprep.subr.bf16.mxu0 0
        %1522 = vmatpush1.bf16.msra.mxu0 %v1503
        %1523 = vmatprep.subr.bf16.mxu0 0
        %1524 = vmatpush1.bf16.msra.mxu0 %v1502
        %1525 = vmatprep.subr.bf16.mxu0 0
        %1526 = vmatpush2.bf16.msra.mxu0 0
        %1527 = vmatprep.subr.bf16.mxu0 0
        %1528 = vmatpush2.bf16.msra.mxu0 0
        %1529 = vmatprep.subr.bf16.mxu0 0
        %1530 = vmatpush2.bf16.msra.mxu0 0
        %1531 = vmatprep.subr.bf16.mxu0 0
        %1532 = vmatpush2.bf16.msra.mxu0 0
        %1533 = vmatprep.subr.bf16.mxu0 0
        %1534 = vmatpush2.bf16.msra.mxu0 0
        %1535 = vmatprep.subr.bf16.mxu0 0
        %1536 = vmatpush2.bf16.msra.mxu0 0
        %1537 = vmatprep.subr.bf16.mxu0 0
        %1538 = vmatpush2.bf16.msra.mxu0 0
        %1539 = vmatprep.subr.bf16.mxu0 0
        %1540 = vmatpush2.bf16.msra.mxu0 0
        %1541 = vmatprep.mubr.bf16.mxu0 0
        %1542 = vmatmul.mubr.bf16.gmra.mxu0 %v1507
        %v1543 = vpop.f32.mrf.mxu0
        %v1544 = vadd.f32 %v1492, %v1543
        %v1545 = vpop.f32.mrf.mxu0
        %v1546 = vpop.f32.mrf.mxu0
        %v1547 = vadd.f32 %v1492, %v1546
        %v1548 = vpop.f32.mrf.mxu0
        %1549 = vdwg.mxu0
        %v1550 = vmul.f32 %v1544, %v1544
        %v1551 = vmul.f32 %v1547, %v1547
        %v1552 = vmul.f32 %v1544, %v1550
        %v1553 = vmul.f32 %v1547, %v1551
        %v1554 = vmul.f32 %v1552, 0.044715
        %v1555 = vmul.f32 %v1553, 0.044715
        %v1556 = vadd.f32 %v1544, %v1554
        %v1557 = vadd.f32 %v1547, %v1555
        %v1558 = vmul.f32 %v1556, 0.7978846
        %v1559 = vmul.f32 %v1557, 0.7978846
        %v1560 = vtanh.pop %v1558
        %v1561 = vtanh.pop %v1559
        %v1562 = vadd.f32 %v1560, 1.0
        %v1563 = vadd.f32 %v1561, 1.0
        %v1564 = vmul.f32 %v1562, 0.5
        %v1565 = vmul.f32 %v1563, 0.5
        %v1566 = vmul.f32 %v1544, %v1564
        %v1567 = vmul.f32 %v1547, %v1565
        %v1568 = vpack.c.bf16 %v1567, %v1566
        %v1569 = vld [vmem:[%s13] sm:$0xf]
        %v1570 = vld [vmem:[%s13 + $0x4] sm:$0xf]
        %v1571 = vld [vmem:[%s13 + $0x8] sm:$0xf]
        %v1572 = vld [vmem:[%s13 + $0xc] sm:$0xf]
        %v1573 = vld [vmem:[%s13 + $0x10] sm:$0xf]
        %v1574 = vld [vmem:[%s13 + $0x14] sm:$0xf]
        %v1575 = vld [vmem:[%s13 + $0x18] sm:$0xf]
        %v1576 = vld [vmem:[%s13 + $0x1c] sm:$0xf]
        %v1577 = vld [vmem:[%s13 + $0x20] sm:$0xf]
        %v1578 = vld [vmem:[%s13 + $0x24] sm:$0xf]
        %v1579 = vld [vmem:[%s13 + $0x28] sm:$0xf]
        %v1580 = vld [vmem:[%s13 + $0x2c] sm:$0xf]
        %v1581 = vld [vmem:[%s13 + $0x30] sm:$0xf]
        %v1582 = vld [vmem:[%s13 + $0x34] sm:$0xf]
        %v1583 = vld [vmem:[%s13 + $0x38] sm:$0xf]
        %v1584 = vld [vmem:[%s13 + $0x3c] sm:$0xf]
        %v1601 = vunpack.c.l.b16 %v1569
        %v1602 = vunpack.c.l.b16 %v1570
        %v1603 = vunpack.c.l.b16 %v1571
        %v1604 = vunpack.c.l.b16 %v1572
        %v1605 = vunpack.c.l.b16 %v1573
        %v1606 = vunpack.c.l.b16 %v1574
        %v1607 = vunpack.c.l.b16 %v1575
        %v1608 = vunpack.c.l.b16 %v1576
        %v1609 = vunpack.c.l.b16 %v1577
        %v1610 = vunpack.c.l.b16 %v1578
        %v1611 = vunpack.c.l.b16 %v1579
        %v1612 = vunpack.c.l.b16 %v1580
        %v1613 = vunpack.c.l.b16 %v1581
        %v1614 = vunpack.c.l.b16 %v1582
        %v1615 = vunpack.c.l.b16 %v1583
        %v1616 = vunpack.c.l.b16 %v1584
        %v1617 = vpack.c.b16 %v1602, %v1601
        %v1618 = vpack.c.b16 %v1604, %v1603
        %v1619 = vpack.c.b16 %v1606, %v1605
        %v1620 = vpack.c.b16 %v1608, %v1607
        %v1621 = vpack.c.b16 %v1610, %v1609
        %v1622 = vpack.c.b16 %v1612, %v1611
        %v1623 = vpack.c.b16 %v1614, %v1613
        %v1624 = vpack.c.b16 %v1616, %v1615
        %1633 = vmatprep.subr.bf16.mxu0 0
        %1634 = vmatpush1.bf16.msra.mxu0 %v1624
        %1635 = vmatprep.subr.bf16.mxu0 0
        %1636 = vmatpush1.bf16.msra.mxu0 %v1623
        %1637 = vmatprep.subr.bf16.mxu0 0
        %1638 = vmatpush1.bf16.msra.mxu0 %v1622
        %1639 = vmatprep.subr.bf16.mxu0 0
        %1640 = vmatpush1.bf16.msra.mxu0 %v1621
        %1641 = vmatprep.subr.bf16.mxu0 0
        %1642 = vmatpush1.bf16.msra.mxu0 %v1620
        %1643 = vmatprep.subr.bf16.mxu0 0
        %1644 = vmatpush1.bf16.msra.mxu0 %v1619
        %1645 = vmatprep.subr.bf16.mxu0 0
        %1646 = vmatpush1.bf16.msra.mxu0 %v1618
        %1647 = vmatprep.subr.bf16.mxu0 0
        %1648 = vmatpush1.bf16.msra.mxu0 %v1617
        %1649 = vmatprep.subr.bf16.mxu0 0
        %1650 = vmatpush2.bf16.msra.mxu0 0
        %1651 = vmatprep.subr.bf16.mxu0 0
        %1652 = vmatpush2.bf16.msra.mxu0 0
        %1653 = vmatprep.subr.bf16.mxu0 0
        %1654 = vmatpush2.bf16.msra.mxu0 0
        %1655 = vmatprep.subr.bf16.mxu0 0
        %1656 = vmatpush2.bf16.msra.mxu0 0
        %1657 = vmatprep.subr.bf16.mxu0 0
        %1658 = vmatpush2.bf16.msra.mxu0 0
        %1659 = vmatprep.subr.bf16.mxu0 0
        %1660 = vmatpush2.bf16.msra.mxu0 0
        %1661 = vmatprep.subr.bf16.mxu0 0
        %1662 = vmatpush2.bf16.msra.mxu0 0
        %1663 = vmatprep.subr.bf16.mxu0 0
        %1664 = vmatpush2.bf16.msra.mxu0 0
        %1665 = vmatprep.mubr.bf16.mxu0 0
        %1666 = vmatmul.mubr.bf16.gmra.mxu0 %v1568
        %v1667 = vpop.f32.mrf.mxu0
        %v1668 = vadd.f32 0.0, %v1667
        %v1669 = vpop.f32.mrf.mxu0
        %v1670 = vpop.f32.mrf.mxu0
        %v1671 = vadd.f32 0.0, %v1670
        %v1672 = vpop.f32.mrf.mxu0
        %1673 = vdwg.mxu0
        %v1674 = vadd.f32 %v1436, %v1668
        %v1675 = vadd.f32 %v1437, %v1671
        %v1676 = vld [vmem:[%s14] sm:$0x1]
        %v1678 = vlaneseq
        %v1679 = vshrl.u32 %v1678, 7
        %v1680 = vsub.s32 0, %v1679
        %v1681 = vrot.slane %v1676, %v1680
        %v1683 = vadd.f32 %v1674, %v1681
        %v1684 = vadd.f32 %v1675, %v1681
        %s1685 = scalar_lea.vmem %s3, 1
        %v1686 = vld [vmem:[%s1685] sm:$0x1]
        %s1687 = scalar_lea.vmem %s4, 1
        %v1688 = vld [vmem:[%s1687] sm:$0x1]
        %v1689 = vsel %vm729, %v1683, 0.0
        %1690 = vadd.xlane.f32.xlu0 %v1689
        %v1691 = vpop.xlane.xlu0 %1690
        %v1692 = vsel %vm729, %v1684, 0.0
        %1693 = vadd.xlane.f32.xlu0 %v1692
        %v1694 = vpop.xlane.xlu0 %1693
        %v1695 = vmul.f32 %v1691, %v736
        %v1696 = vmul.f32 %v1694, %v736
        %v1697 = vsub.f32 %v1683, %v1695
        %v1698 = vsub.f32 %v1684, %v1696
        %v1699 = vmul.f32 %v1697, %v1697
        %v1700 = vmul.f32 %v1698, %v1698
        %v1701 = vsel %vm729, %v1699, 0.0
        %1702 = vadd.xlane.f32.xlu0 %v1701
        %v1703 = vpop.xlane.xlu0 %1702
        %v1704 = vsel %vm729, %v1700, 0.0
        %1705 = vadd.xlane.f32.xlu0 %v1704
        %v1706 = vpop.xlane.xlu0 %1705
        %v1707 = vmul.f32 %v1703, %v736
        %v1708 = vmul.f32 %v1706, %v736
        %v1709 = vadd.f32 %v1707, 1e-05
        %v1710 = vadd.f32 %v1708, 1e-05
        %v1711 = vrsqrt.pop %v1709
        %v1712 = vrsqrt.pop %v1710
        %v1713 = vmul.f32 %v1697, %v1711
        %v1714 = vmul.f32 %v1698, %v1712
        %v1716 = vlaneseq
        %v1717 = vshrl.u32 %v1716, 7
        %v1718 = vsub.s32 0, %v1717
        %v1719 = vrot.slane %v1686, %v1718
        %v1721 = vmul.f32 %v1713, %v1719
        %v1722 = vmul.f32 %v1714, %v1719
        %v1724 = vlaneseq
        %v1725 = vshrl.u32 %v1724, 7
        %v1726 = vsub.s32 0, %v1725
        %v1727 = vrot.slane %v1688, %v1726
        %v1729 = vadd.f32 %v1721, %v1727
        %v1730 = vadd.f32 %v1722, %v1727
        %v1731 = vpack.c.bf16 %v1730, %v1729
        %s1732 = scalar_lea.vmem %s5, 16
        %v1733 = vld [vmem:[%s1732] sm:$0xf]
        %v1734 = vld [vmem:[%s1732 + $0x4] sm:$0xf]
        %v1735 = vld [vmem:[%s1732 + $0x8] sm:$0xf]
        %v1736 = vld [vmem:[%s1732 + $0xc] sm:$0xf]
        %s1737 = scalar_lea.vmem %s6, 1
        %v1738 = vld [vmem:[%s1737] sm:$0x1]
        %v1740 = vlaneseq
        %v1741 = vshrl.u32 %v1740, 7
        %v1742 = vsub.s32 0, %v1741
        %v1743 = vrot.slane %v1738, %v1742
        %v1749 = vunpack.c.l.b16 %v1733
        %v1750 = vunpack.c.l.b16 %v1734
        %v1751 = vunpack.c.l.b16 %v1735
        %v1752 = vunpack.c.l.b16 %v1736
        %v1753 = vpack.c.b16 %v1750, %v1749
        %v1754 = vpack.c.b16 %v1752, %v1751
        %v1758 = vsel %vm729, %v1731, 0
        %1760 = vmatprep.subr.bf16.mxu0 0
        %1761 = vmatpush1.bf16.msra.mxu0 0
        %1762 = vmatprep.subr.bf16.mxu0 0
        %1763 = vmatpush1.bf16.msra.mxu0 0
        %1764 = vmatprep.subr.bf16.mxu0 0
        %1765 = vmatpush1.bf16.msra.mxu0 0
        %1766 = vmatprep.subr.bf16.mxu0 0
        %1767 = vmatpush1.bf16.msra.mxu0 0
        %1768 = vmatprep.subr.bf16.mxu0 0
        %1769 = vmatpush1.bf16.msra.mxu0 0
        %1770 = vmatprep.subr.bf16.mxu0 0
        %1771 = vmatpush1.bf16.msra.mxu0 0
        %1772 = vmatprep.subr.bf16.mxu0 0
        %1773 = vmatpush1.bf16.msra.mxu0 %v1754
        %1774 = vmatprep.subr.bf16.mxu0 0
        %1775 = vmatpush1.bf16.msra.mxu0 %v1753
        %1776 = vmatprep.subr.bf16.mxu0 0
        %1777 = vmatpush2.bf16.msra.mxu0 0
        %1778 = vmatprep.subr.bf16.mxu0 0
        %1779 = vmatpush2.bf16.msra.mxu0 0
        %1780 = vmatprep.subr.bf16.mxu0 0
        %1781 = vmatpush2.bf16.msra.mxu0 0
        %1782 = vmatprep.subr.bf16.mxu0 0
        %1783 = vmatpush2.bf16.msra.mxu0 0
        %1784 = vmatprep.subr.bf16.mxu0 0
        %1785 = vmatpush2.bf16.msra.mxu0 0
        %1786 = vmatprep.subr.bf16.mxu0 0
        %1787 = vmatpush2.bf16.msra.mxu0 0
        %1788 = vmatprep.subr.bf16.mxu0 0
        %1789 = vmatpush2.bf16.msra.mxu0 0
        %1790 = vmatprep.subr.bf16.mxu0 0
        %1791 = vmatpush2.bf16.msra.mxu0 0
        %1792 = vmatprep.mubr.bf16.mxu0 0
        %1793 = vmatmul.mubr.bf16.gmra.mxu0 %v1758
        %v1794 = vpop.f32.mrf.mxu0
        %v1795 = vadd.f32 %v1743, %v1794
        %v1796 = vpop.f32.mrf.mxu0
        %v1797 = vpop.f32.mrf.mxu0
        %v1798 = vadd.f32 %v1743, %v1797
        %v1799 = vpop.f32.mrf.mxu0
        %1800 = vdwg.mxu0
        %v1801 = vpack.c.bf16 %v1798, %v1795
        %1803 = vrot.lane.b32.xlu0 %v1801, 96
        %v1804 = vpop.permute.xlu0 %1803
        %v1806 = vsel %vm845, %v1801, 0
        %v1809 = vsel %vm845, %v1804, 0
        %1811 = vmatprep.subr.bf16.mxu0 0
        %1812 = vmatpush1.bf16.xpose.msra.mxu0 0
        %1813 = vmatprep.subr.bf16.mxu0 0
        %1814 = vmatpush1.bf16.xpose.msra.mxu0 0
        %1815 = vmatprep.subr.bf16.mxu0 0
        %1816 = vmatpush1.bf16.xpose.msra.mxu0 0
        %1817 = vmatprep.subr.bf16.mxu0 0
        %1818 = vmatpush1.bf16.xpose.msra.mxu0 0
        %1819 = vmatprep.subr.bf16.mxu0 0
        %1820 = vmatpush1.bf16.xpose.msra.mxu0 0
        %1821 = vmatprep.subr.bf16.mxu0 0
        %1822 = vmatpush1.bf16.xpose.msra.mxu0 0
        %1823 = vmatprep.subr.bf16.mxu0 0
        %1824 = vmatpush1.bf16.xpose.msra.mxu0 0
        %1825 = vmatprep.subr.bf16.mxu0 0
        %1826 = vmatpush1.bf16.xpose.msra.mxu0 %v1809
        %1827 = vmatprep.subr.bf16.mxu0 0
        %1828 = vmatpush2.bf16.xpose.msra.mxu0 0
        %1829 = vmatprep.subr.bf16.mxu0 0
        %1830 = vmatpush2.bf16.xpose.msra.mxu0 0
        %1831 = vmatprep.subr.bf16.mxu0 0
        %1832 = vmatpush2.bf16.xpose.msra.mxu0 0
        %1833 = vmatprep.subr.bf16.mxu0 0
        %1834 = vmatpush2.bf16.xpose.msra.mxu0 0
        %1835 = vmatprep.subr.bf16.mxu0 0
        %1836 = vmatpush2.bf16.xpose.msra.mxu0 0
        %1837 = vmatprep.subr.bf16.mxu0 0
        %1838 = vmatpush2.bf16.xpose.msra.mxu0 0
        %1839 = vmatprep.subr.bf16.mxu0 0
        %1840 = vmatpush2.bf16.xpose.msra.mxu0 0
        %1841 = vmatprep.subr.bf16.mxu0 0
        %1842 = vmatpush2.bf16.xpose.msra.mxu0 0
        %1843 = vmatprep.mubr.bf16.mxu0 0
        %1844 = vmatmul.mubr.bf16.gmra.mxu0 %v1806
        %v1845 = vpop.f32.mrf.mxu0
        %v1846 = vadd.f32 0.0, %v1845
        %v1847 = vpop.f32.mrf.mxu0
        %v1848 = vpop.f32.mrf.mxu0
        %v1849 = vadd.f32 0.0, %v1848
        %v1850 = vpop.f32.mrf.mxu0
        %1851 = vdwg.mxu0
        %v1852 = vmul.f32 %v1846, 0.35355338
        %v1853 = vmul.f32 %v1849, 0.35355338
        %v1854 = vsel %vm895, %v1852, -inf
        %1855 = vmax.xlane.f32.xlu0 %v1854
        %v1856 = vpop.xlane.xlu0 %1855
        %v1857 = vsel %vm895, %v1853, -inf
        %1858 = vmax.xlane.f32.xlu0 %v1857
        %v1859 = vpop.xlane.xlu0 %1858
        %v1860 = vsub.f32 %v1852, %v1856
        %v1861 = vsub.f32 %v1853, %v1859
        %v1862 = vmul.f32 %v1860, 1.442695
        %v1863 = vpow.pop %v1862
        %v1864 = vmul.f32 %v1861, 1.442695
        %v1865 = vpow.pop %v1864
        %v1866 = vsel %vm895, %v1863, 0.0
        %1867 = vadd.xlane.f32.xlu0 %v1866
        %v1868 = vpop.xlane.xlu0 %1867
        %v1869 = vsel %vm895, %v1865, 0.0
        %1870 = vadd.xlane.f32.xlu0 %v1869
        %v1871 = vpop.xlane.xlu0 %1870
        %v1872 = vrcp.pop %v1868
        %v1873 = vrcp.pop %v1871
        %v1874 = vmul.f32 %v1863, %v1872
        %v1875 = vmul.f32 %v1865, %v1873
        %v1876 = vpack.c.bf16 %v1875, %v1874
        %1877 = vrot.lane.b32.xlu0 %v1801, 64
        %v1878 = vpop.permute.xlu0 %1877
        %v1881 = vsel %vm895, %v1876, 0
        %1883 = vmatprep.subr.bf16.mxu0 0
        %1884 = vmatpush1.bf16.msra.mxu0 0
        %1885 = vmatprep.subr.bf16.mxu0 0
        %1886 = vmatpush1.bf16.msra.mxu0 0
        %1887 = vmatprep.subr.bf16.mxu0 0
        %1888 = vmatpush1.bf16.msra.mxu0 0
        %1889 = vmatprep.subr.bf16.mxu0 0
        %1890 = vmatpush1.bf16.msra.mxu0 0
        %1891 = vmatprep.subr.bf16.mxu0 0
        %1892 = vmatpush1.bf16.msra.mxu0 0
        %1893 = vmatprep.subr.bf16.mxu0 0
        %1894 = vmatpush1.bf16.msra.mxu0 0
        %1895 = vmatprep.subr.bf16.mxu0 0
        %1896 = vmatpush1.bf16.msra.mxu0 0
        %1897 = vmatprep.subr.bf16.mxu0 0
        %1898 = vmatpush1.bf16.msra.mxu0 %v1878
        %1899 = vmatprep.subr.bf16.mxu0 0
        %1900 = vmatpush2.bf16.msra.mxu0 0
        %1901 = vmatprep.subr.bf16.mxu0 0
        %1902 = vmatpush2.bf16.msra.mxu0 0
        %1903 = vmatprep.subr.bf16.mxu0 0
        %1904 = vmatpush2.bf16.msra.mxu0 0
        %1905 = vmatprep.subr.bf16.mxu0 0
        %1906 = vmatpush2.bf16.msra.mxu0 0
        %1907 = vmatprep.subr.bf16.mxu0 0
        %1908 = vmatpush2.bf16.msra.mxu0 0
        %1909 = vmatprep.subr.bf16.mxu0 0
        %1910 = vmatpush2.bf16.msra.mxu0 0
        %1911 = vmatprep.subr.bf16.mxu0 0
        %1912 = vmatpush2.bf16.msra.mxu0 0
        %1913 = vmatprep.subr.bf16.mxu0 0
        %1914 = vmatpush2.bf16.msra.mxu0 0
        %1915 = vmatprep.mubr.bf16.mxu0 0
        %1916 = vmatmul.mubr.bf16.gmra.mxu0 %v1881
        %v1917 = vpop.f32.mrf.mxu0
        %v1918 = vadd.f32 0.0, %v1917
        %v1919 = vpop.f32.mrf.mxu0
        %v1920 = vpop.f32.mrf.mxu0
        %v1921 = vadd.f32 0.0, %v1920
        %v1922 = vpop.f32.mrf.mxu0
        %1923 = vdwg.mxu0
        %1924 = vrot.lane.b32.xlu0 %v1801, 120
        %v1925 = vpop.permute.xlu0 %1924
        %1926 = vrot.lane.b32.xlu0 %v1801, 88
        %v1927 = vpop.permute.xlu0 %1926
        %v1929 = vsel %vm845, %v1925, 0
        %v1932 = vsel %vm845, %v1927, 0
        %1934 = vmatprep.subr.bf16.mxu0 0
        %1935 = vmatpush1.bf16.xpose.msra.mxu0 0
        %1936 = vmatprep.subr.bf16.mxu0 0
        %1937 = vmatpush1.bf16.xpose.msra.mxu0 0
        %1938 = vmatprep.subr.bf16.mxu0 0
        %1939 = vmatpush1.bf16.xpose.msra.mxu0 0
        %1940 = vmatprep.subr.bf16.mxu0 0
        %1941 = vmatpush1.bf16.xpose.msra.mxu0 0
        %1942 = vmatprep.subr.bf16.mxu0 0
        %1943 = vmatpush1.bf16.xpose.msra.mxu0 0
        %1944 = vmatprep.subr.bf16.mxu0 0
        %1945 = vmatpush1.bf16.xpose.msra.mxu0 0
        %1946 = vmatprep.subr.bf16.mxu0 0
        %1947 = vmatpush1.bf16.xpose.msra.mxu0 0
        %1948 = vmatprep.subr.bf16.mxu0 0
        %1949 = vmatpush1.bf16.xpose.msra.mxu0 %v1932
        %1950 = vmatprep.subr.bf16.mxu0 0
        %1951 = vmatpush2.bf16.xpose.msra.mxu0 0
        %1952 = vmatprep.subr.bf16.mxu0 0
        %1953 = vmatpush2.bf16.xpose.msra.mxu0 0
        %1954 = vmatprep.subr.bf16.mxu0 0
        %1955 = vmatpush2.bf16.xpose.msra.mxu0 0
        %1956 = vmatprep.subr.bf16.mxu0 0
        %1957 = vmatpush2.bf16.xpose.msra.mxu0 0
        %1958 = vmatprep.subr.bf16.mxu0 0
        %1959 = vmatpush2.bf16.xpose.msra.mxu0 0
        %1960 = vmatprep.subr.bf16.mxu0 0
        %1961 = vmatpush2.bf16.xpose.msra.mxu0 0
        %1962 = vmatprep.subr.bf16.mxu0 0
        %1963 = vmatpush2.bf16.xpose.msra.mxu0 0
        %1964 = vmatprep.subr.bf16.mxu0 0
        %1965 = vmatpush2.bf16.xpose.msra.mxu0 0
        %1966 = vmatprep.mubr.bf16.mxu0 0
        %1967 = vmatmul.mubr.bf16.gmra.mxu0 %v1929
        %v1968 = vpop.f32.mrf.mxu0
        %v1969 = vadd.f32 0.0, %v1968
        %v1970 = vpop.f32.mrf.mxu0
        %v1971 = vpop.f32.mrf.mxu0
        %v1972 = vadd.f32 0.0, %v1971
        %v1973 = vpop.f32.mrf.mxu0
        %1974 = vdwg.mxu0
        %v1975 = vmul.f32 %v1969, 0.35355338
        %v1976 = vmul.f32 %v1972, 0.35355338
        %v1977 = vsel %vm895, %v1975, -inf
        %1978 = vmax.xlane.f32.xlu0 %v1977
        %v1979 = vpop.xlane.xlu0 %1978
        %v1980 = vsel %vm895, %v1976, -inf
        %1981 = vmax.xlane.f32.xlu0 %v1980
        %v1982 = vpop.xlane.xlu0 %1981
        %v1983 = vsub.f32 %v1975, %v1979
        %v1984 = vsub.f32 %v1976, %v1982
        %v1985 = vmul.f32 %v1983, 1.442695
        %v1986 = vpow.pop %v1985
        %v1987 = vmul.f32 %v1984, 1.442695
        %v1988 = vpow.pop %v1987
        %v1989 = vsel %vm895, %v1986, 0.0
        %1990 = vadd.xlane.f32.xlu0 %v1989
        %v1991 = vpop.xlane.xlu0 %1990
        %v1992 = vsel %vm895, %v1988, 0.0
        %1993 = vadd.xlane.f32.xlu0 %v1992
        %v1994 = vpop.xlane.xlu0 %1993
        %v1995 = vrcp.pop %v1991
        %v1996 = vrcp.pop %v1994
        %v1997 = vmul.f32 %v1986, %v1995
        %v1998 = vmul.f32 %v1988, %v1996
        %v1999 = vpack.c.bf16 %v1998, %v1997
        %2000 = vrot.lane.b32.xlu0 %v1801, 56
        %v2001 = vpop.permute.xlu0 %2000
        %v2004 = vsel %vm895, %v1999, 0
        %2006 = vmatprep.subr.bf16.mxu0 0
        %2007 = vmatpush1.bf16.msra.mxu0 0
        %2008 = vmatprep.subr.bf16.mxu0 0
        %2009 = vmatpush1.bf16.msra.mxu0 0
        %2010 = vmatprep.subr.bf16.mxu0 0
        %2011 = vmatpush1.bf16.msra.mxu0 0
        %2012 = vmatprep.subr.bf16.mxu0 0
        %2013 = vmatpush1.bf16.msra.mxu0 0
        %2014 = vmatprep.subr.bf16.mxu0 0
        %2015 = vmatpush1.bf16.msra.mxu0 0
        %2016 = vmatprep.subr.bf16.mxu0 0
        %2017 = vmatpush1.bf16.msra.mxu0 0
        %2018 = vmatprep.subr.bf16.mxu0 0
        %2019 = vmatpush1.bf16.msra.mxu0 0
        %2020 = vmatprep.subr.bf16.mxu0 0
        %2021 = vmatpush1.bf16.msra.mxu0 %v2001
        %2022 = vmatprep.subr.bf16.mxu0 0
        %2023 = vmatpush2.bf16.msra.mxu0 0
        %2024 = vmatprep.subr.bf16.mxu0 0
        %2025 = vmatpush2.bf16.msra.mxu0 0
        %2026 = vmatprep.subr.bf16.mxu0 0
        %2027 = vmatpush2.bf16.msra.mxu0 0
        %2028 = vmatprep.subr.bf16.mxu0 0
        %2029 = vmatpush2.bf16.msra.mxu0 0
        %2030 = vmatprep.subr.bf16.mxu0 0
        %2031 = vmatpush2.bf16.msra.mxu0 0
        %2032 = vmatprep.subr.bf16.mxu0 0
        %2033 = vmatpush2.bf16.msra.mxu0 0
        %2034 = vmatprep.subr.bf16.mxu0 0
        %2035 = vmatpush2.bf16.msra.mxu0 0
        %2036 = vmatprep.subr.bf16.mxu0 0
        %2037 = vmatpush2.bf16.msra.mxu0 0
        %2038 = vmatprep.mubr.bf16.mxu0 0
        %2039 = vmatmul.mubr.bf16.gmra.mxu0 %v2004
        %v2040 = vpop.f32.mrf.mxu0
        %v2041 = vadd.f32 0.0, %v2040
        %v2042 = vpop.f32.mrf.mxu0
        %v2043 = vpop.f32.mrf.mxu0
        %v2044 = vadd.f32 0.0, %v2043
        %v2045 = vpop.f32.mrf.mxu0
        %2046 = vdwg.mxu0
        %2047 = vrot.lane.b32.xlu0 %v1801, 112
        %v2048 = vpop.permute.xlu0 %2047
        %2049 = vrot.lane.b32.xlu0 %v1801, 80
        %v2050 = vpop.permute.xlu0 %2049
        %v2052 = vsel %vm845, %v2048, 0
        %v2055 = vsel %vm845, %v2050, 0
        %2057 = vmatprep.subr.bf16.mxu0 0
        %2058 = vmatpush1.bf16.xpose.msra.mxu0 0
        %2059 = vmatprep.subr.bf16.mxu0 0
        %2060 = vmatpush1.bf16.xpose.msra.mxu0 0
        %2061 = vmatprep.subr.bf16.mxu0 0
        %2062 = vmatpush1.bf16.xpose.msra.mxu0 0
        %2063 = vmatprep.subr.bf16.mxu0 0
        %2064 = vmatpush1.bf16.xpose.msra.mxu0 0
        %2065 = vmatprep.subr.bf16.mxu0 0
        %2066 = vmatpush1.bf16.xpose.msra.mxu0 0
        %2067 = vmatprep.subr.bf16.mxu0 0
        %2068 = vmatpush1.bf16.xpose.msra.mxu0 0
        %2069 = vmatprep.subr.bf16.mxu0 0
        %2070 = vmatpush1.bf16.xpose.msra.mxu0 0
        %2071 = vmatprep.subr.bf16.mxu0 0
        %2072 = vmatpush1.bf16.xpose.msra.mxu0 %v2055
        %2073 = vmatprep.subr.bf16.mxu0 0
        %2074 = vmatpush2.bf16.xpose.msra.mxu0 0
        %2075 = vmatprep.subr.bf16.mxu0 0
        %2076 = vmatpush2.bf16.xpose.msra.mxu0 0
        %2077 = vmatprep.subr.bf16.mxu0 0
        %2078 = vmatpush2.bf16.xpose.msra.mxu0 0
        %2079 = vmatprep.subr.bf16.mxu0 0
        %2080 = vmatpush2.bf16.xpose.msra.mxu0 0
        %2081 = vmatprep.subr.bf16.mxu0 0
        %2082 = vmatpush2.bf16.xpose.msra.mxu0 0
        %2083 = vmatprep.subr.bf16.mxu0 0
        %2084 = vmatpush2.bf16.xpose.msra.mxu0 0
        %2085 = vmatprep.subr.bf16.mxu0 0
        %2086 = vmatpush2.bf16.xpose.msra.mxu0 0
        %2087 = vmatprep.subr.bf16.mxu0 0
        %2088 = vmatpush2.bf16.xpose.msra.mxu0 0
        %2089 = vmatprep.mubr.bf16.mxu0 0
        %2090 = vmatmul.mubr.bf16.gmra.mxu0 %v2052
        %v2091 = vpop.f32.mrf.mxu0
        %v2092 = vadd.f32 0.0, %v2091
        %v2093 = vpop.f32.mrf.mxu0
        %v2094 = vpop.f32.mrf.mxu0
        %v2095 = vadd.f32 0.0, %v2094
        %v2096 = vpop.f32.mrf.mxu0
        %2097 = vdwg.mxu0
        %v2098 = vmul.f32 %v2092, 0.35355338
        %v2099 = vmul.f32 %v2095, 0.35355338
        %v2100 = vsel %vm895, %v2098, -inf
        %2101 = vmax.xlane.f32.xlu0 %v2100
        %v2102 = vpop.xlane.xlu0 %2101
        %v2103 = vsel %vm895, %v2099, -inf
        %2104 = vmax.xlane.f32.xlu0 %v2103
        %v2105 = vpop.xlane.xlu0 %2104
        %v2106 = vsub.f32 %v2098, %v2102
        %v2107 = vsub.f32 %v2099, %v2105
        %v2108 = vmul.f32 %v2106, 1.442695
        %v2109 = vpow.pop %v2108
        %v2110 = vmul.f32 %v2107, 1.442695
        %v2111 = vpow.pop %v2110
        %v2112 = vsel %vm895, %v2109, 0.0
        %2113 = vadd.xlane.f32.xlu0 %v2112
        %v2114 = vpop.xlane.xlu0 %2113
        %v2115 = vsel %vm895, %v2111, 0.0
        %2116 = vadd.xlane.f32.xlu0 %v2115
        %v2117 = vpop.xlane.xlu0 %2116
        %v2118 = vrcp.pop %v2114
        %v2119 = vrcp.pop %v2117
        %v2120 = vmul.f32 %v2109, %v2118
        %v2121 = vmul.f32 %v2111, %v2119
        %v2122 = vpack.c.bf16 %v2121, %v2120
        %2123 = vrot.lane.b32.xlu0 %v1801, 48
        %v2124 = vpop.permute.xlu0 %2123
        %v2127 = vsel %vm895, %v2122, 0
        %2129 = vmatprep.subr.bf16.mxu0 0
        %2130 = vmatpush1.bf16.msra.mxu0 0
        %2131 = vmatprep.subr.bf16.mxu0 0
        %2132 = vmatpush1.bf16.msra.mxu0 0
        %2133 = vmatprep.subr.bf16.mxu0 0
        %2134 = vmatpush1.bf16.msra.mxu0 0
        %2135 = vmatprep.subr.bf16.mxu0 0
        %2136 = vmatpush1.bf16.msra.mxu0 0
        %2137 = vmatprep.subr.bf16.mxu0 0
        %2138 = vmatpush1.bf16.msra.mxu0 0
        %2139 = vmatprep.subr.bf16.mxu0 0
        %2140 = vmatpush1.bf16.msra.mxu0 0
        %2141 = vmatprep.subr.bf16.mxu0 0
        %2142 = vmatpush1.bf16.msra.mxu0 0
        %2143 = vmatprep.subr.bf16.mxu0 0
        %2144 = vmatpush1.bf16.msra.mxu0 %v2124
        %2145 = vmatprep.subr.bf16.mxu0 0
        %2146 = vmatpush2.bf16.msra.mxu0 0
        %2147 = vmatprep.subr.bf16.mxu0 0
        %2148 = vmatpush2.bf16.msra.mxu0 0
        %2149 = vmatprep.subr.bf16.mxu0 0
        %2150 = vmatpush2.bf16.msra.mxu0 0
        %2151 = vmatprep.subr.bf16.mxu0 0
        %2152 = vmatpush2.bf16.msra.mxu0 0
        %2153 = vmatprep.subr.bf16.mxu0 0
        %2154 = vmatpush2.bf16.msra.mxu0 0
        %2155 = vmatprep.subr.bf16.mxu0 0
        %2156 = vmatpush2.bf16.msra.mxu0 0
        %2157 = vmatprep.subr.bf16.mxu0 0
        %2158 = vmatpush2.bf16.msra.mxu0 0
        %2159 = vmatprep.subr.bf16.mxu0 0
        %2160 = vmatpush2.bf16.msra.mxu0 0
        %2161 = vmatprep.mubr.bf16.mxu0 0
        %2162 = vmatmul.mubr.bf16.gmra.mxu0 %v2127
        %v2163 = vpop.f32.mrf.mxu0
        %v2164 = vadd.f32 0.0, %v2163
        %v2165 = vpop.f32.mrf.mxu0
        %v2166 = vpop.f32.mrf.mxu0
        %v2167 = vadd.f32 0.0, %v2166
        %v2168 = vpop.f32.mrf.mxu0
        %2169 = vdwg.mxu0
        %2170 = vrot.lane.b32.xlu0 %v1801, 104
        %v2171 = vpop.permute.xlu0 %2170
        %2172 = vrot.lane.b32.xlu0 %v1801, 72
        %v2173 = vpop.permute.xlu0 %2172
        %v2175 = vsel %vm845, %v2171, 0
        %v2178 = vsel %vm845, %v2173, 0
        %2180 = vmatprep.subr.bf16.mxu0 0
        %2181 = vmatpush1.bf16.xpose.msra.mxu0 0
        %2182 = vmatprep.subr.bf16.mxu0 0
        %2183 = vmatpush1.bf16.xpose.msra.mxu0 0
        %2184 = vmatprep.subr.bf16.mxu0 0
        %2185 = vmatpush1.bf16.xpose.msra.mxu0 0
        %2186 = vmatprep.subr.bf16.mxu0 0
        %2187 = vmatpush1.bf16.xpose.msra.mxu0 0
        %2188 = vmatprep.subr.bf16.mxu0 0
        %2189 = vmatpush1.bf16.xpose.msra.mxu0 0
        %2190 = vmatprep.subr.bf16.mxu0 0
        %2191 = vmatpush1.bf16.xpose.msra.mxu0 0
        %2192 = vmatprep.subr.bf16.mxu0 0
        %2193 = vmatpush1.bf16.xpose.msra.mxu0 0
        %2194 = vmatprep.subr.bf16.mxu0 0
        %2195 = vmatpush1.bf16.xpose.msra.mxu0 %v2178
        %2196 = vmatprep.subr.bf16.mxu0 0
        %2197 = vmatpush2.bf16.xpose.msra.mxu0 0
        %2198 = vmatprep.subr.bf16.mxu0 0
        %2199 = vmatpush2.bf16.xpose.msra.mxu0 0
        %2200 = vmatprep.subr.bf16.mxu0 0
        %2201 = vmatpush2.bf16.xpose.msra.mxu0 0
        %2202 = vmatprep.subr.bf16.mxu0 0
        %2203 = vmatpush2.bf16.xpose.msra.mxu0 0
        %2204 = vmatprep.subr.bf16.mxu0 0
        %2205 = vmatpush2.bf16.xpose.msra.mxu0 0
        %2206 = vmatprep.subr.bf16.mxu0 0
        %2207 = vmatpush2.bf16.xpose.msra.mxu0 0
        %2208 = vmatprep.subr.bf16.mxu0 0
        %2209 = vmatpush2.bf16.xpose.msra.mxu0 0
        %2210 = vmatprep.subr.bf16.mxu0 0
        %2211 = vmatpush2.bf16.xpose.msra.mxu0 0
        %2212 = vmatprep.mubr.bf16.mxu0 0
        %2213 = vmatmul.mubr.bf16.gmra.mxu0 %v2175
        %v2214 = vpop.f32.mrf.mxu0
        %v2215 = vadd.f32 0.0, %v2214
        %v2216 = vpop.f32.mrf.mxu0
        %v2217 = vpop.f32.mrf.mxu0
        %v2218 = vadd.f32 0.0, %v2217
        %v2219 = vpop.f32.mrf.mxu0
        %2220 = vdwg.mxu0
        %v2221 = vmul.f32 %v2215, 0.35355338
        %v2222 = vmul.f32 %v2218, 0.35355338
        %v2223 = vsel %vm895, %v2221, -inf
        %2224 = vmax.xlane.f32.xlu0 %v2223
        %v2225 = vpop.xlane.xlu0 %2224
        %v2226 = vsel %vm895, %v2222, -inf
        %2227 = vmax.xlane.f32.xlu0 %v2226
        %v2228 = vpop.xlane.xlu0 %2227
        %v2229 = vsub.f32 %v2221, %v2225
        %v2230 = vsub.f32 %v2222, %v2228
        %v2231 = vmul.f32 %v2229, 1.442695
        %v2232 = vpow.pop %v2231
        %v2233 = vmul.f32 %v2230, 1.442695
        %v2234 = vpow.pop %v2233
        %v2235 = vsel %vm895, %v2232, 0.0
        %2236 = vadd.xlane.f32.xlu0 %v2235
        %v2237 = vpop.xlane.xlu0 %2236
        %v2238 = vsel %vm895, %v2234, 0.0
        %2239 = vadd.xlane.f32.xlu0 %v2238
        %v2240 = vpop.xlane.xlu0 %2239
        %v2241 = vrcp.pop %v2237
        %v2242 = vrcp.pop %v2240
        %v2243 = vmul.f32 %v2232, %v2241
        %v2244 = vmul.f32 %v2234, %v2242
        %v2245 = vpack.c.bf16 %v2244, %v2243
        %2246 = vrot.lane.b32.xlu0 %v1801, 40
        %v2247 = vpop.permute.xlu0 %2246
        %v2250 = vsel %vm895, %v2245, 0
        %2252 = vmatprep.subr.bf16.mxu0 0
        %2253 = vmatpush1.bf16.msra.mxu0 0
        %2254 = vmatprep.subr.bf16.mxu0 0
        %2255 = vmatpush1.bf16.msra.mxu0 0
        %2256 = vmatprep.subr.bf16.mxu0 0
        %2257 = vmatpush1.bf16.msra.mxu0 0
        %2258 = vmatprep.subr.bf16.mxu0 0
        %2259 = vmatpush1.bf16.msra.mxu0 0
        %2260 = vmatprep.subr.bf16.mxu0 0
        %2261 = vmatpush1.bf16.msra.mxu0 0
        %2262 = vmatprep.subr.bf16.mxu0 0
        %2263 = vmatpush1.bf16.msra.mxu0 0
        %2264 = vmatprep.subr.bf16.mxu0 0
        %2265 = vmatpush1.bf16.msra.mxu0 0
        %2266 = vmatprep.subr.bf16.mxu0 0
        %2267 = vmatpush1.bf16.msra.mxu0 %v2247
        %2268 = vmatprep.subr.bf16.mxu0 0
        %2269 = vmatpush2.bf16.msra.mxu0 0
        %2270 = vmatprep.subr.bf16.mxu0 0
        %2271 = vmatpush2.bf16.msra.mxu0 0
        %2272 = vmatprep.subr.bf16.mxu0 0
        %2273 = vmatpush2.bf16.msra.mxu0 0
        %2274 = vmatprep.subr.bf16.mxu0 0
        %2275 = vmatpush2.bf16.msra.mxu0 0
        %2276 = vmatprep.subr.bf16.mxu0 0
        %2277 = vmatpush2.bf16.msra.mxu0 0
        %2278 = vmatprep.subr.bf16.mxu0 0
        %2279 = vmatpush2.bf16.msra.mxu0 0
        %2280 = vmatprep.subr.bf16.mxu0 0
        %2281 = vmatpush2.bf16.msra.mxu0 0
        %2282 = vmatprep.subr.bf16.mxu0 0
        %2283 = vmatpush2.bf16.msra.mxu0 0
        %2284 = vmatprep.mubr.bf16.mxu0 0
        %2285 = vmatmul.mubr.bf16.gmra.mxu0 %v2250
        %v2286 = vpop.f32.mrf.mxu0
        %v2287 = vadd.f32 0.0, %v2286
        %v2288 = vpop.f32.mrf.mxu0
        %v2289 = vpop.f32.mrf.mxu0
        %v2290 = vadd.f32 0.0, %v2289
        %v2291 = vpop.f32.mrf.mxu0
        %2292 = vdwg.mxu0
        %2295 = vrot.lane.b32.xlu0 %v2041, 8
        %v2296 = vpop.permute.xlu0 %2295
        %2297 = vrot.lane.b32.xlu0 %v2044, 8
        %v2298 = vpop.permute.xlu0 %2297
        %2303 = vrot.lane.b32.xlu0 %v2164, 16
        %v2304 = vpop.permute.xlu0 %2303
        %2305 = vrot.lane.b32.xlu0 %v2167, 16
        %v2306 = vpop.permute.xlu0 %2305
        %2311 = vrot.lane.b32.xlu0 %v2287, 24
        %v2312 = vpop.permute.xlu0 %2311
        %2313 = vrot.lane.b32.xlu0 %v2290, 24
        %v2314 = vpop.permute.xlu0 %2313
        %v2317 = vsel %vm845, %v1918, %v2296
        %v2318 = vsel %vm845, %v1921, %v2298
        %v2319 = vsel %vm895, %v2317, %v2304
        %v2320 = vsel %vm895, %v2318, %v2306
        %v2321 = vsel %vm1363, %v2319, %v2312
        %v2322 = vsel %vm1363, %v2320, %v2314
        %v2323 = vpack.c.bf16 %v2322, %v2321
        %s2324 = scalar_lea.vmem %s7, 16
        %v2325 = vld [vmem:[%s2324] sm:$0xf]
        %v2326 = vld [vmem:[%s2324 + $0x4] sm:$0xf]
        %v2327 = vld [vmem:[%s2324 + $0x8] sm:$0xf]
        %v2328 = vld [vmem:[%s2324 + $0xc] sm:$0xf]
        %v2333 = vunpack.c.l.b16 %v2325
        %v2334 = vunpack.c.l.b16 %v2326
        %v2335 = vunpack.c.l.b16 %v2327
        %v2336 = vunpack.c.l.b16 %v2328
        %v2337 = vpack.c.b16 %v2334, %v2333
        %v2338 = vpack.c.b16 %v2336, %v2335
        %v2342 = vsel %vm729, %v2323, 0
        %2344 = vmatprep.subr.bf16.mxu0 0
        %2345 = vmatpush1.bf16.msra.mxu0 0
        %2346 = vmatprep.subr.bf16.mxu0 0
        %2347 = vmatpush1.bf16.msra.mxu0 0
        %2348 = vmatprep.subr.bf16.mxu0 0
        %2349 = vmatpush1.bf16.msra.mxu0 0
        %2350 = vmatprep.subr.bf16.mxu0 0
        %2351 = vmatpush1.bf16.msra.mxu0 0
        %2352 = vmatprep.subr.bf16.mxu0 0
        %2353 = vmatpush1.bf16.msra.mxu0 0
        %2354 = vmatprep.subr.bf16.mxu0 0
        %2355 = vmatpush1.bf16.msra.mxu0 0
        %2356 = vmatprep.subr.bf16.mxu0 0
        %2357 = vmatpush1.bf16.msra.mxu0 %v2338
        %2358 = vmatprep.subr.bf16.mxu0 0
        %2359 = vmatpush1.bf16.msra.mxu0 %v2337
        %2360 = vmatprep.subr.bf16.mxu0 0
        %2361 = vmatpush2.bf16.msra.mxu0 0
        %2362 = vmatprep.subr.bf16.mxu0 0
        %2363 = vmatpush2.bf16.msra.mxu0 0
        %2364 = vmatprep.subr.bf16.mxu0 0
        %2365 = vmatpush2.bf16.msra.mxu0 0
        %2366 = vmatprep.subr.bf16.mxu0 0
        %2367 = vmatpush2.bf16.msra.mxu0 0
        %2368 = vmatprep.subr.bf16.mxu0 0
        %2369 = vmatpush2.bf16.msra.mxu0 0
        %2370 = vmatprep.subr.bf16.mxu0 0
        %2371 = vmatpush2.bf16.msra.mxu0 0
        %2372 = vmatprep.subr.bf16.mxu0 0
        %2373 = vmatpush2.bf16.msra.mxu0 0
        %2374 = vmatprep.subr.bf16.mxu0 0
        %2375 = vmatpush2.bf16.msra.mxu0 0
        %2376 = vmatprep.mubr.bf16.mxu0 0
        %2377 = vmatmul.mubr.bf16.gmra.mxu0 %v2342
        %v2378 = vpop.f32.mrf.mxu0
        %v2379 = vadd.f32 0.0, %v2378
        %v2380 = vpop.f32.mrf.mxu0
        %v2381 = vpop.f32.mrf.mxu0
        %v2382 = vadd.f32 0.0, %v2381
        %v2383 = vpop.f32.mrf.mxu0
        %2384 = vdwg.mxu0
        %v2385 = vadd.f32 %v1683, %v2379
        %v2386 = vadd.f32 %v1684, %v2382
        %s2387 = scalar_lea.vmem %s8, 1
        %v2388 = vld [vmem:[%s2387] sm:$0x1]
        %v2390 = vlaneseq
        %v2391 = vshrl.u32 %v2390, 7
        %v2392 = vsub.s32 0, %v2391
        %v2393 = vrot.slane %v2388, %v2392
        %v2395 = vadd.f32 %v2385, %v2393
        %v2396 = vadd.f32 %v2386, %v2393
        %s2397 = scalar_lea.vmem %s9, 1
        %v2398 = vld [vmem:[%s2397] sm:$0x1]
        %s2399 = scalar_lea.vmem %s10, 1
        %v2400 = vld [vmem:[%s2399] sm:$0x1]
        %v2401 = vsel %vm729, %v2395, 0.0
        %2402 = vadd.xlane.f32.xlu0 %v2401
        %v2403 = vpop.xlane.xlu0 %2402
        %v2404 = vsel %vm729, %v2396, 0.0
        %2405 = vadd.xlane.f32.xlu0 %v2404
        %v2406 = vpop.xlane.xlu0 %2405
        %v2407 = vmul.f32 %v2403, %v736
        %v2408 = vmul.f32 %v2406, %v736
        %v2409 = vsub.f32 %v2395, %v2407
        %v2410 = vsub.f32 %v2396, %v2408
        %v2411 = vmul.f32 %v2409, %v2409
        %v2412 = vmul.f32 %v2410, %v2410
        %v2413 = vsel %vm729, %v2411, 0.0
        %2414 = vadd.xlane.f32.xlu0 %v2413
        %v2415 = vpop.xlane.xlu0 %2414
        %v2416 = vsel %vm729, %v2412, 0.0
        %2417 = vadd.xlane.f32.xlu0 %v2416
        %v2418 = vpop.xlane.xlu0 %2417
        %v2419 = vmul.f32 %v2415, %v736
        %v2420 = vmul.f32 %v2418, %v736
        %v2421 = vadd.f32 %v2419, 1e-05
        %v2422 = vadd.f32 %v2420, 1e-05
        %v2423 = vrsqrt.pop %v2421
        %v2424 = vrsqrt.pop %v2422
        %v2425 = vmul.f32 %v2409, %v2423
        %v2426 = vmul.f32 %v2410, %v2424
        %v2428 = vlaneseq
        %v2429 = vshrl.u32 %v2428, 7
        %v2430 = vsub.s32 0, %v2429
        %v2431 = vrot.slane %v2398, %v2430
        %v2433 = vmul.f32 %v2425, %v2431
        %v2434 = vmul.f32 %v2426, %v2431
        %v2436 = vlaneseq
        %v2437 = vshrl.u32 %v2436, 7
        %v2438 = vsub.s32 0, %v2437
        %v2439 = vrot.slane %v2400, %v2438
        %v2441 = vadd.f32 %v2433, %v2439
        %v2442 = vadd.f32 %v2434, %v2439
        %v2443 = vpack.c.bf16 %v2442, %v2441
        %s2444 = scalar_lea.vmem %s11, 16
        %v2445 = vld [vmem:[%s2444] sm:$0xf]
        %v2446 = vld [vmem:[%s2444 + $0x4] sm:$0xf]
        %v2447 = vld [vmem:[%s2444 + $0x8] sm:$0xf]
        %v2448 = vld [vmem:[%s2444 + $0xc] sm:$0xf]
        %s2449 = scalar_lea.vmem %s12, 1
        %v2450 = vld [vmem:[%s2449] sm:$0x1]
        %v2452 = vlaneseq
        %v2453 = vshrl.u32 %v2452, 7
        %v2454 = vsub.s32 0, %v2453
        %v2455 = vrot.slane %v2450, %v2454
        %v2461 = vunpack.c.l.b16 %v2445
        %v2462 = vunpack.c.l.b16 %v2446
        %v2463 = vunpack.c.l.b16 %v2447
        %v2464 = vunpack.c.l.b16 %v2448
        %v2465 = vpack.c.b16 %v2462, %v2461
        %v2466 = vpack.c.b16 %v2464, %v2463
        %v2470 = vsel %vm729, %v2443, 0
        %2472 = vmatprep.subr.bf16.mxu0 0
        %2473 = vmatpush1.bf16.msra.mxu0 0
        %2474 = vmatprep.subr.bf16.mxu0 0
        %2475 = vmatpush1.bf16.msra.mxu0 0
        %2476 = vmatprep.subr.bf16.mxu0 0
        %2477 = vmatpush1.bf16.msra.mxu0 0
        %2478 = vmatprep.subr.bf16.mxu0 0
        %2479 = vmatpush1.bf16.msra.mxu0 0
        %2480 = vmatprep.subr.bf16.mxu0 0
        %2481 = vmatpush1.bf16.msra.mxu0 0
        %2482 = vmatprep.subr.bf16.mxu0 0
        %2483 = vmatpush1.bf16.msra.mxu0 0
        %2484 = vmatprep.subr.bf16.mxu0 0
        %2485 = vmatpush1.bf16.msra.mxu0 %v2466
        %2486 = vmatprep.subr.bf16.mxu0 0
        %2487 = vmatpush1.bf16.msra.mxu0 %v2465
        %2488 = vmatprep.subr.bf16.mxu0 0
        %2489 = vmatpush2.bf16.msra.mxu0 0
        %2490 = vmatprep.subr.bf16.mxu0 0
        %2491 = vmatpush2.bf16.msra.mxu0 0
        %2492 = vmatprep.subr.bf16.mxu0 0
        %2493 = vmatpush2.bf16.msra.mxu0 0
        %2494 = vmatprep.subr.bf16.mxu0 0
        %2495 = vmatpush2.bf16.msra.mxu0 0
        %2496 = vmatprep.subr.bf16.mxu0 0
        %2497 = vmatpush2.bf16.msra.mxu0 0
        %2498 = vmatprep.subr.bf16.mxu0 0
        %2499 = vmatpush2.bf16.msra.mxu0 0
        %2500 = vmatprep.subr.bf16.mxu0 0
        %2501 = vmatpush2.bf16.msra.mxu0 0
        %2502 = vmatprep.subr.bf16.mxu0 0
        %2503 = vmatpush2.bf16.msra.mxu0 0
        %2504 = vmatprep.mubr.bf16.mxu0 0
        %2505 = vmatmul.mubr.bf16.gmra.mxu0 %v2470
        %v2506 = vpop.f32.mrf.mxu0
        %v2507 = vadd.f32 %v2455, %v2506
        %v2508 = vpop.f32.mrf.mxu0
        %v2509 = vpop.f32.mrf.mxu0
        %v2510 = vadd.f32 %v2455, %v2509
        %v2511 = vpop.f32.mrf.mxu0
        %2512 = vdwg.mxu0
        %v2513 = vmul.f32 %v2507, %v2507
        %v2514 = vmul.f32 %v2510, %v2510
        %v2515 = vmul.f32 %v2507, %v2513
        %v2516 = vmul.f32 %v2510, %v2514
        %v2517 = vmul.f32 %v2515, 0.044715
        %v2518 = vmul.f32 %v2516, 0.044715
        %v2519 = vadd.f32 %v2507, %v2517
        %v2520 = vadd.f32 %v2510, %v2518
        %v2521 = vmul.f32 %v2519, 0.7978846
        %v2522 = vmul.f32 %v2520, 0.7978846
        %v2523 = vtanh.pop %v2521
        %v2524 = vtanh.pop %v2522
        %v2525 = vadd.f32 %v2523, 1.0
        %v2526 = vadd.f32 %v2524, 1.0
        %v2527 = vmul.f32 %v2525, 0.5
        %v2528 = vmul.f32 %v2526, 0.5
        %v2529 = vmul.f32 %v2507, %v2527
        %v2530 = vmul.f32 %v2510, %v2528
        %v2531 = vpack.c.bf16 %v2530, %v2529
        %s2532 = scalar_lea.vmem %s13, 64
        %v2533 = vld [vmem:[%s2532] sm:$0xf]
        %v2534 = vld [vmem:[%s2532 + $0x4] sm:$0xf]
        %v2535 = vld [vmem:[%s2532 + $0x8] sm:$0xf]
        %v2536 = vld [vmem:[%s2532 + $0xc] sm:$0xf]
        %v2537 = vld [vmem:[%s2532 + $0x10] sm:$0xf]
        %v2538 = vld [vmem:[%s2532 + $0x14] sm:$0xf]
        %v2539 = vld [vmem:[%s2532 + $0x18] sm:$0xf]
        %v2540 = vld [vmem:[%s2532 + $0x1c] sm:$0xf]
        %v2541 = vld [vmem:[%s2532 + $0x20] sm:$0xf]
        %v2542 = vld [vmem:[%s2532 + $0x24] sm:$0xf]
        %v2543 = vld [vmem:[%s2532 + $0x28] sm:$0xf]
        %v2544 = vld [vmem:[%s2532 + $0x2c] sm:$0xf]
        %v2545 = vld [vmem:[%s2532 + $0x30] sm:$0xf]
        %v2546 = vld [vmem:[%s2532 + $0x34] sm:$0xf]
        %v2547 = vld [vmem:[%s2532 + $0x38] sm:$0xf]
        %v2548 = vld [vmem:[%s2532 + $0x3c] sm:$0xf]
        %v2565 = vunpack.c.l.b16 %v2533
        %v2566 = vunpack.c.l.b16 %v2534
        %v2567 = vunpack.c.l.b16 %v2535
        %v2568 = vunpack.c.l.b16 %v2536
        %v2569 = vunpack.c.l.b16 %v2537
        %v2570 = vunpack.c.l.b16 %v2538
        %v2571 = vunpack.c.l.b16 %v2539
        %v2572 = vunpack.c.l.b16 %v2540
        %v2573 = vunpack.c.l.b16 %v2541
        %v2574 = vunpack.c.l.b16 %v2542
        %v2575 = vunpack.c.l.b16 %v2543
        %v2576 = vunpack.c.l.b16 %v2544
        %v2577 = vunpack.c.l.b16 %v2545
        %v2578 = vunpack.c.l.b16 %v2546
        %v2579 = vunpack.c.l.b16 %v2547
        %v2580 = vunpack.c.l.b16 %v2548
        %v2581 = vpack.c.b16 %v2566, %v2565
        %v2582 = vpack.c.b16 %v2568, %v2567
        %v2583 = vpack.c.b16 %v2570, %v2569
        %v2584 = vpack.c.b16 %v2572, %v2571
        %v2585 = vpack.c.b16 %v2574, %v2573
        %v2586 = vpack.c.b16 %v2576, %v2575
        %v2587 = vpack.c.b16 %v2578, %v2577
        %v2588 = vpack.c.b16 %v2580, %v2579
        %2597 = vmatprep.subr.bf16.mxu0 0
        %2598 = vmatpush1.bf16.msra.mxu0 %v2588
        %2599 = vmatprep.subr.bf16.mxu0 0
        %2600 = vmatpush1.bf16.msra.mxu0 %v2587
        %2601 = vmatprep.subr.bf16.mxu0 0
        %2602 = vmatpush1.bf16.msra.mxu0 %v2586
        %2603 = vmatprep.subr.bf16.mxu0 0
        %2604 = vmatpush1.bf16.msra.mxu0 %v2585
        %2605 = vmatprep.subr.bf16.mxu0 0
        %2606 = vmatpush1.bf16.msra.mxu0 %v2584
        %2607 = vmatprep.subr.bf16.mxu0 0
        %2608 = vmatpush1.bf16.msra.mxu0 %v2583
        %2609 = vmatprep.subr.bf16.mxu0 0
        %2610 = vmatpush1.bf16.msra.mxu0 %v2582
        %2611 = vmatprep.subr.bf16.mxu0 0
        %2612 = vmatpush1.bf16.msra.mxu0 %v2581
        %2613 = vmatprep.subr.bf16.mxu0 0
        %2614 = vmatpush2.bf16.msra.mxu0 0
        %2615 = vmatprep.subr.bf16.mxu0 0
        %2616 = vmatpush2.bf16.msra.mxu0 0
        %2617 = vmatprep.subr.bf16.mxu0 0
        %2618 = vmatpush2.bf16.msra.mxu0 0
        %2619 = vmatprep.subr.bf16.mxu0 0
        %2620 = vmatpush2.bf16.msra.mxu0 0
        %2621 = vmatprep.subr.bf16.mxu0 0
        %2622 = vmatpush2.bf16.msra.mxu0 0
        %2623 = vmatprep.subr.bf16.mxu0 0
        %2624 = vmatpush2.bf16.msra.mxu0 0
        %2625 = vmatprep.subr.bf16.mxu0 0
        %2626 = vmatpush2.bf16.msra.mxu0 0
        %2627 = vmatprep.subr.bf16.mxu0 0
        %2628 = vmatpush2.bf16.msra.mxu0 0
        %2629 = vmatprep.mubr.bf16.mxu0 0
        %2630 = vmatmul.mubr.bf16.gmra.mxu0 %v2531
        %v2631 = vpop.f32.mrf.mxu0
        %v2632 = vadd.f32 0.0, %v2631
        %v2633 = vpop.f32.mrf.mxu0
        %v2634 = vpop.f32.mrf.mxu0
        %v2635 = vadd.f32 0.0, %v2634
        %v2636 = vpop.f32.mrf.mxu0
        %2637 = vdwg.mxu0
        %v2638 = vadd.f32 %v2395, %v2632
        %v2639 = vadd.f32 %v2396, %v2635
        %s2640 = scalar_lea.vmem %s14, 1
        %v2641 = vld [vmem:[%s2640] sm:$0x1]
        %v2643 = vlaneseq
        %v2644 = vshrl.u32 %v2643, 7
        %v2645 = vsub.s32 0, %v2644
        %v2646 = vrot.slane %v2641, %v2645
        %v2648 = vadd.f32 %v2638, %v2646
        %v2649 = vadd.f32 %v2639, %v2646
        %v2650 = vld [vmem:[%s15] sm:$0x1]
        %v2651 = vld [vmem:[%s16] sm:$0x1]
        %v2652 = vsel %vm729, %v2648, 0.0
        %2653 = vadd.xlane.f32.xlu0 %v2652
        %v2654 = vpop.xlane.xlu0 %2653
        %v2655 = vsel %vm729, %v2649, 0.0
        %2656 = vadd.xlane.f32.xlu0 %v2655
        %v2657 = vpop.xlane.xlu0 %2656
        %v2658 = vmul.f32 %v2654, %v736
        %v2659 = vmul.f32 %v2657, %v736
        %v2660 = vsub.f32 %v2648, %v2658
        %v2661 = vsub.f32 %v2649, %v2659
        %v2662 = vmul.f32 %v2660, %v2660
        %v2663 = vmul.f32 %v2661, %v2661
        %v2664 = vsel %vm729, %v2662, 0.0
        %2665 = vadd.xlane.f32.xlu0 %v2664
        %v2666 = vpop.xlane.xlu0 %2665
        %v2667 = vsel %vm729, %v2663, 0.0
        %2668 = vadd.xlane.f32.xlu0 %v2667
        %v2669 = vpop.xlane.xlu0 %2668
        %v2670 = vmul.f32 %v2666, %v736
        %v2671 = vmul.f32 %v2669, %v736
        %v2672 = vadd.f32 %v2670, 1e-05
        %v2673 = vadd.f32 %v2671, 1e-05
        %v2674 = vrsqrt.pop %v2672
        %v2675 = vrsqrt.pop %v2673
        %v2676 = vmul.f32 %v2660, %v2674
        %v2677 = vmul.f32 %v2661, %v2675
        %v2679 = vlaneseq
        %v2680 = vshrl.u32 %v2679, 7
        %v2681 = vsub.s32 0, %v2680
        %v2682 = vrot.slane %v2650, %v2681
        %v2684 = vmul.f32 %v2676, %v2682
        %v2685 = vmul.f32 %v2677, %v2682
        %v2687 = vlaneseq
        %v2688 = vshrl.u32 %v2687, 7
        %v2689 = vsub.s32 0, %v2688
        %v2690 = vrot.slane %v2651, %v2689
        %v2692 = vadd.f32 %v2684, %v2690
        %v2693 = vadd.f32 %v2685, %v2690
        %v2694 = vpack.c.bf16 %v2693, %v2692
        %v2695 = vld [vmem:[%s17] sm:$0xf]
        %v2696 = vld [vmem:[%s17 + $0x4] sm:$0xf]
        %v2697 = vld [vmem:[%s17 + $0x8] sm:$0xf]
        %v2698 = vld [vmem:[%s17 + $0xc] sm:$0xf]
        %v2699 = vld [vmem:[%s18] sm:$0x1]
        %v2701 = vlaneseq
        %v2702 = vshrl.u32 %v2701, 7
        %v2703 = vsub.s32 0, %v2702
        %v2704 = vrot.slane %v2699, %v2703
        %v2710 = vunpack.c.l.b16 %v2695
        %v2711 = vunpack.c.l.b16 %v2696
        %v2712 = vunpack.c.l.b16 %v2697
        %v2713 = vunpack.c.l.b16 %v2698
        %v2714 = vpack.c.b16 %v2711, %v2710
        %v2715 = vpack.c.b16 %v2713, %v2712
        %v2719 = vsel %vm729, %v2694, 0
        %2721 = vmatprep.subr.bf16.mxu0 0
        %2722 = vmatpush1.bf16.msra.mxu0 0
        %2723 = vmatprep.subr.bf16.mxu0 0
        %2724 = vmatpush1.bf16.msra.mxu0 0
        %2725 = vmatprep.subr.bf16.mxu0 0
        %2726 = vmatpush1.bf16.msra.mxu0 0
        %2727 = vmatprep.subr.bf16.mxu0 0
        %2728 = vmatpush1.bf16.msra.mxu0 0
        %2729 = vmatprep.subr.bf16.mxu0 0
        %2730 = vmatpush1.bf16.msra.mxu0 0
        %2731 = vmatprep.subr.bf16.mxu0 0
        %2732 = vmatpush1.bf16.msra.mxu0 0
        %2733 = vmatprep.subr.bf16.mxu0 0
        %2734 = vmatpush1.bf16.msra.mxu0 %v2715
        %2735 = vmatprep.subr.bf16.mxu0 0
        %2736 = vmatpush1.bf16.msra.mxu0 %v2714
        %2737 = vmatprep.subr.bf16.mxu0 0
        %2738 = vmatpush2.bf16.msra.mxu0 0
        %2739 = vmatprep.subr.bf16.mxu0 0
        %2740 = vmatpush2.bf16.msra.mxu0 0
        %2741 = vmatprep.subr.bf16.mxu0 0
        %2742 = vmatpush2.bf16.msra.mxu0 0
        %2743 = vmatprep.subr.bf16.mxu0 0
        %2744 = vmatpush2.bf16.msra.mxu0 0
        %2745 = vmatprep.subr.bf16.mxu0 0
        %2746 = vmatpush2.bf16.msra.mxu0 0
        %2747 = vmatprep.subr.bf16.mxu0 0
        %2748 = vmatpush2.bf16.msra.mxu0 0
        %2749 = vmatprep.subr.bf16.mxu0 0
        %2750 = vmatpush2.bf16.msra.mxu0 0
        %2751 = vmatprep.subr.bf16.mxu0 0
        %2752 = vmatpush2.bf16.msra.mxu0 0
        %2753 = vmatprep.mubr.bf16.mxu0 0
        %2754 = vmatmul.mubr.bf16.gmra.mxu0 %v2719
        %v2755 = vpop.f32.mrf.mxu0
        %v2756 = vadd.f32 %v2704, %v2755
        %v2757 = vpop.f32.mrf.mxu0
        %v2758 = vpop.f32.mrf.mxu0
        %v2759 = vadd.f32 %v2704, %v2758
        %v2760 = vpop.f32.mrf.mxu0
        %2761 = vdwg.mxu0
        %2762 = vst [vmem:[%s596] sm:$0xff] %v2756
        %2763 = vst [vmem:[%s596 + $0x8] sm:$0xff] %v2759
        %s2764 = sand.u32 %s445, 1
        %s2765 = scalar_lea.sflag [#allocation3], %s2764
        %s2766 = sand.u32 %s445, 1
        %s2767 = smul.addr %s2766, 16
        %s2768 = scalar_lea.vmem [#allocation2], %s2767
        // Predicated region
        $region97: #{_lambda_.3} parent=95 // pred_check
          %p2769 = pneg %p455
        $region98: #{_lambda_.3} parent=95 // pred_check_branch
          %2771 = sbr.rel (%p2769) target = $region100
        $region99: #{_lambda_.3} parent=95 // pred_region
          %s2772 = smul.u32 2, %s33
          %s2774 = ssub.s32 256, 256
          %2775 = vsyncadd %s2765, %s2774
          %s2776 = smul.addr %s2772, 128
          %s2777 = scalar_lea.hbm %s19, %s2776
          %s2778 = sshll.u32 %s2768, 4
          %s2779 = int_to_ptr.vmem [resolvable:$true] %s2778
          %2784 = dma.vmem_to_hbm [thread:$0]  %s2779, 256, %s2777, %s2765, 128, 128, 8
        $region100: #{_lambda_.3} parent=95 // pred_fallthru
          _
      $region96: #{_lambda_.3} parent=5 // pred_fallthru
        _
      %p2785 = scmp.le.s32.totalorder 2, %s28
      // Predicated region
      $region101: #{_lambda_.3} parent=5 // pred_check
        %p2786 = pneg %p2785
      $region102: #{_lambda_.3} parent=5 // pred_check_branch
        %2788 = sbr.rel (%p2786) target = $region104
      $region103: #{_lambda_.3} parent=5 // pred_region
        %s2789 = ssub.s32 %s28, 2
        // Predicated region
        $region105: #{_lambda_.3} parent=103 // pred_check
          %p2790 = pneg %p461
        $region106: #{_lambda_.3} parent=103 // pred_check_branch
          %2792 = sbr.rel (%p2790) target = $region108
        $region107: #{_lambda_.3} parent=103 // pred_region
          %s2793 = sand.u32 %s446, 1
          %s2794 = scalar_lea.sflag [#allocation3], %s2793
          %s2795 = sand.u32 %s446, 1
          %s2796 = smul.addr %s2795, 16
          %s2797 = scalar_lea.vmem [#allocation2], %s2796
          %2798 = dma.done %s2794, 256
        $region108: #{_lambda_.3} parent=103 // pred_fallthru
          _
      $region104: #{_lambda_.3} parent=5 // pred_fallthru
        _
    $region6: #{_lambda_.3} parent=1 // loop_footer
      %s32 = sadd.s32 1, %s28
    $region7: #{_lambda_.3} parent=1 // loop_footer_branch
      %27 = sbr.rel target = $region3
    $region8: #{_lambda_.3} parent=1 // loop_exit
      _
    %2799 = vsyncpa [#allocation3], 1
    %s2800 = scalar_lea.sflag [#allocation3], 1
    %2801 = vsyncpa %s2800, 1

</llo_original>
